<compile_context>
chip_gen: v7x
topology: tpu7x:2x2x1
jax: 0.10.0
libtpu: 0.0.40
codegen_flags: <defaults>
</compile_context>

<pallas_src>
import functools
import math

import jax
import jax.numpy as jnp
from jax.experimental import pallas as pl
from jax.experimental.pallas import tpu as pltpu


NODE_F = 62
EDGE_F = 30
NODE_F_PAD = 64   # pad node features 62 -> 64 once in the wrapper (MXU-friendly K)


# ----------------------------------------------------------------------------
# small in-kernel helpers
# ----------------------------------------------------------------------------

def _silu(x):
    return x * (1.0 / (1.0 + jnp.exp(-x)))


def _layernorm(x, g, b):
    mu = jnp.mean(x, axis=-1, keepdims=True)
    xc = x - mu
    var = jnp.mean(xc * xc, axis=-1, keepdims=True)
    return xc * jax.lax.rsqrt(var + 1e-5) * g + b


# ----------------------------------------------------------------------------
# the single fused kernel: embedding -> L interaction layers -> readout head
# ----------------------------------------------------------------------------

def _kamome_kernel(node_ref, nm_ref, bias_ref,
                   embw_ref,
                   ln1g_ref, ln1b_ref, wqkv_ref, wo_ref, bo_ref,
                   ln2g_ref, ln2b_ref, w1_ref, b1_ref, w2_ref, b2_ref,
                   row_ref, rob_ref, outw_ref, outb_ref,
                   *out_refs,
                   n_layer, n_readout, num_head, d_head, n_atoms, bt,
                   scale, return_attn, mm_dtype):
    pred_ref = out_refs[0]
    attn_ref = out_refs[1] if return_attn else None

    H, dk = num_head, d_head
    D = H * dk
    N = n_atoms
    M = bt * N          # rows per grid step (flattened molecules)
    G = bt * H          # batched-attention batch size

    def mm(a, b):
        return jnp.dot(a.astype(mm_dtype), b.astype(mm_dtype),
                       preferred_element_type=jnp.float32)

    def bmm(eq, a, b):
        return jnp.einsum(eq, a.astype(mm_dtype), b.astype(mm_dtype),
                          preferred_element_type=jnp.float32)

    x = node_ref[...]                       # (M, 64)  padded node features
    nm = nm_ref[...]                        # (M, 1)   node mask
    bias_all = bias_ref[...]                # (bt, L*H, N, N) additive attn bias

    # embedding (bias=False)
    h = mm(x, embw_ref[...])                # (M, D)

    for l in range(n_layer):
        # pre-LN + fused QKV projection (single MXU matmul)
        xn = _layernorm(h, ln1g_ref[l], ln1b_ref[l])
        qkv = mm(xn, wqkv_ref[l])           # (M, 3D)

        # gather static (molecule, head) tiles into a head-batched layout once,
        # then two batched dot_generals over the G = bt*H batch axis.
        def heads(col0):
            return jnp.stack(
                [qkv[b * N:(b + 1) * N, col0 + hh * dk: col0 + (hh + 1) * dk]
                 for b in range(bt) for hh in range(H)], axis=0)     # (G, N, dk)

        qh = heads(0)
        kh = heads(D)
        vh = heads(2 * D)

        s = bmm('gqd,gkd->gqk', qh, kh) * scale                      # (G, N, N)
        s = s + bias_all[:, l * H:(l + 1) * H, :, :].reshape(G, N, N)
        s = s - jnp.max(s, axis=-1, keepdims=True)                   # stable softmax
        p = jnp.exp(s)
        a = p / jnp.sum(p, axis=-1, keepdims=True)                   # exact reciprocal
        if return_attn:
            attn_ref[:, l * H:(l + 1) * H, :, :] = a.reshape(bt, H, N, N)

        ctx = bmm('gqk,gkd->gqd', a, vh)                             # (G, N, dk)
        # re-pack heads into adjacent lane slices -> ONE output projection matmul
        ctx2d = jnp.concatenate(
            [jnp.concatenate([ctx[b * H + hh] for hh in range(H)], axis=-1)
             for b in range(bt)], axis=0)                            # (M, D)

        proj = mm(ctx2d, wo_ref[l]) + bo_ref[l]
        h = h + proj * nm                                            # masked residual

        # pre-LN feed-forward (SiLU) + masked residual
        xn2 = _layernorm(h, ln2g_ref[l], ln2b_ref[l])
        ff = _silu(mm(xn2, w1_ref[l]) + b1_ref[l])
        ff = mm(ff, w2_ref[l]) + b2_ref[l]
        h = h + ff * nm

    # readout: per-molecule node sum -> SiLU MLP -> output linear
    y = jnp.concatenate(
        [jnp.sum(h[b * N:(b + 1) * N, :], axis=0, keepdims=True) for b in range(bt)],
        axis=0)                                                      # (bt, D)
    for r in range(n_readout):
        y = _silu(mm(y, row_ref[r]) + rob_ref[r])
    pred = mm(y, outw_ref[...]) + outb_ref[...]                      # (bt, T)
    pred_ref[...] = pred[:, None, :]                                 # (bt, 1, T)


def _const_spec(arr):
    zeros = (0,) * arr.ndim
    return pl.BlockSpec(arr.shape, lambda g, _z=zeros: _z)


# ----------------------------------------------------------------------------
# Parameters (deterministic, synthetic)
# ----------------------------------------------------------------------------

def init_params(key, n_atom_basis=32, n_interaction=2, num_head=4,
                n_readout=2, num_task=1):
    D, H = n_atom_basis, num_head
    keys = iter(jax.random.split(key, 16 + 8 * n_interaction + 2 * n_readout))

    def dense(k, fin, fout):
        return jax.random.normal(k, (fin, fout), jnp.float32) / math.sqrt(fin)

    params = {"embedding_w": dense(next(keys), NODE_F, D)}
    layers = []
    for _ in range(n_interaction):
        layers.append({
            "ln1_g": jnp.ones((D,), jnp.float32), "ln1_b": jnp.zeros((D,), jnp.float32),
            "wq": dense(next(keys), D, D),
            "wk": dense(next(keys), D, D),
            "wv": dense(next(keys), D, D),
            "we": dense(next(keys), EDGE_F, H),
            "wo": dense(next(keys), D, D), "bo": jnp.zeros((D,), jnp.float32),
            "ln2_g": jnp.ones((D,), jnp.float32), "ln2_b": jnp.zeros((D,), jnp.float32),
            "w1": dense(next(keys), D, 2 * D), "b1": jnp.zeros((2 * D,), jnp.float32),
            "w2": dense(next(keys), 2 * D, D), "b2": jnp.zeros((D,), jnp.float32),
        })
    params["interaction"] = layers
    params["readout"] = [{"w": dense(next(keys), D, D),
                          "b": jnp.zeros((D,), jnp.float32)} for _ in range(n_readout)]
    params["output_w"] = dense(next(keys), D, num_task)
    params["output_b"] = jnp.zeros((num_task,), jnp.float32)
    return params


# ----------------------------------------------------------------------------
# Kamome forward
# ----------------------------------------------------------------------------

def kamome_forward(params, node, edge, *, num_head, temperature_coeff=2.0,
                   add_adjacency_matrix_into_attn=True,
                   return_attn_matrix=False, average_attn_matrix=True,
                   mm_dtype=jnp.float32):   # set jnp.bfloat16 on v6e/v7x for faster MXU
    B, N, _ = node.shape
    D = params["embedding_w"].shape[1]
    H = num_head
    dk = D // H
    L = len(params["interaction"])
    R = len(params["readout"])
    T = params["output_w"].shape[1]

    node = node.astype(jnp.float32)
    edge = edge.astype(jnp.float32)

    # masks (same semantics as the PyTorch forward)
    node_mask = (jnp.sum(node, axis=-1) != 0).astype(jnp.float32)[..., None]   # (B,N,1)
    adj = (jnp.sum(edge, axis=-1) != 0).astype(jnp.float32)                    # (B,N,N)
    am = (node_mask + jnp.swapaxes(node_mask, -1, -2)) == 1.0                  # (B,N,N)
    base_bias = jnp.where(am, -1e30, 0.0)                                      # finite sentinel
    if add_adjacency_matrix_into_attn:
        base_bias = base_bias + adj

    # Per-layer per-head additive attention bias, precomputed with ONE einsum in XLA
    # so the (B,N,N,E) edge tensor and the adjacency never enter the kernel.
    #   eb[b,l,h,n,m] = (sum_e edge[b,n,m,e] * we_l[e,h]) * adj[b,n,m]
    we_stack = jnp.stack([lyr["we"] for lyr in params["interaction"]], axis=0)  # (L,E,H)
    eb = jnp.einsum('bnme,leh->blhnm', edge, we_stack)                          # (B,L,H,N,N)
    eb = eb * adj[:, None, None, :, :]
    bias_all = (eb + base_bias[:, None, None, :, :]).reshape(B, L * H, N, N)

    # flattened node features (padded 62 -> 64) and node mask
    node_flat = jnp.pad(node, ((0, 0), (0, 0), (0, NODE_F_PAD - NODE_F))
                        ).reshape(B * N, NODE_F_PAD)
    nm_flat = node_mask.reshape(B * N, 1)
    emb_w = jnp.pad(params["embedding_w"], ((0, NODE_F_PAD - NODE_F), (0, 0)))

    # stacked per-layer weights (fused QKV), all passed to the single kernel
    lyrs = params["interaction"]
    ln1g = jnp.stack([l["ln1_g"].reshape(1, D) for l in lyrs])
    ln1b = jnp.stack([l["ln1_b"].reshape(1, D) for l in lyrs])
    wqkv = jnp.stack([jnp.concatenate([l["wq"], l["wk"], l["wv"]], axis=1) for l in lyrs])
    wo = jnp.stack([l["wo"] for l in lyrs])
    bo = jnp.stack([l["bo"].reshape(1, D) for l in lyrs])
    ln2g = jnp.stack([l["ln2_g"].reshape(1, D) for l in lyrs])
    ln2b = jnp.stack([l["ln2_b"].reshape(1, D) for l in lyrs])
    w1 = jnp.stack([l["w1"] for l in lyrs])
    b1 = jnp.stack([l["b1"].reshape(1, -1) for l in lyrs])
    w2 = jnp.stack([l["w2"] for l in lyrs])
    b2 = jnp.stack([l["b2"].reshape(1, D) for l in lyrs])
    ro_w = jnp.stack([r["w"] for r in params["readout"]])
    ro_b = jnp.stack([r["b"].reshape(1, D) for r in params["readout"]])
    out_w = params["output_w"]
    out_b = params["output_b"].reshape(1, T)

    # batch blocking: at most 2 grid steps ("parallel" -> v7x's 2 TCs each take a
    # shard; on v5e/v6e it is a short serial loop of the fully fused network).
    if B >= 2 and B % 2 == 0:
        grid_b = 2
    else:
        grid_b = max(B, 1)
    bt = B // grid_b

    weights = [emb_w, ln1g, ln1b, wqkv, wo, bo, ln2g, ln2b, w1, b1, w2, b2,
               ro_w, ro_b, out_w, out_b]

    in_specs = [
        pl.BlockSpec((bt * N, NODE_F_PAD), lambda g: (g, 0)),          # node
        pl.BlockSpec((bt * N, 1), lambda g: (g, 0)),                   # node mask
        pl.BlockSpec((bt, L * H, N, N), lambda g: (g, 0, 0, 0)),       # attn bias
    ] + [_const_spec(w) for w in weights]

    out_specs = [pl.BlockSpec((bt, 1, T), lambda g: (g, 0, 0))]
    out_shapes = [jax.ShapeDtypeStruct((B, 1, T), jnp.float32)]
    if return_attn_matrix:
        out_specs.append(pl.BlockSpec((bt, L * H, N, N), lambda g: (g, 0, 0, 0)))
        out_shapes.append(jax.ShapeDtypeStruct((B, L * H, N, N), jnp.float32))

    scale = 1.0 / (temperature_coeff * math.sqrt(dk))
    kernel = functools.partial(
        _kamome_kernel, n_layer=L, n_readout=R, num_head=H, d_head=dk,
        n_atoms=N, bt=bt, scale=scale, return_attn=return_attn_matrix,
        mm_dtype=mm_dtype)

    outs = pl.pallas_call(
        kernel,
        grid=(grid_b,),
        in_specs=in_specs,
        out_specs=tuple(out_specs) if return_attn_matrix else out_specs[0],
        out_shape=tuple(out_shapes) if return_attn_matrix else out_shapes[0],
        compiler_params=pltpu.CompilerParams(
            dimension_semantics=("parallel",)),
    )(node_flat, nm_flat, bias_all, *weights)

    if return_attn_matrix:
        pred = outs[0].reshape(B, T)
        attn = outs[1].reshape(B, L, H, N, N)
        # match the reference: concat per-layer attention along dim 0, optional mean
        attn = jnp.transpose(attn, (1, 2, 0, 3, 4)).reshape(L * H, B, N, N)
        if average_attn_matrix:
            attn = jnp.mean(attn, axis=0)
        return {"prediction": pred, "attn_matrix": attn}
    return {"prediction": outs.reshape(B, T)}


# ----------------------------------------------------------------------------
# main
# ----------------------------------------------------------------------------

if __name__ == "__main__":
    key = jax.random.PRNGKey(0)
    k_param, k_node, k_edge = jax.random.split(key, 3)

    B, N = 2, 16
    n_atom_basis, num_head = 32, 4

    params = init_params(k_param, n_atom_basis=n_atom_basis, n_interaction=2,
                         num_head=num_head, n_readout=2, num_task=1)

    node = jax.random.normal(k_node, (B, N, 62), jnp.float32)
    edge = jax.random.normal(k_edge, (B, N, N, 30), jnp.float32)
    # pad the last 4 atoms of molecule 1 (exercises node/edge/attention masking)
    node = node.at[1, 12:].set(0.0)
    edge = edge.at[1, 12:, :, :].set(0.0)
    edge = edge.at[1, :, 12:, :].set(0.0)

    fwd = jax.jit(functools.partial(kamome_forward, num_head=num_head,
                                    temperature_coeff=2.0,
                                    add_adjacency_matrix_into_attn=True))
    out = fwd(params, node, edge)
    jax.block_until_ready(out["prediction"])
    assert out["prediction"].shape == (B, 1)

    # also exercise the attention-matrix path once
    fwd_attn = jax.jit(functools.partial(kamome_forward, num_head=num_head,
                                         temperature_coeff=2.0,
                                         add_adjacency_matrix_into_attn=True,
                                         return_attn_matrix=True,
                                         average_attn_matrix=True))
    out2 = fwd_attn(params, node, edge)
    jax.block_until_ready(out2["prediction"])
    assert out2["prediction"].shape == (B, 1)
    assert out2["attn_matrix"].shape == (B, N, N)

    print("KERNEL_OK")
</pallas_src>

<mosaic_0001>
module attributes {stable_mosaic.version = 11 : i64} {
  func.func @_kamome_kernel(%arg0: i32, %arg1: memref<16x64xf32, #tpu.memory_space<vmem>>, %arg2: memref<16x1xf32, #tpu.memory_space<vmem>>, %arg3: memref<1x8x16x16xf32, #tpu.memory_space<vmem>>, %arg4: memref<64x32xf32, #tpu.memory_space<vmem>>, %arg5: memref<2x1x32xf32, #tpu.memory_space<vmem>>, %arg6: memref<2x1x32xf32, #tpu.memory_space<vmem>>, %arg7: memref<2x32x96xf32, #tpu.memory_space<vmem>>, %arg8: memref<2x32x32xf32, #tpu.memory_space<vmem>>, %arg9: memref<2x1x32xf32, #tpu.memory_space<vmem>>, %arg10: memref<2x1x32xf32, #tpu.memory_space<vmem>>, %arg11: memref<2x1x32xf32, #tpu.memory_space<vmem>>, %arg12: memref<2x32x64xf32, #tpu.memory_space<vmem>>, %arg13: memref<2x1x64xf32, #tpu.memory_space<vmem>>, %arg14: memref<2x64x32xf32, #tpu.memory_space<vmem>>, %arg15: memref<2x1x32xf32, #tpu.memory_space<vmem>>, %arg16: memref<2x32x32xf32, #tpu.memory_space<vmem>>, %arg17: memref<2x1x32xf32, #tpu.memory_space<vmem>>, %arg18: memref<32x1xf32, #tpu.memory_space<vmem>>, %arg19: memref<1x1xf32, #tpu.memory_space<vmem>>, %arg20: memref<1x1x1xf32, #tpu.memory_space<vmem>>) attributes {dimension_semantics = [#tpu.dimension_semantics<parallel>], iteration_bounds = array<i64: 2>, scalar_prefetch = 0 : i64, scratch_operands = 0 : i64, tpu.core_type = #tpu.core_type<tc>, window_params = [{transform_indices = @transform_0, window_bounds = array<i64: 16, 64>}, {transform_indices = @transform_1, window_bounds = array<i64: 16, 1>}, {transform_indices = @transform_2, window_bounds = array<i64: 1, 8, 16, 16>}, {pipeline_mode = #tpu.pipeline_mode<synchronous>, transform_indices = @transform_3, window_bounds = array<i64: 64, 32>}, {pipeline_mode = #tpu.pipeline_mode<synchronous>, transform_indices = @transform_4, window_bounds = array<i64: 2, 1, 32>}, {pipeline_mode = #tpu.pipeline_mode<synchronous>, transform_indices = @transform_5, window_bounds = array<i64: 2, 1, 32>}, {pipeline_mode = #tpu.pipeline_mode<synchronous>, transform_indices = @transform_6, window_bounds = array<i64: 2, 32, 96>}, {pipeline_mode = #tpu.pipeline_mode<synchronous>, transform_indices = @transform_7, window_bounds = array<i64: 2, 32, 32>}, {pipeline_mode = #tpu.pipeline_mode<synchronous>, transform_indices = @transform_8, window_bounds = array<i64: 2, 1, 32>}, {pipeline_mode = #tpu.pipeline_mode<synchronous>, transform_indices = @transform_9, window_bounds = array<i64: 2, 1, 32>}, {pipeline_mode = #tpu.pipeline_mode<synchronous>, transform_indices = @transform_10, window_bounds = array<i64: 2, 1, 32>}, {pipeline_mode = #tpu.pipeline_mode<synchronous>, transform_indices = @transform_11, window_bounds = array<i64: 2, 32, 64>}, {pipeline_mode = #tpu.pipeline_mode<synchronous>, transform_indices = @transform_12, window_bounds = array<i64: 2, 1, 64>}, {pipeline_mode = #tpu.pipeline_mode<synchronous>, transform_indices = @transform_13, window_bounds = array<i64: 2, 64, 32>}, {pipeline_mode = #tpu.pipeline_mode<synchronous>, transform_indices = @transform_14, window_bounds = array<i64: 2, 1, 32>}, {pipeline_mode = #tpu.pipeline_mode<synchronous>, transform_indices = @transform_15, window_bounds = array<i64: 2, 32, 32>}, {pipeline_mode = #tpu.pipeline_mode<synchronous>, transform_indices = @transform_16, window_bounds = array<i64: 2, 1, 32>}, {pipeline_mode = #tpu.pipeline_mode<synchronous>, transform_indices = @transform_17, window_bounds = array<i64: 32, 1>}, {pipeline_mode = #tpu.pipeline_mode<synchronous>, transform_indices = @transform_18, window_bounds = array<i64: 1, 1>}, {transform_indices = @transform_19, window_bounds = array<i64: 1, 1, 1>}]} {
    %c0 = arith.constant 0 : index
    %c0_0 = arith.constant 0 : index
    %0 = vector.load %arg1[%c0, %c0_0] : memref<16x64xf32, #tpu.memory_space<vmem>>, vector<16x64xf32>
    %c0_1 = arith.constant 0 : index
    %c0_2 = arith.constant 0 : index
    %1 = vector.load %arg2[%c0_1, %c0_2] : memref<16x1xf32, #tpu.memory_space<vmem>>, vector<16x1xf32>
    %c0_3 = arith.constant 0 : index
    %c0_4 = arith.constant 0 : index
    %c0_5 = arith.constant 0 : index
    %c0_6 = arith.constant 0 : index
    %2 = vector.load %arg3[%c0_3, %c0_4, %c0_5, %c0_6] : memref<1x8x16x16xf32, #tpu.memory_space<vmem>>, vector<1x8x16x16xf32>
    %c0_7 = arith.constant 0 : index
    %c0_8 = arith.constant 0 : index
    %3 = vector.load %arg4[%c0_7, %c0_8] : memref<64x32xf32, #tpu.memory_space<vmem>>, vector<64x32xf32>
    %cst = arith.constant dense<0.000000e+00> : vector<16x32xf32>
    %4 = tpu.matmul %0, %3, %cst {dimension_numbers = #tpu.dot_dimension_numbers<[1], [0], [0], [1], [0, 0, 1, 1], [], []>} : vector<16x64xf32>, vector<64x32xf32>, vector<16x32xf32> -> vector<16x32xf32>
    %c0_9 = arith.constant 0 : index
    %c0_10 = arith.constant 0 : index
    %c0_11 = arith.constant 0 : index
    %5 = vector.load %arg5[%c0_9, %c0_10, %c0_11] : memref<2x1x32xf32, #tpu.memory_space<vmem>>, vector<1x1x32xf32>
    %6 = vector.shape_cast %5 : vector<1x1x32xf32> to vector<1x32xf32>
    %c0_12 = arith.constant 0 : index
    %c0_13 = arith.constant 0 : index
    %c0_14 = arith.constant 0 : index
    %7 = vector.load %arg6[%c0_12, %c0_13, %c0_14] : memref<2x1x32xf32, #tpu.memory_space<vmem>>, vector<1x1x32xf32>
    %8 = vector.shape_cast %7 : vector<1x1x32xf32> to vector<1x32xf32>
    %cst_15 = arith.constant dense<0.000000e+00> : vector<16xf32>
    %9 = vector.multi_reduction <add>, %4, %cst_15 [1] : vector<16x32xf32> to vector<16xf32>
    %10 = vector.shape_cast %9 : vector<16xf32> to vector<16x1xf32>
    %cst_16 = arith.constant 3.200000e+01 : f32
    %11 = vector.broadcast %cst_16 : f32 to vector<16x1xf32>
    %12 = arith.divf %10, %11 : vector<16x1xf32>
    %13 = vector.broadcast %12 : vector<16x1xf32> to vector<16x32xf32>
    %14 = arith.subf %4, %13 : vector<16x32xf32>
    %15 = arith.mulf %14, %14 : vector<16x32xf32>
    %cst_17 = arith.constant dense<0.000000e+00> : vector<16xf32>
    %16 = vector.multi_reduction <add>, %15, %cst_17 [1] : vector<16x32xf32> to vector<16xf32>
    %17 = vector.shape_cast %16 : vector<16xf32> to vector<16x1xf32>
    %cst_18 = arith.constant 3.200000e+01 : f32
    %18 = vector.broadcast %cst_18 : f32 to vector<16x1xf32>
    %19 = arith.divf %17, %18 : vector<16x1xf32>
    %cst_19 = arith.constant 9.99999974E-6 : f32
    %20 = vector.broadcast %cst_19 : f32 to vector<16x1xf32>
    %21 = arith.addf %19, %20 : vector<16x1xf32>
    %22 = math.rsqrt %21 : vector<16x1xf32>
    %23 = vector.broadcast %22 : vector<16x1xf32> to vector<16x32xf32>
    %24 = arith.mulf %14, %23 : vector<16x32xf32>
    %25 = vector.broadcast %6 : vector<1x32xf32> to vector<16x32xf32>
    %26 = arith.mulf %24, %25 : vector<16x32xf32>
    %27 = vector.broadcast %8 : vector<1x32xf32> to vector<16x32xf32>
    %28 = arith.addf %26, %27 : vector<16x32xf32>
    %c0_20 = arith.constant 0 : index
    %c0_21 = arith.constant 0 : index
    %c0_22 = arith.constant 0 : index
    %29 = vector.load %arg7[%c0_20, %c0_21, %c0_22] : memref<2x32x96xf32, #tpu.memory_space<vmem>>, vector<1x32x96xf32>
    %30 = vector.shape_cast %29 : vector<1x32x96xf32> to vector<32x96xf32>
    %cst_23 = arith.constant dense<0.000000e+00> : vector<16x96xf32>
    %31 = tpu.matmul %28, %30, %cst_23 {dimension_numbers = #tpu.dot_dimension_numbers<[1], [0], [0], [1], [0, 0, 1, 1], [], []>} : vector<16x32xf32>, vector<32x96xf32>, vector<16x96xf32> -> vector<16x96xf32>
    %32 = vector.extract_strided_slice %31 {offsets = [0, 0], sizes = [16, 8], strides = [1, 1]} : vector<16x96xf32> to vector<16x8xf32>
    %33 = vector.extract_strided_slice %31 {offsets = [0, 8], sizes = [16, 8], strides = [1, 1]} : vector<16x96xf32> to vector<16x8xf32>
    %34 = vector.extract_strided_slice %31 {offsets = [0, 16], sizes = [16, 8], strides = [1, 1]} : vector<16x96xf32> to vector<16x8xf32>
    %35 = vector.extract_strided_slice %31 {offsets = [0, 24], sizes = [16, 8], strides = [1, 1]} : vector<16x96xf32> to vector<16x8xf32>
    %36 = vector.shape_cast %32 : vector<16x8xf32> to vector<1x16x8xf32>
    %37 = vector.shape_cast %33 : vector<16x8xf32> to vector<1x16x8xf32>
    %38 = vector.shape_cast %34 : vector<16x8xf32> to vector<1x16x8xf32>
    %39 = vector.shape_cast %35 : vector<16x8xf32> to vector<1x16x8xf32>
    %40 = tpu.concatenate %36, %37, %38, %39 in 0 : vector<1x16x8xf32>, vector<1x16x8xf32>, vector<1x16x8xf32>, vector<1x16x8xf32> -> vector<4x16x8xf32>
    %41 = vector.extract_strided_slice %31 {offsets = [0, 32], sizes = [16, 8], strides = [1, 1]} : vector<16x96xf32> to vector<16x8xf32>
    %42 = vector.extract_strided_slice %31 {offsets = [0, 40], sizes = [16, 8], strides = [1, 1]} : vector<16x96xf32> to vector<16x8xf32>
    %43 = vector.extract_strided_slice %31 {offsets = [0, 48], sizes = [16, 8], strides = [1, 1]} : vector<16x96xf32> to vector<16x8xf32>
    %44 = vector.extract_strided_slice %31 {offsets = [0, 56], sizes = [16, 8], strides = [1, 1]} : vector<16x96xf32> to vector<16x8xf32>
    %45 = vector.shape_cast %41 : vector<16x8xf32> to vector<1x16x8xf32>
    %46 = vector.shape_cast %42 : vector<16x8xf32> to vector<1x16x8xf32>
    %47 = vector.shape_cast %43 : vector<16x8xf32> to vector<1x16x8xf32>
    %48 = vector.shape_cast %44 : vector<16x8xf32> to vector<1x16x8xf32>
    %49 = tpu.concatenate %45, %46, %47, %48 in 0 : vector<1x16x8xf32>, vector<1x16x8xf32>, vector<1x16x8xf32>, vector<1x16x8xf32> -> vector<4x16x8xf32>
    %50 = vector.extract_strided_slice %31 {offsets = [0, 64], sizes = [16, 8], strides = [1, 1]} : vector<16x96xf32> to vector<16x8xf32>
    %51 = vector.extract_strided_slice %31 {offsets = [0, 72], sizes = [16, 8], strides = [1, 1]} : vector<16x96xf32> to vector<16x8xf32>
    %52 = vector.extract_strided_slice %31 {offsets = [0, 80], sizes = [16, 8], strides = [1, 1]} : vector<16x96xf32> to vector<16x8xf32>
    %53 = vector.extract_strided_slice %31 {offsets = [0, 88], sizes = [16, 8], strides = [1, 1]} : vector<16x96xf32> to vector<16x8xf32>
    %54 = vector.shape_cast %50 : vector<16x8xf32> to vector<1x16x8xf32>
    %55 = vector.shape_cast %51 : vector<16x8xf32> to vector<1x16x8xf32>
    %56 = vector.shape_cast %52 : vector<16x8xf32> to vector<1x16x8xf32>
    %57 = vector.shape_cast %53 : vector<16x8xf32> to vector<1x16x8xf32>
    %58 = tpu.concatenate %54, %55, %56, %57 in 0 : vector<1x16x8xf32>, vector<1x16x8xf32>, vector<1x16x8xf32>, vector<1x16x8xf32> -> vector<4x16x8xf32>
    "tpu.trace_start"() <{level = 10 : i32, message = "gqd,gkd->gqk"}> : () -> ()
    %cst_24 = arith.constant dense<0.000000e+00> : vector<4x16x16xf32>
    %59 = tpu.matmul %40, %49, %cst_24 {dimension_numbers = #tpu.dot_dimension_numbers<[2], [2], [1], [1], [0, 0, 0, 1, 1, 1], [0], [0]>} : vector<4x16x8xf32>, vector<4x16x8xf32>, vector<4x16x16xf32> -> vector<4x16x16xf32>
    "tpu.trace_stop"() : () -> ()
    %cst_25 = arith.constant 0.176776692 : f32
    %60 = vector.broadcast %cst_25 : f32 to vector<4x16x16xf32>
    %61 = arith.mulf %59, %60 : vector<4x16x16xf32>
    %62 = vector.extract_strided_slice %2 {offsets = [0, 0, 0, 0], sizes = [1, 4, 16, 16], strides = [1, 1, 1, 1]} : vector<1x8x16x16xf32> to vector<1x4x16x16xf32>
    %63 = vector.shape_cast %62 : vector<1x4x16x16xf32> to vector<4x16x16xf32>
    %64 = arith.addf %61, %63 : vector<4x16x16xf32>
    %cst_26 = arith.constant dense<0xFF800000> : vector<4x16xf32>
    %65 = vector.multi_reduction <maximumf>, %64, %cst_26 [2] : vector<4x16x16xf32> to vector<4x16xf32>
    %66 = vector.shape_cast %65 : vector<4x16xf32> to vector<4x16x1xf32>
    %67 = vector.broadcast %66 : vector<4x16x1xf32> to vector<4x16x16xf32>
    %68 = arith.subf %64, %67 : vector<4x16x16xf32>
    %69 = math.exp %68 : vector<4x16x16xf32>
    %cst_27 = arith.constant dense<0.000000e+00> : vector<4x16xf32>
    %70 = vector.multi_reduction <add>, %69, %cst_27 [2] : vector<4x16x16xf32> to vector<4x16xf32>
    %71 = vector.shape_cast %70 : vector<4x16xf32> to vector<4x16x1xf32>
    %72 = vector.broadcast %71 : vector<4x16x1xf32> to vector<4x16x16xf32>
    %73 = arith.divf %69, %72 : vector<4x16x16xf32>
    "tpu.trace_start"() <{level = 10 : i32, message = "gqk,gkd->gqd"}> : () -> ()
    %cst_28 = arith.constant dense<0.000000e+00> : vector<4x16x8xf32>
    %74 = tpu.matmul %73, %58, %cst_28 {dimension_numbers = #tpu.dot_dimension_numbers<[2], [1], [1], [2], [0, 0, 0, 1, 1, 2], [0], [0]>} : vector<4x16x16xf32>, vector<4x16x8xf32>, vector<4x16x8xf32> -> vector<4x16x8xf32>
    "tpu.trace_stop"() : () -> ()
    %75 = vector.extract_strided_slice %74 {offsets = [0, 0, 0], sizes = [1, 16, 8], strides = [1, 1, 1]} : vector<4x16x8xf32> to vector<1x16x8xf32>
    %76 = vector.shape_cast %75 : vector<1x16x8xf32> to vector<16x8xf32>
    %77 = vector.extract_strided_slice %74 {offsets = [1, 0, 0], sizes = [1, 16, 8], strides = [1, 1, 1]} : vector<4x16x8xf32> to vector<1x16x8xf32>
    %78 = vector.shape_cast %77 : vector<1x16x8xf32> to vector<16x8xf32>
    %79 = vector.extract_strided_slice %74 {offsets = [2, 0, 0], sizes = [1, 16, 8], strides = [1, 1, 1]} : vector<4x16x8xf32> to vector<1x16x8xf32>
    %80 = vector.shape_cast %79 : vector<1x16x8xf32> to vector<16x8xf32>
    %81 = vector.extract_strided_slice %74 {offsets = [3, 0, 0], sizes = [1, 16, 8], strides = [1, 1, 1]} : vector<4x16x8xf32> to vector<1x16x8xf32>
    %82 = vector.shape_cast %81 : vector<1x16x8xf32> to vector<16x8xf32>
    %83 = tpu.concatenate %76, %78, %80, %82 in 1 : vector<16x8xf32>, vector<16x8xf32>, vector<16x8xf32>, vector<16x8xf32> -> vector<16x32xf32>
    %c0_29 = arith.constant 0 : index
    %c0_30 = arith.constant 0 : index
    %c0_31 = arith.constant 0 : index
    %84 = vector.load %arg8[%c0_29, %c0_30, %c0_31] : memref<2x32x32xf32, #tpu.memory_space<vmem>>, vector<1x32x32xf32>
    %85 = vector.shape_cast %84 : vector<1x32x32xf32> to vector<32x32xf32>
    %cst_32 = arith.constant dense<0.000000e+00> : vector<16x32xf32>
    %86 = tpu.matmul %83, %85, %cst_32 {dimension_numbers = #tpu.dot_dimension_numbers<[1], [0], [0], [1], [0, 0, 1, 1], [], []>} : vector<16x32xf32>, vector<32x32xf32>, vector<16x32xf32> -> vector<16x32xf32>
    %c0_33 = arith.constant 0 : index
    %c0_34 = arith.constant 0 : index
    %c0_35 = arith.constant 0 : index
    %87 = vector.load %arg9[%c0_33, %c0_34, %c0_35] : memref<2x1x32xf32, #tpu.memory_space<vmem>>, vector<1x1x32xf32>
    %88 = vector.shape_cast %87 : vector<1x1x32xf32> to vector<1x32xf32>
    %89 = vector.broadcast %88 : vector<1x32xf32> to vector<16x32xf32>
    %90 = arith.addf %86, %89 : vector<16x32xf32>
    %91 = vector.broadcast %1 : vector<16x1xf32> to vector<16x32xf32>
    %92 = arith.mulf %90, %91 : vector<16x32xf32>
    %93 = arith.addf %4, %92 : vector<16x32xf32>
    %c0_36 = arith.constant 0 : index
    %c0_37 = arith.constant 0 : index
    %c0_38 = arith.constant 0 : index
    %94 = vector.load %arg10[%c0_36, %c0_37, %c0_38] : memref<2x1x32xf32, #tpu.memory_space<vmem>>, vector<1x1x32xf32>
    %95 = vector.shape_cast %94 : vector<1x1x32xf32> to vector<1x32xf32>
    %c0_39 = arith.constant 0 : index
    %c0_40 = arith.constant 0 : index
    %c0_41 = arith.constant 0 : index
    %96 = vector.load %arg11[%c0_39, %c0_40, %c0_41] : memref<2x1x32xf32, #tpu.memory_space<vmem>>, vector<1x1x32xf32>
    %97 = vector.shape_cast %96 : vector<1x1x32xf32> to vector<1x32xf32>
    %cst_42 = arith.constant dense<0.000000e+00> : vector<16xf32>
    %98 = vector.multi_reduction <add>, %93, %cst_42 [1] : vector<16x32xf32> to vector<16xf32>
    %99 = vector.shape_cast %98 : vector<16xf32> to vector<16x1xf32>
    %cst_43 = arith.constant 3.200000e+01 : f32
    %100 = vector.broadcast %cst_43 : f32 to vector<16x1xf32>
    %101 = arith.divf %99, %100 : vector<16x1xf32>
    %102 = vector.broadcast %101 : vector<16x1xf32> to vector<16x32xf32>
    %103 = arith.subf %93, %102 : vector<16x32xf32>
    %104 = arith.mulf %103, %103 : vector<16x32xf32>
    %cst_44 = arith.constant dense<0.000000e+00> : vector<16xf32>
    %105 = vector.multi_reduction <add>, %104, %cst_44 [1] : vector<16x32xf32> to vector<16xf32>
    %106 = vector.shape_cast %105 : vector<16xf32> to vector<16x1xf32>
    %cst_45 = arith.constant 3.200000e+01 : f32
    %107 = vector.broadcast %cst_45 : f32 to vector<16x1xf32>
    %108 = arith.divf %106, %107 : vector<16x1xf32>
    %cst_46 = arith.constant 9.99999974E-6 : f32
    %109 = vector.broadcast %cst_46 : f32 to vector<16x1xf32>
    %110 = arith.addf %108, %109 : vector<16x1xf32>
    %111 = math.rsqrt %110 : vector<16x1xf32>
    %112 = vector.broadcast %111 : vector<16x1xf32> to vector<16x32xf32>
    %113 = arith.mulf %103, %112 : vector<16x32xf32>
    %114 = vector.broadcast %95 : vector<1x32xf32> to vector<16x32xf32>
    %115 = arith.mulf %113, %114 : vector<16x32xf32>
    %116 = vector.broadcast %97 : vector<1x32xf32> to vector<16x32xf32>
    %117 = arith.addf %115, %116 : vector<16x32xf32>
    %c0_47 = arith.constant 0 : index
    %c0_48 = arith.constant 0 : index
    %c0_49 = arith.constant 0 : index
    %118 = vector.load %arg12[%c0_47, %c0_48, %c0_49] : memref<2x32x64xf32, #tpu.memory_space<vmem>>, vector<1x32x64xf32>
    %119 = vector.shape_cast %118 : vector<1x32x64xf32> to vector<32x64xf32>
    %cst_50 = arith.constant dense<0.000000e+00> : vector<16x64xf32>
    %120 = tpu.matmul %117, %119, %cst_50 {dimension_numbers = #tpu.dot_dimension_numbers<[1], [0], [0], [1], [0, 0, 1, 1], [], []>} : vector<16x32xf32>, vector<32x64xf32>, vector<16x64xf32> -> vector<16x64xf32>
    %c0_51 = arith.constant 0 : index
    %c0_52 = arith.constant 0 : index
    %c0_53 = arith.constant 0 : index
    %121 = vector.load %arg13[%c0_51, %c0_52, %c0_53] : memref<2x1x64xf32, #tpu.memory_space<vmem>>, vector<1x1x64xf32>
    %122 = vector.shape_cast %121 : vector<1x1x64xf32> to vector<1x64xf32>
    %123 = vector.broadcast %122 : vector<1x64xf32> to vector<16x64xf32>
    %124 = arith.addf %120, %123 : vector<16x64xf32>
    %cst_54 = arith.constant 0.000000e+00 : f32
    %125 = vector.broadcast %cst_54 : f32 to vector<16x64xf32>
    %126 = arith.subf %125, %124 : vector<16x64xf32>
    %127 = math.exp %126 : vector<16x64xf32>
    %cst_55 = arith.constant 1.000000e+00 : f32
    %128 = vector.broadcast %cst_55 : f32 to vector<16x64xf32>
    %129 = arith.addf %128, %127 : vector<16x64xf32>
    %cst_56 = arith.constant 1.000000e+00 : f32
    %130 = vector.broadcast %cst_56 : f32 to vector<16x64xf32>
    %131 = arith.divf %130, %129 : vector<16x64xf32>
    %132 = arith.mulf %124, %131 : vector<16x64xf32>
    %c0_57 = arith.constant 0 : index
    %c0_58 = arith.constant 0 : index
    %c0_59 = arith.constant 0 : index
    %133 = vector.load %arg14[%c0_57, %c0_58, %c0_59] : memref<2x64x32xf32, #tpu.memory_space<vmem>>, vector<1x64x32xf32>
    %134 = vector.shape_cast %133 : vector<1x64x32xf32> to vector<64x32xf32>
    %cst_60 = arith.constant dense<0.000000e+00> : vector<16x32xf32>
    %135 = tpu.matmul %132, %134, %cst_60 {dimension_numbers = #tpu.dot_dimension_numbers<[1], [0], [0], [1], [0, 0, 1, 1], [], []>} : vector<16x64xf32>, vector<64x32xf32>, vector<16x32xf32> -> vector<16x32xf32>
    %c0_61 = arith.constant 0 : index
    %c0_62 = arith.constant 0 : index
    %c0_63 = arith.constant 0 : index
    %136 = vector.load %arg15[%c0_61, %c0_62, %c0_63] : memref<2x1x32xf32, #tpu.memory_space<vmem>>, vector<1x1x32xf32>
    %137 = vector.shape_cast %136 : vector<1x1x32xf32> to vector<1x32xf32>
    %138 = vector.broadcast %137 : vector<1x32xf32> to vector<16x32xf32>
    %139 = arith.addf %135, %138 : vector<16x32xf32>
    %140 = vector.broadcast %1 : vector<16x1xf32> to vector<16x32xf32>
    %141 = arith.mulf %139, %140 : vector<16x32xf32>
    %142 = arith.addf %93, %141 : vector<16x32xf32>
    %c1 = arith.constant 1 : index
    %c0_64 = arith.constant 0 : index
    %c0_65 = arith.constant 0 : index
    %143 = vector.load %arg5[%c1, %c0_64, %c0_65] : memref<2x1x32xf32, #tpu.memory_space<vmem>>, vector<1x1x32xf32>
    %144 = vector.shape_cast %143 : vector<1x1x32xf32> to vector<1x32xf32>
    %c1_66 = arith.constant 1 : index
    %c0_67 = arith.constant 0 : index
    %c0_68 = arith.constant 0 : index
    %145 = vector.load %arg6[%c1_66, %c0_67, %c0_68] : memref<2x1x32xf32, #tpu.memory_space<vmem>>, vector<1x1x32xf32>
    %146 = vector.shape_cast %145 : vector<1x1x32xf32> to vector<1x32xf32>
    %cst_69 = arith.constant dense<0.000000e+00> : vector<16xf32>
    %147 = vector.multi_reduction <add>, %142, %cst_69 [1] : vector<16x32xf32> to vector<16xf32>
    %148 = vector.shape_cast %147 : vector<16xf32> to vector<16x1xf32>
    %cst_70 = arith.constant 3.200000e+01 : f32
    %149 = vector.broadcast %cst_70 : f32 to vector<16x1xf32>
    %150 = arith.divf %148, %149 : vector<16x1xf32>
    %151 = vector.broadcast %150 : vector<16x1xf32> to vector<16x32xf32>
    %152 = arith.subf %142, %151 : vector<16x32xf32>
    %153 = arith.mulf %152, %152 : vector<16x32xf32>
    %cst_71 = arith.constant dense<0.000000e+00> : vector<16xf32>
    %154 = vector.multi_reduction <add>, %153, %cst_71 [1] : vector<16x32xf32> to vector<16xf32>
    %155 = vector.shape_cast %154 : vector<16xf32> to vector<16x1xf32>
    %cst_72 = arith.constant 3.200000e+01 : f32
    %156 = vector.broadcast %cst_72 : f32 to vector<16x1xf32>
    %157 = arith.divf %155, %156 : vector<16x1xf32>
    %cst_73 = arith.constant 9.99999974E-6 : f32
    %158 = vector.broadcast %cst_73 : f32 to vector<16x1xf32>
    %159 = arith.addf %157, %158 : vector<16x1xf32>
    %160 = math.rsqrt %159 : vector<16x1xf32>
    %161 = vector.broadcast %160 : vector<16x1xf32> to vector<16x32xf32>
    %162 = arith.mulf %152, %161 : vector<16x32xf32>
    %163 = vector.broadcast %144 : vector<1x32xf32> to vector<16x32xf32>
    %164 = arith.mulf %162, %163 : vector<16x32xf32>
    %165 = vector.broadcast %146 : vector<1x32xf32> to vector<16x32xf32>
    %166 = arith.addf %164, %165 : vector<16x32xf32>
    %c1_74 = arith.constant 1 : index
    %c0_75 = arith.constant 0 : index
    %c0_76 = arith.constant 0 : index
    %167 = vector.load %arg7[%c1_74, %c0_75, %c0_76] : memref<2x32x96xf32, #tpu.memory_space<vmem>>, vector<1x32x96xf32>
    %168 = vector.shape_cast %167 : vector<1x32x96xf32> to vector<32x96xf32>
    %cst_77 = arith.constant dense<0.000000e+00> : vector<16x96xf32>
    %169 = tpu.matmul %166, %168, %cst_77 {dimension_numbers = #tpu.dot_dimension_numbers<[1], [0], [0], [1], [0, 0, 1, 1], [], []>} : vector<16x32xf32>, vector<32x96xf32>, vector<16x96xf32> -> vector<16x96xf32>
    %170 = vector.extract_strided_slice %169 {offsets = [0, 0], sizes = [16, 8], strides = [1, 1]} : vector<16x96xf32> to vector<16x8xf32>
    %171 = vector.extract_strided_slice %169 {offsets = [0, 8], sizes = [16, 8], strides = [1, 1]} : vector<16x96xf32> to vector<16x8xf32>
    %172 = vector.extract_strided_slice %169 {offsets = [0, 16], sizes = [16, 8], strides = [1, 1]} : vector<16x96xf32> to vector<16x8xf32>
    %173 = vector.extract_strided_slice %169 {offsets = [0, 24], sizes = [16, 8], strides = [1, 1]} : vector<16x96xf32> to vector<16x8xf32>
    %174 = vector.shape_cast %170 : vector<16x8xf32> to vector<1x16x8xf32>
    %175 = vector.shape_cast %171 : vector<16x8xf32> to vector<1x16x8xf32>
    %176 = vector.shape_cast %172 : vector<16x8xf32> to vector<1x16x8xf32>
    %177 = vector.shape_cast %173 : vector<16x8xf32> to vector<1x16x8xf32>
    %178 = tpu.concatenate %174, %175, %176, %177 in 0 : vector<1x16x8xf32>, vector<1x16x8xf32>, vector<1x16x8xf32>, vector<1x16x8xf32> -> vector<4x16x8xf32>
    %179 = vector.extract_strided_slice %169 {offsets = [0, 32], sizes = [16, 8], strides = [1, 1]} : vector<16x96xf32> to vector<16x8xf32>
    %180 = vector.extract_strided_slice %169 {offsets = [0, 40], sizes = [16, 8], strides = [1, 1]} : vector<16x96xf32> to vector<16x8xf32>
    %181 = vector.extract_strided_slice %169 {offsets = [0, 48], sizes = [16, 8], strides = [1, 1]} : vector<16x96xf32> to vector<16x8xf32>
    %182 = vector.extract_strided_slice %169 {offsets = [0, 56], sizes = [16, 8], strides = [1, 1]} : vector<16x96xf32> to vector<16x8xf32>
    %183 = vector.shape_cast %179 : vector<16x8xf32> to vector<1x16x8xf32>
    %184 = vector.shape_cast %180 : vector<16x8xf32> to vector<1x16x8xf32>
    %185 = vector.shape_cast %181 : vector<16x8xf32> to vector<1x16x8xf32>
    %186 = vector.shape_cast %182 : vector<16x8xf32> to vector<1x16x8xf32>
    %187 = tpu.concatenate %183, %184, %185, %186 in 0 : vector<1x16x8xf32>, vector<1x16x8xf32>, vector<1x16x8xf32>, vector<1x16x8xf32> -> vector<4x16x8xf32>
    %188 = vector.extract_strided_slice %169 {offsets = [0, 64], sizes = [16, 8], strides = [1, 1]} : vector<16x96xf32> to vector<16x8xf32>
    %189 = vector.extract_strided_slice %169 {offsets = [0, 72], sizes = [16, 8], strides = [1, 1]} : vector<16x96xf32> to vector<16x8xf32>
    %190 = vector.extract_strided_slice %169 {offsets = [0, 80], sizes = [16, 8], strides = [1, 1]} : vector<16x96xf32> to vector<16x8xf32>
    %191 = vector.extract_strided_slice %169 {offsets = [0, 88], sizes = [16, 8], strides = [1, 1]} : vector<16x96xf32> to vector<16x8xf32>
    %192 = vector.shape_cast %188 : vector<16x8xf32> to vector<1x16x8xf32>
    %193 = vector.shape_cast %189 : vector<16x8xf32> to vector<1x16x8xf32>
    %194 = vector.shape_cast %190 : vector<16x8xf32> to vector<1x16x8xf32>
    %195 = vector.shape_cast %191 : vector<16x8xf32> to vector<1x16x8xf32>
    %196 = tpu.concatenate %192, %193, %194, %195 in 0 : vector<1x16x8xf32>, vector<1x16x8xf32>, vector<1x16x8xf32>, vector<1x16x8xf32> -> vector<4x16x8xf32>
    "tpu.trace_start"() <{level = 10 : i32, message = "gqd,gkd->gqk"}> : () -> ()
    %cst_78 = arith.constant dense<0.000000e+00> : vector<4x16x16xf32>
    %197 = tpu.matmul %178, %187, %cst_78 {dimension_numbers = #tpu.dot_dimension_numbers<[2], [2], [1], [1], [0, 0, 0, 1, 1, 1], [0], [0]>} : vector<4x16x8xf32>, vector<4x16x8xf32>, vector<4x16x16xf32> -> vector<4x16x16xf32>
    "tpu.trace_stop"() : () -> ()
    %cst_79 = arith.constant 0.176776692 : f32
    %198 = vector.broadcast %cst_79 : f32 to vector<4x16x16xf32>
    %199 = arith.mulf %197, %198 : vector<4x16x16xf32>
    %200 = vector.extract_strided_slice %2 {offsets = [0, 4, 0, 0], sizes = [1, 4, 16, 16], strides = [1, 1, 1, 1]} : vector<1x8x16x16xf32> to vector<1x4x16x16xf32>
    %201 = vector.shape_cast %200 : vector<1x4x16x16xf32> to vector<4x16x16xf32>
    %202 = arith.addf %199, %201 : vector<4x16x16xf32>
    %cst_80 = arith.constant dense<0xFF800000> : vector<4x16xf32>
    %203 = vector.multi_reduction <maximumf>, %202, %cst_80 [2] : vector<4x16x16xf32> to vector<4x16xf32>
    %204 = vector.shape_cast %203 : vector<4x16xf32> to vector<4x16x1xf32>
    %205 = vector.broadcast %204 : vector<4x16x1xf32> to vector<4x16x16xf32>
    %206 = arith.subf %202, %205 : vector<4x16x16xf32>
    %207 = math.exp %206 : vector<4x16x16xf32>
    %cst_81 = arith.constant dense<0.000000e+00> : vector<4x16xf32>
    %208 = vector.multi_reduction <add>, %207, %cst_81 [2] : vector<4x16x16xf32> to vector<4x16xf32>
    %209 = vector.shape_cast %208 : vector<4x16xf32> to vector<4x16x1xf32>
    %210 = vector.broadcast %209 : vector<4x16x1xf32> to vector<4x16x16xf32>
    %211 = arith.divf %207, %210 : vector<4x16x16xf32>
    "tpu.trace_start"() <{level = 10 : i32, message = "gqk,gkd->gqd"}> : () -> ()
    %cst_82 = arith.constant dense<0.000000e+00> : vector<4x16x8xf32>
    %212 = tpu.matmul %211, %196, %cst_82 {dimension_numbers = #tpu.dot_dimension_numbers<[2], [1], [1], [2], [0, 0, 0, 1, 1, 2], [0], [0]>} : vector<4x16x16xf32>, vector<4x16x8xf32>, vector<4x16x8xf32> -> vector<4x16x8xf32>
    "tpu.trace_stop"() : () -> ()
    %213 = vector.extract_strided_slice %212 {offsets = [0, 0, 0], sizes = [1, 16, 8], strides = [1, 1, 1]} : vector<4x16x8xf32> to vector<1x16x8xf32>
    %214 = vector.shape_cast %213 : vector<1x16x8xf32> to vector<16x8xf32>
    %215 = vector.extract_strided_slice %212 {offsets = [1, 0, 0], sizes = [1, 16, 8], strides = [1, 1, 1]} : vector<4x16x8xf32> to vector<1x16x8xf32>
    %216 = vector.shape_cast %215 : vector<1x16x8xf32> to vector<16x8xf32>
    %217 = vector.extract_strided_slice %212 {offsets = [2, 0, 0], sizes = [1, 16, 8], strides = [1, 1, 1]} : vector<4x16x8xf32> to vector<1x16x8xf32>
    %218 = vector.shape_cast %217 : vector<1x16x8xf32> to vector<16x8xf32>
    %219 = vector.extract_strided_slice %212 {offsets = [3, 0, 0], sizes = [1, 16, 8], strides = [1, 1, 1]} : vector<4x16x8xf32> to vector<1x16x8xf32>
    %220 = vector.shape_cast %219 : vector<1x16x8xf32> to vector<16x8xf32>
    %221 = tpu.concatenate %214, %216, %218, %220 in 1 : vector<16x8xf32>, vector<16x8xf32>, vector<16x8xf32>, vector<16x8xf32> -> vector<16x32xf32>
    %c1_83 = arith.constant 1 : index
    %c0_84 = arith.constant 0 : index
    %c0_85 = arith.constant 0 : index
    %222 = vector.load %arg8[%c1_83, %c0_84, %c0_85] : memref<2x32x32xf32, #tpu.memory_space<vmem>>, vector<1x32x32xf32>
    %223 = vector.shape_cast %222 : vector<1x32x32xf32> to vector<32x32xf32>
    %cst_86 = arith.constant dense<0.000000e+00> : vector<16x32xf32>
    %224 = tpu.matmul %221, %223, %cst_86 {dimension_numbers = #tpu.dot_dimension_numbers<[1], [0], [0], [1], [0, 0, 1, 1], [], []>} : vector<16x32xf32>, vector<32x32xf32>, vector<16x32xf32> -> vector<16x32xf32>
    %c1_87 = arith.constant 1 : index
    %c0_88 = arith.constant 0 : index
    %c0_89 = arith.constant 0 : index
    %225 = vector.load %arg9[%c1_87, %c0_88, %c0_89] : memref<2x1x32xf32, #tpu.memory_space<vmem>>, vector<1x1x32xf32>
    %226 = vector.shape_cast %225 : vector<1x1x32xf32> to vector<1x32xf32>
    %227 = vector.broadcast %226 : vector<1x32xf32> to vector<16x32xf32>
    %228 = arith.addf %224, %227 : vector<16x32xf32>
    %229 = vector.broadcast %1 : vector<16x1xf32> to vector<16x32xf32>
    %230 = arith.mulf %228, %229 : vector<16x32xf32>
    %231 = arith.addf %142, %230 : vector<16x32xf32>
    %c1_90 = arith.constant 1 : index
    %c0_91 = arith.constant 0 : index
    %c0_92 = arith.constant 0 : index
    %232 = vector.load %arg10[%c1_90, %c0_91, %c0_92] : memref<2x1x32xf32, #tpu.memory_space<vmem>>, vector<1x1x32xf32>
    %233 = vector.shape_cast %232 : vector<1x1x32xf32> to vector<1x32xf32>
    %c1_93 = arith.constant 1 : index
    %c0_94 = arith.constant 0 : index
    %c0_95 = arith.constant 0 : index
    %234 = vector.load %arg11[%c1_93, %c0_94, %c0_95] : memref<2x1x32xf32, #tpu.memory_space<vmem>>, vector<1x1x32xf32>
    %235 = vector.shape_cast %234 : vector<1x1x32xf32> to vector<1x32xf32>
    %cst_96 = arith.constant dense<0.000000e+00> : vector<16xf32>
    %236 = vector.multi_reduction <add>, %231, %cst_96 [1] : vector<16x32xf32> to vector<16xf32>
    %237 = vector.shape_cast %236 : vector<16xf32> to vector<16x1xf32>
    %cst_97 = arith.constant 3.200000e+01 : f32
    %238 = vector.broadcast %cst_97 : f32 to vector<16x1xf32>
    %239 = arith.divf %237, %238 : vector<16x1xf32>
    %240 = vector.broadcast %239 : vector<16x1xf32> to vector<16x32xf32>
    %241 = arith.subf %231, %240 : vector<16x32xf32>
    %242 = arith.mulf %241, %241 : vector<16x32xf32>
    %cst_98 = arith.constant dense<0.000000e+00> : vector<16xf32>
    %243 = vector.multi_reduction <add>, %242, %cst_98 [1] : vector<16x32xf32> to vector<16xf32>
    %244 = vector.shape_cast %243 : vector<16xf32> to vector<16x1xf32>
    %cst_99 = arith.constant 3.200000e+01 : f32
    %245 = vector.broadcast %cst_99 : f32 to vector<16x1xf32>
    %246 = arith.divf %244, %245 : vector<16x1xf32>
    %cst_100 = arith.constant 9.99999974E-6 : f32
    %247 = vector.broadcast %cst_100 : f32 to vector<16x1xf32>
    %248 = arith.addf %246, %247 : vector<16x1xf32>
    %249 = math.rsqrt %248 : vector<16x1xf32>
    %250 = vector.broadcast %249 : vector<16x1xf32> to vector<16x32xf32>
    %251 = arith.mulf %241, %250 : vector<16x32xf32>
    %252 = vector.broadcast %233 : vector<1x32xf32> to vector<16x32xf32>
    %253 = arith.mulf %251, %252 : vector<16x32xf32>
    %254 = vector.broadcast %235 : vector<1x32xf32> to vector<16x32xf32>
    %255 = arith.addf %253, %254 : vector<16x32xf32>
    %c1_101 = arith.constant 1 : index
    %c0_102 = arith.constant 0 : index
    %c0_103 = arith.constant 0 : index
    %256 = vector.load %arg12[%c1_101, %c0_102, %c0_103] : memref<2x32x64xf32, #tpu.memory_space<vmem>>, vector<1x32x64xf32>
    %257 = vector.shape_cast %256 : vector<1x32x64xf32> to vector<32x64xf32>
    %cst_104 = arith.constant dense<0.000000e+00> : vector<16x64xf32>
    %258 = tpu.matmul %255, %257, %cst_104 {dimension_numbers = #tpu.dot_dimension_numbers<[1], [0], [0], [1], [0, 0, 1, 1], [], []>} : vector<16x32xf32>, vector<32x64xf32>, vector<16x64xf32> -> vector<16x64xf32>
    %c1_105 = arith.constant 1 : index
    %c0_106 = arith.constant 0 : index
    %c0_107 = arith.constant 0 : index
    %259 = vector.load %arg13[%c1_105, %c0_106, %c0_107] : memref<2x1x64xf32, #tpu.memory_space<vmem>>, vector<1x1x64xf32>
    %260 = vector.shape_cast %259 : vector<1x1x64xf32> to vector<1x64xf32>
    %261 = vector.broadcast %260 : vector<1x64xf32> to vector<16x64xf32>
    %262 = arith.addf %258, %261 : vector<16x64xf32>
    %cst_108 = arith.constant 0.000000e+00 : f32
    %263 = vector.broadcast %cst_108 : f32 to vector<16x64xf32>
    %264 = arith.subf %263, %262 : vector<16x64xf32>
    %265 = math.exp %264 : vector<16x64xf32>
    %cst_109 = arith.constant 1.000000e+00 : f32
    %266 = vector.broadcast %cst_109 : f32 to vector<16x64xf32>
    %267 = arith.addf %266, %265 : vector<16x64xf32>
    %cst_110 = arith.constant 1.000000e+00 : f32
    %268 = vector.broadcast %cst_110 : f32 to vector<16x64xf32>
    %269 = arith.divf %268, %267 : vector<16x64xf32>
    %270 = arith.mulf %262, %269 : vector<16x64xf32>
    %c1_111 = arith.constant 1 : index
    %c0_112 = arith.constant 0 : index
    %c0_113 = arith.constant 0 : index
    %271 = vector.load %arg14[%c1_111, %c0_112, %c0_113] : memref<2x64x32xf32, #tpu.memory_space<vmem>>, vector<1x64x32xf32>
    %272 = vector.shape_cast %271 : vector<1x64x32xf32> to vector<64x32xf32>
    %cst_114 = arith.constant dense<0.000000e+00> : vector<16x32xf32>
    %273 = tpu.matmul %270, %272, %cst_114 {dimension_numbers = #tpu.dot_dimension_numbers<[1], [0], [0], [1], [0, 0, 1, 1], [], []>} : vector<16x64xf32>, vector<64x32xf32>, vector<16x32xf32> -> vector<16x32xf32>
    %c1_115 = arith.constant 1 : index
    %c0_116 = arith.constant 0 : index
    %c0_117 = arith.constant 0 : index
    %274 = vector.load %arg15[%c1_115, %c0_116, %c0_117] : memref<2x1x32xf32, #tpu.memory_space<vmem>>, vector<1x1x32xf32>
    %275 = vector.shape_cast %274 : vector<1x1x32xf32> to vector<1x32xf32>
    %276 = vector.broadcast %275 : vector<1x32xf32> to vector<16x32xf32>
    %277 = arith.addf %273, %276 : vector<16x32xf32>
    %278 = vector.broadcast %1 : vector<16x1xf32> to vector<16x32xf32>
    %279 = arith.mulf %277, %278 : vector<16x32xf32>
    %280 = arith.addf %231, %279 : vector<16x32xf32>
    %cst_118 = arith.constant dense<0.000000e+00> : vector<32xf32>
    %281 = vector.multi_reduction <add>, %280, %cst_118 [0] : vector<16x32xf32> to vector<32xf32>
    %282 = vector.shape_cast %281 : vector<32xf32> to vector<1x32xf32>
    %c0_119 = arith.constant 0 : index
    %c0_120 = arith.constant 0 : index
    %c0_121 = arith.constant 0 : index
    %283 = vector.load %arg16[%c0_119, %c0_120, %c0_121] : memref<2x32x32xf32, #tpu.memory_space<vmem>>, vector<1x32x32xf32>
    %284 = vector.shape_cast %283 : vector<1x32x32xf32> to vector<32x32xf32>
    %cst_122 = arith.constant dense<0.000000e+00> : vector<1x32xf32>
    %285 = tpu.matmul %282, %284, %cst_122 {dimension_numbers = #tpu.dot_dimension_numbers<[1], [0], [0], [1], [0, 0, 1, 1], [], []>} : vector<1x32xf32>, vector<32x32xf32>, vector<1x32xf32> -> vector<1x32xf32>
    %c0_123 = arith.constant 0 : index
    %c0_124 = arith.constant 0 : index
    %c0_125 = arith.constant 0 : index
    %286 = vector.load %arg17[%c0_123, %c0_124, %c0_125] : memref<2x1x32xf32, #tpu.memory_space<vmem>>, vector<1x1x32xf32>
    %287 = vector.shape_cast %286 : vector<1x1x32xf32> to vector<1x32xf32>
    %288 = arith.addf %285, %287 : vector<1x32xf32>
    %cst_126 = arith.constant 0.000000e+00 : f32
    %289 = vector.broadcast %cst_126 : f32 to vector<1x32xf32>
    %290 = arith.subf %289, %288 : vector<1x32xf32>
    %291 = math.exp %290 : vector<1x32xf32>
    %cst_127 = arith.constant 1.000000e+00 : f32
    %292 = vector.broadcast %cst_127 : f32 to vector<1x32xf32>
    %293 = arith.addf %292, %291 : vector<1x32xf32>
    %cst_128 = arith.constant 1.000000e+00 : f32
    %294 = vector.broadcast %cst_128 : f32 to vector<1x32xf32>
    %295 = arith.divf %294, %293 : vector<1x32xf32>
    %296 = arith.mulf %288, %295 : vector<1x32xf32>
    %c1_129 = arith.constant 1 : index
    %c0_130 = arith.constant 0 : index
    %c0_131 = arith.constant 0 : index
    %297 = vector.load %arg16[%c1_129, %c0_130, %c0_131] : memref<2x32x32xf32, #tpu.memory_space<vmem>>, vector<1x32x32xf32>
    %298 = vector.shape_cast %297 : vector<1x32x32xf32> to vector<32x32xf32>
    %cst_132 = arith.constant dense<0.000000e+00> : vector<1x32xf32>
    %299 = tpu.matmul %296, %298, %cst_132 {dimension_numbers = #tpu.dot_dimension_numbers<[1], [0], [0], [1], [0, 0, 1, 1], [], []>} : vector<1x32xf32>, vector<32x32xf32>, vector<1x32xf32> -> vector<1x32xf32>
    %c1_133 = arith.constant 1 : index
    %c0_134 = arith.constant 0 : index
    %c0_135 = arith.constant 0 : index
    %300 = vector.load %arg17[%c1_133, %c0_134, %c0_135] : memref<2x1x32xf32, #tpu.memory_space<vmem>>, vector<1x1x32xf32>
    %301 = vector.shape_cast %300 : vector<1x1x32xf32> to vector<1x32xf32>
    %302 = arith.addf %299, %301 : vector<1x32xf32>
    %cst_136 = arith.constant 0.000000e+00 : f32
    %303 = vector.broadcast %cst_136 : f32 to vector<1x32xf32>
    %304 = arith.subf %303, %302 : vector<1x32xf32>
    %305 = math.exp %304 : vector<1x32xf32>
    %cst_137 = arith.constant 1.000000e+00 : f32
    %306 = vector.broadcast %cst_137 : f32 to vector<1x32xf32>
    %307 = arith.addf %306, %305 : vector<1x32xf32>
    %cst_138 = arith.constant 1.000000e+00 : f32
    %308 = vector.broadcast %cst_138 : f32 to vector<1x32xf32>
    %309 = arith.divf %308, %307 : vector<1x32xf32>
    %310 = arith.mulf %302, %309 : vector<1x32xf32>
    %c0_139 = arith.constant 0 : index
    %c0_140 = arith.constant 0 : index
    %311 = vector.load %arg18[%c0_139, %c0_140] : memref<32x1xf32, #tpu.memory_space<vmem>>, vector<32x1xf32>
    %cst_141 = arith.constant dense<0.000000e+00> : vector<1x1xf32>
    %312 = tpu.matmul %310, %311, %cst_141 {dimension_numbers = #tpu.dot_dimension_numbers<[1], [0], [0], [1], [0, 0, 1, 1], [], []>} : vector<1x32xf32>, vector<32x1xf32>, vector<1x1xf32> -> vector<1x1xf32>
    %c0_142 = arith.constant 0 : index
    %c0_143 = arith.constant 0 : index
    %313 = vector.load %arg19[%c0_142, %c0_143] : memref<1x1xf32, #tpu.memory_space<vmem>>, vector<1x1xf32>
    %314 = arith.addf %312, %313 : vector<1x1xf32>
    %315 = vector.shape_cast %314 : vector<1x1xf32> to vector<1x1x1xf32>
    %c0_144 = arith.constant 0 : index
    %c0_145 = arith.constant 0 : index
    %c0_146 = arith.constant 0 : index
    %316 = vector.load %arg20[%c0_144, %c0_145, %c0_146] : memref<1x1x1xf32, #tpu.memory_space<vmem>>, vector<1x1x1xf32>
    tpu.vector_store %arg20[%c0_144, %c0_145, %c0_146], %315 {strides = array<i32>} : memref<1x1x1xf32, #tpu.memory_space<vmem>>, vector<1x1x1xf32>,
    return
  }
  func.func @transform_0(%arg0: i32) -> (i32, i32) {
    %c0_i32 = arith.constant 0 : i32
    %c0_i32_0 = arith.constant 0 : i32
    return %arg0, %c0_i32 : i32, i32
  }
  func.func @transform_1(%arg0: i32) -> (i32, i32) {
    %c0_i32 = arith.constant 0 : i32
    %c0_i32_0 = arith.constant 0 : i32
    return %arg0, %c0_i32 : i32, i32
  }
  func.func @transform_2(%arg0: i32) -> (i32, i32, i32, i32) {
    %c0_i32 = arith.constant 0 : i32
    %c0_i32_0 = arith.constant 0 : i32
    %c0_i32_1 = arith.constant 0 : i32
    %c0_i32_2 = arith.constant 0 : i32
    return %arg0, %c0_i32, %c0_i32_0, %c0_i32_1 : i32, i32, i32, i32
  }
  func.func @transform_3(%arg0: i32) -> (i32, i32) {
    %c0_i32 = arith.constant 0 : i32
    %c0_i32_0 = arith.constant 0 : i32
    %c0_i32_1 = arith.constant 0 : i32
    return %c0_i32, %c0_i32_0 : i32, i32
  }
  func.func @transform_4(%arg0: i32) -> (i32, i32, i32) {
    %c0_i32 = arith.constant 0 : i32
    %c0_i32_0 = arith.constant 0 : i32
    %c0_i32_1 = arith.constant 0 : i32
    %c0_i32_2 = arith.constant 0 : i32
    return %c0_i32, %c0_i32_0, %c0_i32_1 : i32, i32, i32
  }
  func.func @transform_5(%arg0: i32) -> (i32, i32, i32) {
    %c0_i32 = arith.constant 0 : i32
    %c0_i32_0 = arith.constant 0 : i32
    %c0_i32_1 = arith.constant 0 : i32
    %c0_i32_2 = arith.constant 0 : i32
    return %c0_i32, %c0_i32_0, %c0_i32_1 : i32, i32, i32
  }
  func.func @transform_6(%arg0: i32) -> (i32, i32, i32) {
    %c0_i32 = arith.constant 0 : i32
    %c0_i32_0 = arith.constant 0 : i32
    %c0_i32_1 = arith.constant 0 : i32
    %c0_i32_2 = arith.constant 0 : i32
    return %c0_i32, %c0_i32_0, %c0_i32_1 : i32, i32, i32
  }
  func.func @transform_7(%arg0: i32) -> (i32, i32, i32) {
    %c0_i32 = arith.constant 0 : i32
    %c0_i32_0 = arith.constant 0 : i32
    %c0_i32_1 = arith.constant 0 : i32
    %c0_i32_2 = arith.constant 0 : i32
    return %c0_i32, %c0_i32_0, %c0_i32_1 : i32, i32, i32
  }
  func.func @transform_8(%arg0: i32) -> (i32, i32, i32) {
    %c0_i32 = arith.constant 0 : i32
    %c0_i32_0 = arith.constant 0 : i32
    %c0_i32_1 = arith.constant 0 : i32
    %c0_i32_2 = arith.constant 0 : i32
    return %c0_i32, %c0_i32_0, %c0_i32_1 : i32, i32, i32
  }
  func.func @transform_9(%arg0: i32) -> (i32, i32, i32) {
    %c0_i32 = arith.constant 0 : i32
    %c0_i32_0 = arith.constant 0 : i32
    %c0_i32_1 = arith.constant 0 : i32
    %c0_i32_2 = arith.constant 0 : i32
    return %c0_i32, %c0_i32_0, %c0_i32_1 : i32, i32, i32
  }
  func.func @transform_10(%arg0: i32) -> (i32, i32, i32) {
    %c0_i32 = arith.constant 0 : i32
    %c0_i32_0 = arith.constant 0 : i32
    %c0_i32_1 = arith.constant 0 : i32
    %c0_i32_2 = arith.constant 0 : i32
    return %c0_i32, %c0_i32_0, %c0_i32_1 : i32, i32, i32
  }
  func.func @transform_11(%arg0: i32) -> (i32, i32, i32) {
    %c0_i32 = arith.constant 0 : i32
    %c0_i32_0 = arith.constant 0 : i32
    %c0_i32_1 = arith.constant 0 : i32
    %c0_i32_2 = arith.constant 0 : i32
    return %c0_i32, %c0_i32_0, %c0_i32_1 : i32, i32, i32
  }
  func.func @transform_12(%arg0: i32) -> (i32, i32, i32) {
    %c0_i32 = arith.constant 0 : i32
    %c0_i32_0 = arith.constant 0 : i32
    %c0_i32_1 = arith.constant 0 : i32
    %c0_i32_2 = arith.constant 0 : i32
    return %c0_i32, %c0_i32_0, %c0_i32_1 : i32, i32, i32
  }
  func.func @transform_13(%arg0: i32) -> (i32, i32, i32) {
    %c0_i32 = arith.constant 0 : i32
    %c0_i32_0 = arith.constant 0 : i32
    %c0_i32_1 = arith.constant 0 : i32
    %c0_i32_2 = arith.constant 0 : i32
    return %c0_i32, %c0_i32_0, %c0_i32_1 : i32, i32, i32
  }
  func.func @transform_14(%arg0: i32) -> (i32, i32, i32) {
    %c0_i32 = arith.constant 0 : i32
    %c0_i32_0 = arith.constant 0 : i32
    %c0_i32_1 = arith.constant 0 : i32
    %c0_i32_2 = arith.constant 0 : i32
    return %c0_i32, %c0_i32_0, %c0_i32_1 : i32, i32, i32
  }
  func.func @transform_15(%arg0: i32) -> (i32, i32, i32) {
    %c0_i32 = arith.constant 0 : i32
    %c0_i32_0 = arith.constant 0 : i32
    %c0_i32_1 = arith.constant 0 : i32
    %c0_i32_2 = arith.constant 0 : i32
    return %c0_i32, %c0_i32_0, %c0_i32_1 : i32, i32, i32
  }
  func.func @transform_16(%arg0: i32) -> (i32, i32, i32) {
    %c0_i32 = arith.constant 0 : i32
    %c0_i32_0 = arith.constant 0 : i32
    %c0_i32_1 = arith.constant 0 : i32
    %c0_i32_2 = arith.constant 0 : i32
    return %c0_i32, %c0_i32_0, %c0_i32_1 : i32, i32, i32
  }
  func.func @transform_17(%arg0: i32) -> (i32, i32) {
    %c0_i32 = arith.constant 0 : i32
    %c0_i32_0 = arith.constant 0 : i32
    %c0_i32_1 = arith.constant 0 : i32
    return %c0_i32, %c0_i32_0 : i32, i32
  }
  func.func @transform_18(%arg0: i32) -> (i32, i32) {
    %c0_i32 = arith.constant 0 : i32
    %c0_i32_0 = arith.constant 0 : i32
    %c0_i32_1 = arith.constant 0 : i32
    return %c0_i32, %c0_i32_0 : i32, i32
  }
  func.func @transform_19(%arg0: i32) -> (i32, i32, i32) {
    %c0_i32 = arith.constant 0 : i32
    %c0_i32_0 = arith.constant 0 : i32
    %c0_i32_1 = arith.constant 0 : i32
    return %arg0, %c0_i32, %c0_i32_0 : i32, i32, i32
  }
}

</mosaic_0001>

<llo_original>
// kernel: kamome_forward.1
$region0: #{kamome_forward.1}
  #allocation0 [shape = 'u32[]', space=smem, size = 0x4, offset = 0x4, fixed_abs, tag = 'smem constant byte address 0x4 - core index']
  #allocation1 [shape = 'u32[144,128]{1,0:T(1,128)}', space=vmem, size = 0x12000, scoped, tag = 'internal scratch']
  #allocation2 [shape = 'f32[1,1]{1,0:T(1,128)S(1)}', space=vmem, size = 0x200, scoped, tag = 'scoped memory for kamome_forward.1']
  %s0 = inlined_call_operand.vmem [shape: f32[32,64], index: 0, kind: input, shape index: {}]
  %s1 = inlined_call_operand.vmem [shape: f32[32,1], index: 1, kind: input, shape index: {}]
  %s2 = inlined_call_operand.vmem [shape: f32[2,8,16,16], index: 2, kind: input, shape index: {}]
  %s3 = inlined_call_operand.vmem [shape: f32[64,32], index: 3, kind: input, shape index: {}]
  %s4 = inlined_call_operand.vmem [shape: f32[2,1,32], index: 4, kind: input, shape index: {}]
  %s5 = inlined_call_operand.vmem [shape: f32[2,1,32], index: 5, kind: input, shape index: {}]
  %s6 = inlined_call_operand.vmem [shape: f32[2,32,96], index: 6, kind: input, shape index: {}]
  %s7 = inlined_call_operand.vmem [shape: f32[2,32,32], index: 7, kind: input, shape index: {}]
  %s8 = inlined_call_operand.vmem [shape: f32[2,1,32], index: 8, kind: input, shape index: {}]
  %s9 = inlined_call_operand.vmem [shape: f32[2,1,32], index: 9, kind: input, shape index: {}]
  %s10 = inlined_call_operand.vmem [shape: f32[2,1,32], index: 10, kind: input, shape index: {}]
  %s11 = inlined_call_operand.vmem [shape: f32[2,32,64], index: 11, kind: input, shape index: {}]
  %s12 = inlined_call_operand.vmem [shape: f32[2,1,64], index: 12, kind: input, shape index: {}]
  %s13 = inlined_call_operand.vmem [shape: f32[2,64,32], index: 13, kind: input, shape index: {}]
  %s14 = inlined_call_operand.vmem [shape: f32[2,1,32], index: 14, kind: input, shape index: {}]
  %s15 = inlined_call_operand.vmem [shape: f32[2,32,32], index: 15, kind: input, shape index: {}]
  %s16 = inlined_call_operand.vmem [shape: f32[2,1,32], index: 16, kind: input, shape index: {}]
  %s17 = inlined_call_operand.vmem [shape: f32[32,1], index: 17, kind: input, shape index: {}]
  %s18 = inlined_call_operand.<no memory space> [shape: f32[1,1], index: 18, kind: input, shape index: {}]
  %s19 = inlined_call_operand.vmem [shape: f32[2,1,1], index: 19, kind: output, shape index: {}]
  %s20 = sld [smem:[#allocation0]]
  $region109: #{kamome_forward.1} parent=0
    _
  %s22 = ssub.s32 1, %s20
  %s23 = scalar_select 0, %s22, %s20
  %v24 = vstv %s18
  %25 = vst [vmem:[#allocation2] sm:$0x1] %v24
  loop: start=0, step=1, limit=4
  $region2: #{kamome_forward.1} parent=0 // loop_pre_header
    _
  $region3: #{kamome_forward.1} parent=0 // loop_header
    %s27 = sphi 0, %s31
    %p28 = scmp.ge.s32.totalorder %s27, 4
    %s37 = sphi 0, %s39
    %s40 = sphi 0, %s37
    %s41 = sphi 0, %s40
    %s57 = sphi 0, %s41
    %s63 = sphi 0, %s65
    %s66 = sphi 0, %s63
    %s67 = sphi 0, %s66
    %s83 = sphi 0, %s67
    %s89 = sphi 0, %s91
    %s92 = sphi 0, %s89
    %s93 = sphi 0, %s92
    %s109 = sphi 0, %s93
    %s113 = sphi 0, %s113
    %s115 = sphi 0, %s113
    %s116 = sphi 0, %s115
    %s130 = sphi 0, %s116
    %s134 = sphi 0, %s134
    %s136 = sphi 0, %s134
    %s137 = sphi 0, %s136
    %s151 = sphi 0, %s137
    %s155 = sphi 0, %s155
    %s157 = sphi 0, %s155
    %s158 = sphi 0, %s157
    %s172 = sphi 0, %s158
    %s176 = sphi 0, %s176
    %s178 = sphi 0, %s176
    %s179 = sphi 0, %s178
    %s193 = sphi 0, %s179
    %s197 = sphi 0, %s197
    %s199 = sphi 0, %s197
    %s200 = sphi 0, %s199
    %s214 = sphi 0, %s200
    %s218 = sphi 0, %s218
    %s220 = sphi 0, %s218
    %s221 = sphi 0, %s220
    %s235 = sphi 0, %s221
    %s239 = sphi 0, %s239
    %s241 = sphi 0, %s239
    %s242 = sphi 0, %s241
    %s256 = sphi 0, %s242
    %s260 = sphi 0, %s260
    %s262 = sphi 0, %s260
    %s263 = sphi 0, %s262
    %s277 = sphi 0, %s263
    %s281 = sphi 0, %s281
    %s283 = sphi 0, %s281
    %s284 = sphi 0, %s283
    %s298 = sphi 0, %s284
    %s302 = sphi 0, %s302
    %s304 = sphi 0, %s302
    %s305 = sphi 0, %s304
    %s319 = sphi 0, %s305
    %s323 = sphi 0, %s323
    %s325 = sphi 0, %s323
    %s326 = sphi 0, %s325
    %s340 = sphi 0, %s326
    %s344 = sphi 0, %s344
    %s346 = sphi 0, %s344
    %s347 = sphi 0, %s346
    %s361 = sphi 0, %s347
    %s365 = sphi 0, %s365
    %s367 = sphi 0, %s365
    %s368 = sphi 0, %s367
    %s382 = sphi 0, %s368
    %s386 = sphi 0, %s386
    %s388 = sphi 0, %s386
    %s389 = sphi 0, %s388
    %s403 = sphi 0, %s389
    %s407 = sphi 0, %s407
    %s409 = sphi 0, %s407
    %s410 = sphi 0, %s409
    %s424 = sphi 0, %s410
    %s428 = sphi 0, %s428
    %s430 = sphi 0, %s428
    %s431 = sphi 0, %s430
    %s445 = sphi 0, %s431
    %s451 = sphi 0, %s453
    %s454 = sphi 0, %s451
    %s455 = sphi 0, %s454
    %s471 = sphi 0, %s455
  $region4: #{kamome_forward.1} parent=0 // loop_header_branch
    %30 = sbr.rel (%p28) target = $region8
  $region5: #{kamome_forward.1} parent=0 // loop_body
    %s32 = ssub.s32 %s27, 1
    %s33 = ssub.s32 %s27, 2
    %s34 = sadd.s32 %s27, 1
    %s35 = ssub.s32 %s27, %s34
    %p36 = scmp.eq.s32.totalorder %s35, 0
    %s38 = sadd.s32 %s37, 1
    %s39 = scalar_select %p36, %s37, %s38
    %p42 = pneg %p36
    %p43 = scmp.eq.s32.totalorder %s27, 1
    %p44 = por %p42, %p43
    %p45 = scmp.ne.s32.totalorder %s37, %s40
    %p46 = scmp.eq.s32.totalorder %s27, 0
    %p47 = por %p45, %p46
    %p48 = scmp.ne.s32.totalorder %s37, %s40
    %p49 = scmp.eq.s32.totalorder %s32, 1
    %p50 = por %p48, %p49
    %p51 = scmp.ne.s32.totalorder %s40, %s41
    %p52 = scmp.eq.s32.totalorder %s32, 0
    %p53 = por %p51, %p52
    %p54 = scmp.ne.s32.totalorder %s40, %s41
    %p55 = scmp.eq.s32.totalorder %s33, 1
    %p56 = por %p54, %p55
    %p58 = scmp.ne.s32.totalorder %s41, %s57
    %p59 = scmp.eq.s32.totalorder %s33, 0
    %p60 = por %p58, %p59
    %s61 = ssub.s32 %s27, %s34
    %p62 = scmp.eq.s32.totalorder %s61, 0
    %s64 = sadd.s32 %s63, 1
    %s65 = scalar_select %p62, %s63, %s64
    %p68 = pneg %p62
    %p69 = scmp.eq.s32.totalorder %s27, 1
    %p70 = por %p68, %p69
    %p71 = scmp.ne.s32.totalorder %s63, %s66
    %p72 = scmp.eq.s32.totalorder %s27, 0
    %p73 = por %p71, %p72
    %p74 = scmp.ne.s32.totalorder %s63, %s66
    %p75 = scmp.eq.s32.totalorder %s32, 1
    %p76 = por %p74, %p75
    %p77 = scmp.ne.s32.totalorder %s66, %s67
    %p78 = scmp.eq.s32.totalorder %s32, 0
    %p79 = por %p77, %p78
    %p80 = scmp.ne.s32.totalorder %s66, %s67
    %p81 = scmp.eq.s32.totalorder %s33, 1
    %p82 = por %p80, %p81
    %p84 = scmp.ne.s32.totalorder %s67, %s83
    %p85 = scmp.eq.s32.totalorder %s33, 0
    %p86 = por %p84, %p85
    %s87 = ssub.s32 %s27, %s34
    %p88 = scmp.eq.s32.totalorder %s87, 0
    %s90 = sadd.s32 %s89, 1
    %s91 = scalar_select %p88, %s89, %s90
    %p94 = pneg %p88
    %p95 = scmp.eq.s32.totalorder %s27, 1
    %p96 = por %p94, %p95
    %p97 = scmp.ne.s32.totalorder %s89, %s92
    %p98 = scmp.eq.s32.totalorder %s27, 0
    %p99 = por %p97, %p98
    %p100 = scmp.ne.s32.totalorder %s89, %s92
    %p101 = scmp.eq.s32.totalorder %s32, 1
    %p102 = por %p100, %p101
    %p103 = scmp.ne.s32.totalorder %s92, %s93
    %p104 = scmp.eq.s32.totalorder %s32, 0
    %p105 = por %p103, %p104
    %p106 = scmp.ne.s32.totalorder %s92, %s93
    %p107 = scmp.eq.s32.totalorder %s33, 1
    %p108 = por %p106, %p107
    %p110 = scmp.ne.s32.totalorder %s93, %s109
    %p111 = scmp.eq.s32.totalorder %s33, 0
    %p112 = por %p110, %p111
    %s114 = sadd.s32 %s113, 1
    %p117 = scmp.eq.s32.totalorder %s27, 1
    %p118 = scmp.ne.s32.totalorder %s113, %s115
    %p119 = scmp.eq.s32.totalorder %s27, 0
    %p120 = por %p118, %p119
    %p121 = scmp.ne.s32.totalorder %s113, %s115
    %p122 = scmp.eq.s32.totalorder %s32, 1
    %p123 = por %p121, %p122
    %p124 = scmp.ne.s32.totalorder %s115, %s116
    %p125 = scmp.eq.s32.totalorder %s32, 0
    %p126 = por %p124, %p125
    %p127 = scmp.ne.s32.totalorder %s115, %s116
    %p128 = scmp.eq.s32.totalorder %s33, 1
    %p129 = por %p127, %p128
    %p131 = scmp.ne.s32.totalorder %s116, %s130
    %p132 = scmp.eq.s32.totalorder %s33, 0
    %p133 = por %p131, %p132
    %s135 = sadd.s32 %s134, 1
    %p138 = scmp.eq.s32.totalorder %s27, 1
    %p139 = scmp.ne.s32.totalorder %s134, %s136
    %p140 = scmp.eq.s32.totalorder %s27, 0
    %p141 = por %p139, %p140
    %p142 = scmp.ne.s32.totalorder %s134, %s136
    %p143 = scmp.eq.s32.totalorder %s32, 1
    %p144 = por %p142, %p143
    %p145 = scmp.ne.s32.totalorder %s136, %s137
    %p146 = scmp.eq.s32.totalorder %s32, 0
    %p147 = por %p145, %p146
    %p148 = scmp.ne.s32.totalorder %s136, %s137
    %p149 = scmp.eq.s32.totalorder %s33, 1
    %p150 = por %p148, %p149
    %p152 = scmp.ne.s32.totalorder %s137, %s151
    %p153 = scmp.eq.s32.totalorder %s33, 0
    %p154 = por %p152, %p153
    %s156 = sadd.s32 %s155, 1
    %p159 = scmp.eq.s32.totalorder %s27, 1
    %p160 = scmp.ne.s32.totalorder %s155, %s157
    %p161 = scmp.eq.s32.totalorder %s27, 0
    %p162 = por %p160, %p161
    %p163 = scmp.ne.s32.totalorder %s155, %s157
    %p164 = scmp.eq.s32.totalorder %s32, 1
    %p165 = por %p163, %p164
    %p166 = scmp.ne.s32.totalorder %s157, %s158
    %p167 = scmp.eq.s32.totalorder %s32, 0
    %p168 = por %p166, %p167
    %p169 = scmp.ne.s32.totalorder %s157, %s158
    %p170 = scmp.eq.s32.totalorder %s33, 1
    %p171 = por %p169, %p170
    %p173 = scmp.ne.s32.totalorder %s158, %s172
    %p174 = scmp.eq.s32.totalorder %s33, 0
    %p175 = por %p173, %p174
    %s177 = sadd.s32 %s176, 1
    %p180 = scmp.eq.s32.totalorder %s27, 1
    %p181 = scmp.ne.s32.totalorder %s176, %s178
    %p182 = scmp.eq.s32.totalorder %s27, 0
    %p183 = por %p181, %p182
    %p184 = scmp.ne.s32.totalorder %s176, %s178
    %p185 = scmp.eq.s32.totalorder %s32, 1
    %p186 = por %p184, %p185
    %p187 = scmp.ne.s32.totalorder %s178, %s179
    %p188 = scmp.eq.s32.totalorder %s32, 0
    %p189 = por %p187, %p188
    %p190 = scmp.ne.s32.totalorder %s178, %s179
    %p191 = scmp.eq.s32.totalorder %s33, 1
    %p192 = por %p190, %p191
    %p194 = scmp.ne.s32.totalorder %s179, %s193
    %p195 = scmp.eq.s32.totalorder %s33, 0
    %p196 = por %p194, %p195
    %s198 = sadd.s32 %s197, 1
    %p201 = scmp.eq.s32.totalorder %s27, 1
    %p202 = scmp.ne.s32.totalorder %s197, %s199
    %p203 = scmp.eq.s32.totalorder %s27, 0
    %p204 = por %p202, %p203
    %p205 = scmp.ne.s32.totalorder %s197, %s199
    %p206 = scmp.eq.s32.totalorder %s32, 1
    %p207 = por %p205, %p206
    %p208 = scmp.ne.s32.totalorder %s199, %s200
    %p209 = scmp.eq.s32.totalorder %s32, 0
    %p210 = por %p208, %p209
    %p211 = scmp.ne.s32.totalorder %s199, %s200
    %p212 = scmp.eq.s32.totalorder %s33, 1
    %p213 = por %p211, %p212
    %p215 = scmp.ne.s32.totalorder %s200, %s214
    %p216 = scmp.eq.s32.totalorder %s33, 0
    %p217 = por %p215, %p216
    %s219 = sadd.s32 %s218, 1
    %p222 = scmp.eq.s32.totalorder %s27, 1
    %p223 = scmp.ne.s32.totalorder %s218, %s220
    %p224 = scmp.eq.s32.totalorder %s27, 0
    %p225 = por %p223, %p224
    %p226 = scmp.ne.s32.totalorder %s218, %s220
    %p227 = scmp.eq.s32.totalorder %s32, 1
    %p228 = por %p226, %p227
    %p229 = scmp.ne.s32.totalorder %s220, %s221
    %p230 = scmp.eq.s32.totalorder %s32, 0
    %p231 = por %p229, %p230
    %p232 = scmp.ne.s32.totalorder %s220, %s221
    %p233 = scmp.eq.s32.totalorder %s33, 1
    %p234 = por %p232, %p233
    %p236 = scmp.ne.s32.totalorder %s221, %s235
    %p237 = scmp.eq.s32.totalorder %s33, 0
    %p238 = por %p236, %p237
    %s240 = sadd.s32 %s239, 1
    %p243 = scmp.eq.s32.totalorder %s27, 1
    %p244 = scmp.ne.s32.totalorder %s239, %s241
    %p245 = scmp.eq.s32.totalorder %s27, 0
    %p246 = por %p244, %p245
    %p247 = scmp.ne.s32.totalorder %s239, %s241
    %p248 = scmp.eq.s32.totalorder %s32, 1
    %p249 = por %p247, %p248
    %p250 = scmp.ne.s32.totalorder %s241, %s242
    %p251 = scmp.eq.s32.totalorder %s32, 0
    %p252 = por %p250, %p251
    %p253 = scmp.ne.s32.totalorder %s241, %s242
    %p254 = scmp.eq.s32.totalorder %s33, 1
    %p255 = por %p253, %p254
    %p257 = scmp.ne.s32.totalorder %s242, %s256
    %p258 = scmp.eq.s32.totalorder %s33, 0
    %p259 = por %p257, %p258
    %s261 = sadd.s32 %s260, 1
    %p264 = scmp.eq.s32.totalorder %s27, 1
    %p265 = scmp.ne.s32.totalorder %s260, %s262
    %p266 = scmp.eq.s32.totalorder %s27, 0
    %p267 = por %p265, %p266
    %p268 = scmp.ne.s32.totalorder %s260, %s262
    %p269 = scmp.eq.s32.totalorder %s32, 1
    %p270 = por %p268, %p269
    %p271 = scmp.ne.s32.totalorder %s262, %s263
    %p272 = scmp.eq.s32.totalorder %s32, 0
    %p273 = por %p271, %p272
    %p274 = scmp.ne.s32.totalorder %s262, %s263
    %p275 = scmp.eq.s32.totalorder %s33, 1
    %p276 = por %p274, %p275
    %p278 = scmp.ne.s32.totalorder %s263, %s277
    %p279 = scmp.eq.s32.totalorder %s33, 0
    %p280 = por %p278, %p279
    %s282 = sadd.s32 %s281, 1
    %p285 = scmp.eq.s32.totalorder %s27, 1
    %p286 = scmp.ne.s32.totalorder %s281, %s283
    %p287 = scmp.eq.s32.totalorder %s27, 0
    %p288 = por %p286, %p287
    %p289 = scmp.ne.s32.totalorder %s281, %s283
    %p290 = scmp.eq.s32.totalorder %s32, 1
    %p291 = por %p289, %p290
    %p292 = scmp.ne.s32.totalorder %s283, %s284
    %p293 = scmp.eq.s32.totalorder %s32, 0
    %p294 = por %p292, %p293
    %p295 = scmp.ne.s32.totalorder %s283, %s284
    %p296 = scmp.eq.s32.totalorder %s33, 1
    %p297 = por %p295, %p296
    %p299 = scmp.ne.s32.totalorder %s284, %s298
    %p300 = scmp.eq.s32.totalorder %s33, 0
    %p301 = por %p299, %p300
    %s303 = sadd.s32 %s302, 1
    %p306 = scmp.eq.s32.totalorder %s27, 1
    %p307 = scmp.ne.s32.totalorder %s302, %s304
    %p308 = scmp.eq.s32.totalorder %s27, 0
    %p309 = por %p307, %p308
    %p310 = scmp.ne.s32.totalorder %s302, %s304
    %p311 = scmp.eq.s32.totalorder %s32, 1
    %p312 = por %p310, %p311
    %p313 = scmp.ne.s32.totalorder %s304, %s305
    %p314 = scmp.eq.s32.totalorder %s32, 0
    %p315 = por %p313, %p314
    %p316 = scmp.ne.s32.totalorder %s304, %s305
    %p317 = scmp.eq.s32.totalorder %s33, 1
    %p318 = por %p316, %p317
    %p320 = scmp.ne.s32.totalorder %s305, %s319
    %p321 = scmp.eq.s32.totalorder %s33, 0
    %p322 = por %p320, %p321
    %s324 = sadd.s32 %s323, 1
    %p327 = scmp.eq.s32.totalorder %s27, 1
    %p328 = scmp.ne.s32.totalorder %s323, %s325
    %p329 = scmp.eq.s32.totalorder %s27, 0
    %p330 = por %p328, %p329
    %p331 = scmp.ne.s32.totalorder %s323, %s325
    %p332 = scmp.eq.s32.totalorder %s32, 1
    %p333 = por %p331, %p332
    %p334 = scmp.ne.s32.totalorder %s325, %s326
    %p335 = scmp.eq.s32.totalorder %s32, 0
    %p336 = por %p334, %p335
    %p337 = scmp.ne.s32.totalorder %s325, %s326
    %p338 = scmp.eq.s32.totalorder %s33, 1
    %p339 = por %p337, %p338
    %p341 = scmp.ne.s32.totalorder %s326, %s340
    %p342 = scmp.eq.s32.totalorder %s33, 0
    %p343 = por %p341, %p342
    %s345 = sadd.s32 %s344, 1
    %p348 = scmp.eq.s32.totalorder %s27, 1
    %p349 = scmp.ne.s32.totalorder %s344, %s346
    %p350 = scmp.eq.s32.totalorder %s27, 0
    %p351 = por %p349, %p350
    %p352 = scmp.ne.s32.totalorder %s344, %s346
    %p353 = scmp.eq.s32.totalorder %s32, 1
    %p354 = por %p352, %p353
    %p355 = scmp.ne.s32.totalorder %s346, %s347
    %p356 = scmp.eq.s32.totalorder %s32, 0
    %p357 = por %p355, %p356
    %p358 = scmp.ne.s32.totalorder %s346, %s347
    %p359 = scmp.eq.s32.totalorder %s33, 1
    %p360 = por %p358, %p359
    %p362 = scmp.ne.s32.totalorder %s347, %s361
    %p363 = scmp.eq.s32.totalorder %s33, 0
    %p364 = por %p362, %p363
    %s366 = sadd.s32 %s365, 1
    %p369 = scmp.eq.s32.totalorder %s27, 1
    %p370 = scmp.ne.s32.totalorder %s365, %s367
    %p371 = scmp.eq.s32.totalorder %s27, 0
    %p372 = por %p370, %p371
    %p373 = scmp.ne.s32.totalorder %s365, %s367
    %p374 = scmp.eq.s32.totalorder %s32, 1
    %p375 = por %p373, %p374
    %p376 = scmp.ne.s32.totalorder %s367, %s368
    %p377 = scmp.eq.s32.totalorder %s32, 0
    %p378 = por %p376, %p377
    %p379 = scmp.ne.s32.totalorder %s367, %s368
    %p380 = scmp.eq.s32.totalorder %s33, 1
    %p381 = por %p379, %p380
    %p383 = scmp.ne.s32.totalorder %s368, %s382
    %p384 = scmp.eq.s32.totalorder %s33, 0
    %p385 = por %p383, %p384
    %s387 = sadd.s32 %s386, 1
    %p390 = scmp.eq.s32.totalorder %s27, 1
    %p391 = scmp.ne.s32.totalorder %s386, %s388
    %p392 = scmp.eq.s32.totalorder %s27, 0
    %p393 = por %p391, %p392
    %p394 = scmp.ne.s32.totalorder %s386, %s388
    %p395 = scmp.eq.s32.totalorder %s32, 1
    %p396 = por %p394, %p395
    %p397 = scmp.ne.s32.totalorder %s388, %s389
    %p398 = scmp.eq.s32.totalorder %s32, 0
    %p399 = por %p397, %p398
    %p400 = scmp.ne.s32.totalorder %s388, %s389
    %p401 = scmp.eq.s32.totalorder %s33, 1
    %p402 = por %p400, %p401
    %p404 = scmp.ne.s32.totalorder %s389, %s403
    %p405 = scmp.eq.s32.totalorder %s33, 0
    %p406 = por %p404, %p405
    %s408 = sadd.s32 %s407, 1
    %p411 = scmp.eq.s32.totalorder %s27, 1
    %p412 = scmp.ne.s32.totalorder %s407, %s409
    %p413 = scmp.eq.s32.totalorder %s27, 0
    %p414 = por %p412, %p413
    %p415 = scmp.ne.s32.totalorder %s407, %s409
    %p416 = scmp.eq.s32.totalorder %s32, 1
    %p417 = por %p415, %p416
    %p418 = scmp.ne.s32.totalorder %s409, %s410
    %p419 = scmp.eq.s32.totalorder %s32, 0
    %p420 = por %p418, %p419
    %p421 = scmp.ne.s32.totalorder %s409, %s410
    %p422 = scmp.eq.s32.totalorder %s33, 1
    %p423 = por %p421, %p422
    %p425 = scmp.ne.s32.totalorder %s410, %s424
    %p426 = scmp.eq.s32.totalorder %s33, 0
    %p427 = por %p425, %p426
    %s429 = sadd.s32 %s428, 1
    %p432 = scmp.eq.s32.totalorder %s27, 1
    %p433 = scmp.ne.s32.totalorder %s428, %s430
    %p434 = scmp.eq.s32.totalorder %s27, 0
    %p435 = por %p433, %p434
    %p436 = scmp.ne.s32.totalorder %s428, %s430
    %p437 = scmp.eq.s32.totalorder %s32, 1
    %p438 = por %p436, %p437
    %p439 = scmp.ne.s32.totalorder %s430, %s431
    %p440 = scmp.eq.s32.totalorder %s32, 0
    %p441 = por %p439, %p440
    %p442 = scmp.ne.s32.totalorder %s430, %s431
    %p443 = scmp.eq.s32.totalorder %s33, 1
    %p444 = por %p442, %p443
    %p446 = scmp.ne.s32.totalorder %s431, %s445
    %p447 = scmp.eq.s32.totalorder %s33, 0
    %p448 = por %p446, %p447
    %s449 = ssub.s32 %s27, %s34
    %p450 = scmp.eq.s32.totalorder %s449, 0
    %s452 = sadd.s32 %s451, 1
    %s453 = scalar_select %p450, %s451, %s452
    %p456 = pneg %p450
    %p457 = scmp.eq.s32.totalorder %s27, 1
    %p458 = por %p456, %p457
    %p459 = scmp.ne.s32.totalorder %s451, %s454
    %p460 = scmp.eq.s32.totalorder %s27, 0
    %p461 = por %p459, %p460
    %p462 = scmp.ne.s32.totalorder %s451, %s454
    %p463 = scmp.eq.s32.totalorder %s32, 1
    %p464 = por %p462, %p463
    %p465 = scmp.ne.s32.totalorder %s454, %s455
    %p466 = scmp.eq.s32.totalorder %s32, 0
    %p467 = por %p465, %p466
    %p468 = scmp.ne.s32.totalorder %s454, %s455
    %p469 = scmp.eq.s32.totalorder %s33, 1
    %p470 = por %p468, %p469
    %p472 = scmp.ne.s32.totalorder %s455, %s471
    %p473 = scmp.eq.s32.totalorder %s33, 0
    %p474 = por %p472, %p473
    %p475 = scmp.le.s32.totalorder 1, %s27
    %p476 = scmp.lt.s32.totalorder %s27, 3
    %p477 = pnand %p475, %p476
    %p478 = pneg %p477
    // Predicated region
    $region9: #{kamome_forward.1} parent=5 // pred_check
      _
    $region10: #{kamome_forward.1} parent=5 // pred_check_branch
      %480 = sbr.rel (%p477) target = $region12
    $region11: #{kamome_forward.1} parent=5 // pred_region
      %s481 = ssub.s32 %s27, 1
      // Predicated region
      $region13: #{kamome_forward.1} parent=11 // pred_check
        %p482 = pneg %p126
      $region14: #{kamome_forward.1} parent=11 // pred_check_branch
        %484 = sbr.rel (%p482) target = $region16
      $region15: #{kamome_forward.1} parent=11 // pred_region
        _
      $region16: #{kamome_forward.1} parent=11 // pred_fallthru
        _
      // Predicated region
      $region17: #{kamome_forward.1} parent=11 // pred_check
        %p485 = pneg %p147
      $region18: #{kamome_forward.1} parent=11 // pred_check_branch
        %487 = sbr.rel (%p485) target = $region20
      $region19: #{kamome_forward.1} parent=11 // pred_region
        _
      $region20: #{kamome_forward.1} parent=11 // pred_fallthru
        _
      // Predicated region
      $region21: #{kamome_forward.1} parent=11 // pred_check
        %p488 = pneg %p168
      $region22: #{kamome_forward.1} parent=11 // pred_check_branch
        %490 = sbr.rel (%p488) target = $region24
      $region23: #{kamome_forward.1} parent=11 // pred_region
        _
      $region24: #{kamome_forward.1} parent=11 // pred_fallthru
        _
      // Predicated region
      $region25: #{kamome_forward.1} parent=11 // pred_check
        %p491 = pneg %p189
      $region26: #{kamome_forward.1} parent=11 // pred_check_branch
        %493 = sbr.rel (%p491) target = $region28
      $region27: #{kamome_forward.1} parent=11 // pred_region
        _
      $region28: #{kamome_forward.1} parent=11 // pred_fallthru
        _
      // Predicated region
      $region29: #{kamome_forward.1} parent=11 // pred_check
        %p494 = pneg %p210
      $region30: #{kamome_forward.1} parent=11 // pred_check_branch
        %496 = sbr.rel (%p494) target = $region32
      $region31: #{kamome_forward.1} parent=11 // pred_region
        _
      $region32: #{kamome_forward.1} parent=11 // pred_fallthru
        _
      // Predicated region
      $region33: #{kamome_forward.1} parent=11 // pred_check
        %p497 = pneg %p231
      $region34: #{kamome_forward.1} parent=11 // pred_check_branch
        %499 = sbr.rel (%p497) target = $region36
      $region35: #{kamome_forward.1} parent=11 // pred_region
        _
      $region36: #{kamome_forward.1} parent=11 // pred_fallthru
        _
      // Predicated region
      $region37: #{kamome_forward.1} parent=11 // pred_check
        %p500 = pneg %p252
      $region38: #{kamome_forward.1} parent=11 // pred_check_branch
        %502 = sbr.rel (%p500) target = $region40
      $region39: #{kamome_forward.1} parent=11 // pred_region
        _
      $region40: #{kamome_forward.1} parent=11 // pred_fallthru
        _
      // Predicated region
      $region41: #{kamome_forward.1} parent=11 // pred_check
        %p503 = pneg %p273
      $region42: #{kamome_forward.1} parent=11 // pred_check_branch
        %505 = sbr.rel (%p503) target = $region44
      $region43: #{kamome_forward.1} parent=11 // pred_region
        _
      $region44: #{kamome_forward.1} parent=11 // pred_fallthru
        _
      // Predicated region
      $region45: #{kamome_forward.1} parent=11 // pred_check
        %p506 = pneg %p294
      $region46: #{kamome_forward.1} parent=11 // pred_check_branch
        %508 = sbr.rel (%p506) target = $region48
      $region47: #{kamome_forward.1} parent=11 // pred_region
        _
      $region48: #{kamome_forward.1} parent=11 // pred_fallthru
        _
      // Predicated region
      $region49: #{kamome_forward.1} parent=11 // pred_check
        %p509 = pneg %p315
      $region50: #{kamome_forward.1} parent=11 // pred_check_branch
        %511 = sbr.rel (%p509) target = $region52
      $region51: #{kamome_forward.1} parent=11 // pred_region
        _
      $region52: #{kamome_forward.1} parent=11 // pred_fallthru
        _
      // Predicated region
      $region53: #{kamome_forward.1} parent=11 // pred_check
        %p512 = pneg %p336
      $region54: #{kamome_forward.1} parent=11 // pred_check_branch
        %514 = sbr.rel (%p512) target = $region56
      $region55: #{kamome_forward.1} parent=11 // pred_region
        _
      $region56: #{kamome_forward.1} parent=11 // pred_fallthru
        _
      // Predicated region
      $region57: #{kamome_forward.1} parent=11 // pred_check
        %p515 = pneg %p357
      $region58: #{kamome_forward.1} parent=11 // pred_check_branch
        %517 = sbr.rel (%p515) target = $region60
      $region59: #{kamome_forward.1} parent=11 // pred_region
        _
      $region60: #{kamome_forward.1} parent=11 // pred_fallthru
        _
      // Predicated region
      $region61: #{kamome_forward.1} parent=11 // pred_check
        %p518 = pneg %p378
      $region62: #{kamome_forward.1} parent=11 // pred_check_branch
        %520 = sbr.rel (%p518) target = $region64
      $region63: #{kamome_forward.1} parent=11 // pred_region
        _
      $region64: #{kamome_forward.1} parent=11 // pred_fallthru
        _
      // Predicated region
      $region65: #{kamome_forward.1} parent=11 // pred_check
        %p521 = pneg %p399
      $region66: #{kamome_forward.1} parent=11 // pred_check_branch
        %523 = sbr.rel (%p521) target = $region68
      $region67: #{kamome_forward.1} parent=11 // pred_region
        _
      $region68: #{kamome_forward.1} parent=11 // pred_fallthru
        _
      // Predicated region
      $region69: #{kamome_forward.1} parent=11 // pred_check
        %p524 = pneg %p420
      $region70: #{kamome_forward.1} parent=11 // pred_check_branch
        %526 = sbr.rel (%p524) target = $region72
      $region71: #{kamome_forward.1} parent=11 // pred_region
        _
      $region72: #{kamome_forward.1} parent=11 // pred_fallthru
        _
      // Predicated region
      $region73: #{kamome_forward.1} parent=11 // pred_check
        %p527 = pneg %p441
      $region74: #{kamome_forward.1} parent=11 // pred_check_branch
        %529 = sbr.rel (%p527) target = $region76
      $region75: #{kamome_forward.1} parent=11 // pred_region
        _
      $region76: #{kamome_forward.1} parent=11 // pred_fallthru
        _
    $region12: #{kamome_forward.1} parent=5 // pred_fallthru
      _
    %p530 = scmp.lt.s32.totalorder %s27, 2
    // Predicated region
    $region77: #{kamome_forward.1} parent=5 // pred_check
      %p531 = pneg %p530
    $region78: #{kamome_forward.1} parent=5 // pred_check_branch
      %533 = sbr.rel (%p531) target = $region80
    $region79: #{kamome_forward.1} parent=5 // pred_region
      // Predicated region
      $region81: #{kamome_forward.1} parent=79 // pred_check
        %p534 = pneg %p47
      $region82: #{kamome_forward.1} parent=79 // pred_check_branch
        %536 = sbr.rel (%p534) target = $region84
      $region83: #{kamome_forward.1} parent=79 // pred_region
        %s537 = smul.u32 2, %s27
        %p538 = scmp.lt.s32.totalorder %s537, 3
        %s539 = scalar_select %p538, %s537, 3
        %s540 = smul.addr %s539, 8
        %s541 = scalar_lea.vmem %s0, %s540
        %s542 = smul.u32 2, %s27
      $region84: #{kamome_forward.1} parent=79 // pred_fallthru
        _
      // Predicated region
      $region85: #{kamome_forward.1} parent=79 // pred_check
        %p543 = pneg %p73
      $region86: #{kamome_forward.1} parent=79 // pred_check_branch
        %545 = sbr.rel (%p543) target = $region88
      $region87: #{kamome_forward.1} parent=79 // pred_region
        %s546 = smul.u32 2, %s27
        %p547 = scmp.lt.s32.totalorder %s546, 3
        %s548 = scalar_select %p547, %s546, 3
        %s549 = smul.addr %s548, 8
        %s550 = scalar_lea.vmem %s1, %s549
        %s551 = smul.u32 2, %s27
      $region88: #{kamome_forward.1} parent=79 // pred_fallthru
        _
      // Predicated region
      $region89: #{kamome_forward.1} parent=79 // pred_check
        %p552 = pneg %p99
      $region90: #{kamome_forward.1} parent=79 // pred_check_branch
        %554 = sbr.rel (%p552) target = $region92
      $region91: #{kamome_forward.1} parent=79 // pred_region
        %p555 = scmp.lt.s32.totalorder %s27, 1
        %s556 = scalar_select %p555, %s27, 1
        %s557 = smul.addr %s556, 16
        %s558 = smul.addr %s557, 8
        %s559 = scalar_lea.vmem %s2, %s558
      $region92: #{kamome_forward.1} parent=79 // pred_fallthru
        _
    $region80: #{kamome_forward.1} parent=5 // pred_fallthru
      _
    %p560 = scmp.le.s32.totalorder 1, %s27
    %p561 = scmp.lt.s32.totalorder %s27, 3
    %p562 = pnand %p560, %p561
    %p563 = pneg %p562
    // Predicated region
    $region93: #{kamome_forward.1} parent=5 // pred_check
      _
    $region94: #{kamome_forward.1} parent=5 // pred_check_branch
      %565 = sbr.rel (%p562) target = $region96
    $region95: #{kamome_forward.1} parent=5 // pred_region
      %s566 = ssub.s32 %s27, 1
      %s567 = smul.u32 2, %s32
      %p568 = scmp.lt.s32.totalorder %s567, 3
      %s569 = scalar_select %p568, %s567, 3
      %s570 = smul.addr %s569, 8
      %s571 = scalar_lea.vmem %s0, %s570
      %p572 = pneg %p53
      %p573 = pneg %p50
      %s574 = smul.u32 2, %s32
      %p575 = scmp.lt.s32.totalorder %s574, 3
      %s576 = scalar_select %p575, %s574, 3
      %s577 = smul.addr %s576, 8
      %s578 = scalar_lea.vmem %s1, %s577
      %p579 = pneg %p79
      %p580 = pneg %p76
      %p581 = scmp.lt.s32.totalorder %s32, 1
      %s582 = scalar_select %p581, %s32, 1
      %s583 = smul.addr %s582, 16
      %s584 = smul.addr %s583, 8
      %s585 = scalar_lea.vmem %s2, %s584
      %p586 = pneg %p105
      %p587 = pneg %p102
      %p588 = pneg %p126
      %p589 = pneg %p123
      %p590 = pneg %p147
      %p591 = pneg %p144
      %p592 = pneg %p168
      %p593 = pneg %p165
      %p594 = pneg %p189
      %p595 = pneg %p186
      %p596 = pneg %p210
      %p597 = pneg %p207
      %p598 = pneg %p231
      %p599 = pneg %p228
      %p600 = pneg %p252
      %p601 = pneg %p249
      %p602 = pneg %p273
      %p603 = pneg %p270
      %p604 = pneg %p294
      %p605 = pneg %p291
      %p606 = pneg %p315
      %p607 = pneg %p312
      %p608 = pneg %p336
      %p609 = pneg %p333
      %p610 = pneg %p357
      %p611 = pneg %p354
      %p612 = pneg %p378
      %p613 = pneg %p375
      %p614 = pneg %p399
      %p615 = pneg %p396
      %p616 = pneg %p420
      %p617 = pneg %p417
      %p618 = pneg %p441
      %p619 = pneg %p438
      %p620 = pneg %p467
      %p621 = pneg %p464
      %p622 = scmp.lt.s32.totalorder %s32, 1
      %s623 = scalar_select %p622, %s32, 1
      %s624 = scalar_lea.vmem %s19, %s623
      %s625 = smul.u32 2, %s32
      %p626 = scmp.lt.s32.totalorder %s625, 3
      %s627 = scalar_select %p626, %s625, 3
      %s628 = smul.addr %s627, 8
      %s629 = scalar_lea.vmem %s0, %s628
      %s630 = smul.u32 2, %s32
      %s631 = smul.u32 2, %s32
      %p632 = scmp.lt.s32.totalorder %s631, 3
      %s633 = scalar_select %p632, %s631, 3
      %s634 = smul.addr %s633, 8
      %s635 = scalar_lea.vmem %s1, %s634
      %s636 = smul.u32 2, %s32
      %p637 = scmp.lt.s32.totalorder %s32, 1
      %s638 = scalar_select %p637, %s32, 1
      %s639 = smul.addr %s638, 16
      %s640 = smul.addr %s639, 8
      %s641 = scalar_lea.vmem %s2, %s640
      %p642 = scmp.lt.s32.totalorder %s32, 1
      %s643 = scalar_select %p642, %s32, 1
      %s644 = scalar_lea.vmem %s19, %s643
      %v645 = vld [vmem:[%s629] sm:$0xff]
      %v646 = vld [vmem:[%s629 + $0x8] sm:$0xff]
      %v647 = vld [vmem:[%s635] sm:$0xff]
      %v648 = vld [vmem:[%s635 + $0x8] sm:$0xff]
      %v649 = vld [vmem:[%s641] sm:$0xff]
      %v650 = vld [vmem:[%s641 + $0x8] sm:$0xff]
      %v651 = vld [vmem:[%s641 + $0x10] sm:$0xff]
      %v652 = vld [vmem:[%s641 + $0x18] sm:$0xff]
      %v653 = vld [vmem:[%s641 + $0x20] sm:$0xff]
      %v654 = vld [vmem:[%s641 + $0x28] sm:$0xff]
      %v655 = vld [vmem:[%s641 + $0x30] sm:$0xff]
      %v656 = vld [vmem:[%s641 + $0x38] sm:$0xff]
      %v657 = vld [vmem:[%s641 + $0x40] sm:$0xff]
      %v658 = vld [vmem:[%s641 + $0x48] sm:$0xff]
      %v659 = vld [vmem:[%s641 + $0x50] sm:$0xff]
      %v660 = vld [vmem:[%s641 + $0x58] sm:$0xff]
      %v661 = vld [vmem:[%s641 + $0x60] sm:$0xff]
      %v662 = vld [vmem:[%s641 + $0x68] sm:$0xff]
      %v663 = vld [vmem:[%s641 + $0x70] sm:$0xff]
      %v664 = vld [vmem:[%s641 + $0x78] sm:$0xff]
      %v665 = vld [vmem:[%s3] sm:$0xff]
      %v666 = vld [vmem:[%s3 + $0x8] sm:$0xff]
      %v667 = vld [vmem:[%s3 + $0x10] sm:$0xff]
      %v668 = vld [vmem:[%s3 + $0x18] sm:$0xff]
      %v669 = vld [vmem:[%s3 + $0x20] sm:$0xff]
      %v670 = vld [vmem:[%s3 + $0x28] sm:$0xff]
      %v671 = vld [vmem:[%s3 + $0x30] sm:$0xff]
      %v672 = vld [vmem:[%s3 + $0x38] sm:$0xff]
      %vm673 = vcmask 523264
      %v675 = vsel %vm673, %v645, 0
      %v678 = vsel %vm673, %v646, 0
      %680 = vmatprep.subr.mxu0 0.0
      %681 = vmatpush1.msra.mxu0 %v665
      %682 = vmatprep.subr.mxu0 0.0
      %683 = vmatpush1.msra.mxu0 %v666
      %684 = vmatprep.subr.mxu0 0.0
      %685 = vmatpush1.msra.mxu0 %v667
      %686 = vmatprep.subr.mxu0 0.0
      %687 = vmatpush1.msra.mxu0 %v668
      %688 = vmatprep.subr.mxu0 0.0
      %689 = vmatpush1.msra.mxu0 %v669
      %690 = vmatprep.subr.mxu0 0.0
      %691 = vmatpush1.msra.mxu0 %v670
      %692 = vmatprep.subr.mxu0 0.0
      %693 = vmatpush1.msra.mxu0 %v671
      %694 = vmatprep.subr.mxu0 0.0
      %695 = vmatpush1.msra.mxu0 %v672
      %696 = vmatprep.subr.mxu0 0.0
      %697 = vmatpush1.msra.mxu0 0.0
      %698 = vmatprep.subr.mxu0 0.0
      %699 = vmatpush1.msra.mxu0 0.0
      %700 = vmatprep.subr.mxu0 0.0
      %701 = vmatpush1.msra.mxu0 0.0
      %702 = vmatprep.subr.mxu0 0.0
      %703 = vmatpush1.msra.mxu0 0.0
      %704 = vmatprep.subr.mxu0 0.0
      %705 = vmatpush1.msra.mxu0 0.0
      %706 = vmatprep.subr.mxu0 0.0
      %707 = vmatpush1.msra.mxu0 0.0
      %708 = vmatprep.subr.mxu0 0.0
      %709 = vmatpush1.msra.mxu0 0.0
      %710 = vmatprep.subr.mxu0 0.0
      %711 = vmatpush1.msra.mxu0 0.0
      %712 = vmatprep.subr.mxu0 0.0
      %713 = vmatpush1.msra.mxu0 0.0
      %714 = vmatprep.subr.mxu0 0.0
      %715 = vmatpush1.msra.mxu0 0.0
      %716 = vmatprep.subr.mxu0 0.0
      %717 = vmatpush1.msra.mxu0 0.0
      %718 = vmatprep.subr.mxu0 0.0
      %719 = vmatpush1.msra.mxu0 0.0
      %720 = vmatprep.subr.mxu0 0.0
      %721 = vmatpush1.msra.mxu0 0.0
      %722 = vmatprep.subr.mxu0 0.0
      %723 = vmatpush1.msra.mxu0 0.0
      %724 = vmatprep.subr.mxu0 0.0
      %725 = vmatpush1.msra.mxu0 0.0
      %726 = vmatprep.subr.mxu0 0.0
      %727 = vmatpush1.msra.mxu0 0.0
      %728 = vmatprep.subr.mxu0 0.0
      %729 = vmatpush1.msra.mxu0 0.0
      %730 = vmatprep.subr.mxu0 0.0
      %731 = vmatpush1.msra.mxu0 0.0
      %732 = vmatprep.subr.mxu0 0.0
      %733 = vmatpush1.msra.mxu0 0.0
      %734 = vmatprep.subr.mxu0 0.0
      %735 = vmatpush1.msra.mxu0 0.0
      %736 = vmatprep.subr.mxu0 0.0
      %737 = vmatpush1.msra.mxu0 0.0
      %738 = vmatprep.subr.mxu0 0.0
      %739 = vmatpush1.msra.mxu0 0.0
      %740 = vmatprep.subr.mxu0 0.0
      %741 = vmatpush1.msra.mxu0 0.0
      %742 = vmatprep.subr.mxu0 0.0
      %743 = vmatpush1.msra.mxu0 0.0
      %744 = vmatprep.mubr.f32.mxu0 0.0
      %745 = vmatmul.mubr.f32.gmra.mrb[0].mxu0 %v675
      %v746 = vpop.f32.mrb[0].mxu0
      %v747 = vadd.f32 0.0, %v746
      %v748 = vpop.f32.mrb[0].mxu0
      %749 = vmatprep.mubr.f32.mxu0 0.0
      %750 = vmatmul.mubr.f32.gmra.mrb[0].mxu0 %v678
      %v751 = vpop.f32.mrb[0].mxu0
      %v752 = vadd.f32 0.0, %v751
      %v753 = vpop.f32.mrb[0].mxu0
      %754 = vdwg.mxu0
      %v755 = vld [vmem:[%s4] sm:$0x1]
      %v756 = vld [vmem:[%s5] sm:$0x1]
      %vm757 = vcmask 261120
      %v758 = vsel %vm757, %v747, 0.0
      %759 = vadd.xlane.f32.xlu0 %v758
      %v760 = vpop.xlane.xlu0 %759
      %v761 = vsel %vm757, %v752, 0.0
      %762 = vadd.xlane.f32.xlu0 %v761
      %v763 = vpop.xlane.xlu0 %762
      %v764 = vrcp.pop 32.0
      %v765 = vmul.f32 %v760, %v764
      %v766 = vmul.f32 %v763, %v764
      %v767 = vsub.f32 %v747, %v765
      %v768 = vsub.f32 %v752, %v766
      %v769 = vmul.f32 %v767, %v767
      %v770 = vmul.f32 %v768, %v768
      %v771 = vsel %vm757, %v769, 0.0
      %772 = vadd.xlane.f32.xlu0 %v771
      %v773 = vpop.xlane.xlu0 %772
      %v774 = vsel %vm757, %v770, 0.0
      %775 = vadd.xlane.f32.xlu0 %v774
      %v776 = vpop.xlane.xlu0 %775
      %v777 = vmul.f32 %v773, %v764
      %v778 = vmul.f32 %v776, %v764
      %v779 = vadd.f32 %v777, 1e-05
      %v780 = vadd.f32 %v778, 1e-05
      %v781 = vrsqrt.pop %v779
      %v782 = vrsqrt.pop %v780
      %v783 = vmul.f32 %v767, %v781
      %v784 = vmul.f32 %v768, %v782
      %v786 = vlaneseq
      %v787 = vshrl.u32 %v786, 7
      %v788 = vsub.s32 0, %v787
      %v789 = vrot.slane %v755, %v788
      %v791 = vmul.f32 %v783, %v789
      %v792 = vmul.f32 %v784, %v789
      %v794 = vlaneseq
      %v795 = vshrl.u32 %v794, 7
      %v796 = vsub.s32 0, %v795
      %v797 = vrot.slane %v756, %v796
      %v799 = vadd.f32 %v791, %v797
      %v800 = vadd.f32 %v792, %v797
      %v801 = vld [vmem:[%s6] sm:$0xff]
      %v802 = vld [vmem:[%s6 + $0x8] sm:$0xff]
      %v803 = vld [vmem:[%s6 + $0x10] sm:$0xff]
      %v804 = vld [vmem:[%s6 + $0x18] sm:$0xff]
      %v806 = vsel %vm757, %v799, 0
      %v809 = vsel %vm757, %v800, 0
      %811 = vmatprep.subr.mxu0 0.0
      %812 = vmatpush1.msra.mxu0 %v801
      %813 = vmatprep.subr.mxu0 0.0
      %814 = vmatpush1.msra.mxu0 %v802
      %815 = vmatprep.subr.mxu0 0.0
      %816 = vmatpush1.msra.mxu0 %v803
      %817 = vmatprep.subr.mxu0 0.0
      %818 = vmatpush1.msra.mxu0 %v804
      %819 = vmatprep.subr.mxu0 0.0
      %820 = vmatpush1.msra.mxu0 0.0
      %821 = vmatprep.subr.mxu0 0.0
      %822 = vmatpush1.msra.mxu0 0.0
      %823 = vmatprep.subr.mxu0 0.0
      %824 = vmatpush1.msra.mxu0 0.0
      %825 = vmatprep.subr.mxu0 0.0
      %826 = vmatpush1.msra.mxu0 0.0
      %827 = vmatprep.subr.mxu0 0.0
      %828 = vmatpush1.msra.mxu0 0.0
      %829 = vmatprep.subr.mxu0 0.0
      %830 = vmatpush1.msra.mxu0 0.0
      %831 = vmatprep.subr.mxu0 0.0
      %832 = vmatpush1.msra.mxu0 0.0
      %833 = vmatprep.subr.mxu0 0.0
      %834 = vmatpush1.msra.mxu0 0.0
      %835 = vmatprep.subr.mxu0 0.0
      %836 = vmatpush1.msra.mxu0 0.0
      %837 = vmatprep.subr.mxu0 0.0
      %838 = vmatpush1.msra.mxu0 0.0
      %839 = vmatprep.subr.mxu0 0.0
      %840 = vmatpush1.msra.mxu0 0.0
      %841 = vmatprep.subr.mxu0 0.0
      %842 = vmatpush1.msra.mxu0 0.0
      %843 = vmatprep.subr.mxu0 0.0
      %844 = vmatpush1.msra.mxu0 0.0
      %845 = vmatprep.subr.mxu0 0.0
      %846 = vmatpush1.msra.mxu0 0.0
      %847 = vmatprep.subr.mxu0 0.0
      %848 = vmatpush1.msra.mxu0 0.0
      %849 = vmatprep.subr.mxu0 0.0
      %850 = vmatpush1.msra.mxu0 0.0
      %851 = vmatprep.subr.mxu0 0.0
      %852 = vmatpush1.msra.mxu0 0.0
      %853 = vmatprep.subr.mxu0 0.0
      %854 = vmatpush1.msra.mxu0 0.0
      %855 = vmatprep.subr.mxu0 0.0
      %856 = vmatpush1.msra.mxu0 0.0
      %857 = vmatprep.subr.mxu0 0.0
      %858 = vmatpush1.msra.mxu0 0.0
      %859 = vmatprep.subr.mxu0 0.0
      %860 = vmatpush1.msra.mxu0 0.0
      %861 = vmatprep.subr.mxu0 0.0
      %862 = vmatpush1.msra.mxu0 0.0
      %863 = vmatprep.subr.mxu0 0.0
      %864 = vmatpush1.msra.mxu0 0.0
      %865 = vmatprep.subr.mxu0 0.0
      %866 = vmatpush1.msra.mxu0 0.0
      %867 = vmatprep.subr.mxu0 0.0
      %868 = vmatpush1.msra.mxu0 0.0
      %869 = vmatprep.subr.mxu0 0.0
      %870 = vmatpush1.msra.mxu0 0.0
      %871 = vmatprep.subr.mxu0 0.0
      %872 = vmatpush1.msra.mxu0 0.0
      %873 = vmatprep.subr.mxu0 0.0
      %874 = vmatpush1.msra.mxu0 0.0
      %875 = vmatprep.mubr.f32.mxu0 0.0
      %876 = vmatmul.mubr.f32.gmra.mrb[0].mxu0 %v806
      %v877 = vpop.f32.mrb[0].mxu0
      %v878 = vadd.f32 0.0, %v877
      %v879 = vpop.f32.mrb[0].mxu0
      %880 = vmatprep.mubr.f32.mxu0 0.0
      %881 = vmatmul.mubr.f32.gmra.mrb[0].mxu0 %v809
      %v882 = vpop.f32.mrb[0].mxu0
      %v883 = vadd.f32 0.0, %v882
      %v884 = vpop.f32.mrb[0].mxu0
      %885 = vdwg.mxu0
      %888 = vrot.lane.b32.xlu0 %v878, 120
      %v889 = vpop.permute.xlu0 %888
      %890 = vrot.lane.b32.xlu0 %v883, 120
      %v891 = vpop.permute.xlu0 %890
      %892 = vrot.lane.b32.xlu0 %v878, 112
      %v893 = vpop.permute.xlu0 %892
      %894 = vrot.lane.b32.xlu0 %v883, 112
      %v895 = vpop.permute.xlu0 %894
      %896 = vrot.lane.b32.xlu0 %v878, 104
      %v897 = vpop.permute.xlu0 %896
      %898 = vrot.lane.b32.xlu0 %v883, 104
      %v899 = vpop.permute.xlu0 %898
      %900 = vrot.lane.b32.xlu0 %v878, 96
      %v901 = vpop.permute.xlu0 %900
      %902 = vrot.lane.b32.xlu0 %v883, 96
      %v903 = vpop.permute.xlu0 %902
      %vm904 = vcmask 64512
      %v905 = vsel %vm904, %v878, 0
      %v907 = vsel %vm904, %v883, 0
      %v909 = vsel %vm904, %v901, 0
      %v911 = vsel %vm904, %v903, 0
      %913 = vmatprep.subr.mxu0 0.0
      %914 = vmatpush1.xpose.msra.mxu0 %v909
      %915 = vmatprep.subr.mxu0 0.0
      %916 = vmatpush1.xpose.msra.mxu0 %v911
      %917 = vmatprep.subr.mxu0 0.0
      %918 = vmatpush1.xpose.msra.mxu0 0.0
      %919 = vmatprep.subr.mxu0 0.0
      %920 = vmatpush1.xpose.msra.mxu0 0.0
      %921 = vmatprep.subr.mxu0 0.0
      %922 = vmatpush1.xpose.msra.mxu0 0.0
      %923 = vmatprep.subr.mxu0 0.0
      %924 = vmatpush1.xpose.msra.mxu0 0.0
      %925 = vmatprep.subr.mxu0 0.0
      %926 = vmatpush1.xpose.msra.mxu0 0.0
      %927 = vmatprep.subr.mxu0 0.0
      %928 = vmatpush1.xpose.msra.mxu0 0.0
      %929 = vmatprep.subr.mxu0 0.0
      %930 = vmatpush1.xpose.msra.mxu0 0.0
      %931 = vmatprep.subr.mxu0 0.0
      %932 = vmatpush1.xpose.msra.mxu0 0.0
      %933 = vmatprep.subr.mxu0 0.0
      %934 = vmatpush1.xpose.msra.mxu0 0.0
      %935 = vmatprep.subr.mxu0 0.0
      %936 = vmatpush1.xpose.msra.mxu0 0.0
      %937 = vmatprep.subr.mxu0 0.0
      %938 = vmatpush1.xpose.msra.mxu0 0.0
      %939 = vmatprep.subr.mxu0 0.0
      %940 = vmatpush1.xpose.msra.mxu0 0.0
      %941 = vmatprep.subr.mxu0 0.0
      %942 = vmatpush1.xpose.msra.mxu0 0.0
      %943 = vmatprep.subr.mxu0 0.0
      %944 = vmatpush1.xpose.msra.mxu0 0.0
      %945 = vmatprep.subr.mxu0 0.0
      %946 = vmatpush1.xpose.msra.mxu0 0.0
      %947 = vmatprep.subr.mxu0 0.0
      %948 = vmatpush1.xpose.msra.mxu0 0.0
      %949 = vmatprep.subr.mxu0 0.0
      %950 = vmatpush1.xpose.msra.mxu0 0.0
      %951 = vmatprep.subr.mxu0 0.0
      %952 = vmatpush1.xpose.msra.mxu0 0.0
      %953 = vmatprep.subr.mxu0 0.0
      %954 = vmatpush1.xpose.msra.mxu0 0.0
      %955 = vmatprep.subr.mxu0 0.0
      %956 = vmatpush1.xpose.msra.mxu0 0.0
      %957 = vmatprep.subr.mxu0 0.0
      %958 = vmatpush1.xpose.msra.mxu0 0.0
      %959 = vmatprep.subr.mxu0 0.0
      %960 = vmatpush1.xpose.msra.mxu0 0.0
      %961 = vmatprep.subr.mxu0 0.0
      %962 = vmatpush1.xpose.msra.mxu0 0.0
      %963 = vmatprep.subr.mxu0 0.0
      %964 = vmatpush1.xpose.msra.mxu0 0.0
      %965 = vmatprep.subr.mxu0 0.0
      %966 = vmatpush1.xpose.msra.mxu0 0.0
      %967 = vmatprep.subr.mxu0 0.0
      %968 = vmatpush1.xpose.msra.mxu0 0.0
      %969 = vmatprep.subr.mxu0 0.0
      %970 = vmatpush1.xpose.msra.mxu0 0.0
      %971 = vmatprep.subr.mxu0 0.0
      %972 = vmatpush1.xpose.msra.mxu0 0.0
      %973 = vmatprep.subr.mxu0 0.0
      %974 = vmatpush1.xpose.msra.mxu0 0.0
      %975 = vmatprep.subr.mxu0 0.0
      %976 = vmatpush1.xpose.msra.mxu0 0.0
      %977 = vmatprep.mubr.f32.mxu0 0.0
      %978 = vmatmul.mubr.f32.gmra.mrb[0].mxu0 %v905
      %v979 = vpop.f32.mrb[0].mxu0
      %v980 = vadd.f32 0.0, %v979
      %v981 = vpop.f32.mrb[0].mxu0
      %982 = vmatprep.mubr.f32.mxu0 0.0
      %983 = vmatmul.mubr.f32.gmra.mrb[0].mxu0 %v907
      %v984 = vpop.f32.mrb[0].mxu0
      %v985 = vadd.f32 0.0, %v984
      %v986 = vpop.f32.mrb[0].mxu0
      %987 = vdwg.mxu0
      %988 = vrot.lane.b32.xlu0 %v889, 96
      %v989 = vpop.permute.xlu0 %988
      %990 = vrot.lane.b32.xlu0 %v891, 96
      %v991 = vpop.permute.xlu0 %990
      %v992 = vsel %vm904, %v889, 0
      %v994 = vsel %vm904, %v891, 0
      %v996 = vsel %vm904, %v989, 0
      %v998 = vsel %vm904, %v991, 0
      %1000 = vmatprep.subr.mxu0 0.0
      %1001 = vmatpush1.xpose.msra.mxu0 %v996
      %1002 = vmatprep.subr.mxu0 0.0
      %1003 = vmatpush1.xpose.msra.mxu0 %v998
      %1004 = vmatprep.subr.mxu0 0.0
      %1005 = vmatpush1.xpose.msra.mxu0 0.0
      %1006 = vmatprep.subr.mxu0 0.0
      %1007 = vmatpush1.xpose.msra.mxu0 0.0
      %1008 = vmatprep.subr.mxu0 0.0
      %1009 = vmatpush1.xpose.msra.mxu0 0.0
      %1010 = vmatprep.subr.mxu0 0.0
      %1011 = vmatpush1.xpose.msra.mxu0 0.0
      %1012 = vmatprep.subr.mxu0 0.0
      %1013 = vmatpush1.xpose.msra.mxu0 0.0
      %1014 = vmatprep.subr.mxu0 0.0
      %1015 = vmatpush1.xpose.msra.mxu0 0.0
      %1016 = vmatprep.subr.mxu0 0.0
      %1017 = vmatpush1.xpose.msra.mxu0 0.0
      %1018 = vmatprep.subr.mxu0 0.0
      %1019 = vmatpush1.xpose.msra.mxu0 0.0
      %1020 = vmatprep.subr.mxu0 0.0
      %1021 = vmatpush1.xpose.msra.mxu0 0.0
      %1022 = vmatprep.subr.mxu0 0.0
      %1023 = vmatpush1.xpose.msra.mxu0 0.0
      %1024 = vmatprep.subr.mxu0 0.0
      %1025 = vmatpush1.xpose.msra.mxu0 0.0
      %1026 = vmatprep.subr.mxu0 0.0
      %1027 = vmatpush1.xpose.msra.mxu0 0.0
      %1028 = vmatprep.subr.mxu0 0.0
      %1029 = vmatpush1.xpose.msra.mxu0 0.0
      %1030 = vmatprep.subr.mxu0 0.0
      %1031 = vmatpush1.xpose.msra.mxu0 0.0
      %1032 = vmatprep.subr.mxu0 0.0
      %1033 = vmatpush1.xpose.msra.mxu0 0.0
      %1034 = vmatprep.subr.mxu0 0.0
      %1035 = vmatpush1.xpose.msra.mxu0 0.0
      %1036 = vmatprep.subr.mxu0 0.0
      %1037 = vmatpush1.xpose.msra.mxu0 0.0
      %1038 = vmatprep.subr.mxu0 0.0
      %1039 = vmatpush1.xpose.msra.mxu0 0.0
      %1040 = vmatprep.subr.mxu0 0.0
      %1041 = vmatpush1.xpose.msra.mxu0 0.0
      %1042 = vmatprep.subr.mxu0 0.0
      %1043 = vmatpush1.xpose.msra.mxu0 0.0
      %1044 = vmatprep.subr.mxu0 0.0
      %1045 = vmatpush1.xpose.msra.mxu0 0.0
      %1046 = vmatprep.subr.mxu0 0.0
      %1047 = vmatpush1.xpose.msra.mxu0 0.0
      %1048 = vmatprep.subr.mxu0 0.0
      %1049 = vmatpush1.xpose.msra.mxu0 0.0
      %1050 = vmatprep.subr.mxu0 0.0
      %1051 = vmatpush1.xpose.msra.mxu0 0.0
      %1052 = vmatprep.subr.mxu0 0.0
      %1053 = vmatpush1.xpose.msra.mxu0 0.0
      %1054 = vmatprep.subr.mxu0 0.0
      %1055 = vmatpush1.xpose.msra.mxu0 0.0
      %1056 = vmatprep.subr.mxu0 0.0
      %1057 = vmatpush1.xpose.msra.mxu0 0.0
      %1058 = vmatprep.subr.mxu0 0.0
      %1059 = vmatpush1.xpose.msra.mxu0 0.0
      %1060 = vmatprep.subr.mxu0 0.0
      %1061 = vmatpush1.xpose.msra.mxu0 0.0
      %1062 = vmatprep.subr.mxu0 0.0
      %1063 = vmatpush1.xpose.msra.mxu0 0.0
      %1064 = vmatprep.mubr.f32.mxu0 0.0
      %1065 = vmatmul.mubr.f32.gmra.mrb[0].mxu0 %v992
      %v1066 = vpop.f32.mrb[0].mxu0
      %v1067 = vadd.f32 0.0, %v1066
      %v1068 = vpop.f32.mrb[0].mxu0
      %1069 = vmatprep.mubr.f32.mxu0 0.0
      %1070 = vmatmul.mubr.f32.gmra.mrb[0].mxu0 %v994
      %v1071 = vpop.f32.mrb[0].mxu0
      %v1072 = vadd.f32 0.0, %v1071
      %v1073 = vpop.f32.mrb[0].mxu0
      %1074 = vdwg.mxu0
      %1075 = vrot.lane.b32.xlu0 %v893, 96
      %v1076 = vpop.permute.xlu0 %1075
      %1077 = vrot.lane.b32.xlu0 %v895, 96
      %v1078 = vpop.permute.xlu0 %1077
      %v1079 = vsel %vm904, %v893, 0
      %v1081 = vsel %vm904, %v895, 0
      %v1083 = vsel %vm904, %v1076, 0
      %v1085 = vsel %vm904, %v1078, 0
      %1087 = vmatprep.subr.mxu0 0.0
      %1088 = vmatpush1.xpose.msra.mxu0 %v1083
      %1089 = vmatprep.subr.mxu0 0.0
      %1090 = vmatpush1.xpose.msra.mxu0 %v1085
      %1091 = vmatprep.subr.mxu0 0.0
      %1092 = vmatpush1.xpose.msra.mxu0 0.0
      %1093 = vmatprep.subr.mxu0 0.0
      %1094 = vmatpush1.xpose.msra.mxu0 0.0
      %1095 = vmatprep.subr.mxu0 0.0
      %1096 = vmatpush1.xpose.msra.mxu0 0.0
      %1097 = vmatprep.subr.mxu0 0.0
      %1098 = vmatpush1.xpose.msra.mxu0 0.0
      %1099 = vmatprep.subr.mxu0 0.0
      %1100 = vmatpush1.xpose.msra.mxu0 0.0
      %1101 = vmatprep.subr.mxu0 0.0
      %1102 = vmatpush1.xpose.msra.mxu0 0.0
      %1103 = vmatprep.subr.mxu0 0.0
      %1104 = vmatpush1.xpose.msra.mxu0 0.0
      %1105 = vmatprep.subr.mxu0 0.0
      %1106 = vmatpush1.xpose.msra.mxu0 0.0
      %1107 = vmatprep.subr.mxu0 0.0
      %1108 = vmatpush1.xpose.msra.mxu0 0.0
      %1109 = vmatprep.subr.mxu0 0.0
      %1110 = vmatpush1.xpose.msra.mxu0 0.0
      %1111 = vmatprep.subr.mxu0 0.0
      %1112 = vmatpush1.xpose.msra.mxu0 0.0
      %1113 = vmatprep.subr.mxu0 0.0
      %1114 = vmatpush1.xpose.msra.mxu0 0.0
      %1115 = vmatprep.subr.mxu0 0.0
      %1116 = vmatpush1.xpose.msra.mxu0 0.0
      %1117 = vmatprep.subr.mxu0 0.0
      %1118 = vmatpush1.xpose.msra.mxu0 0.0
      %1119 = vmatprep.subr.mxu0 0.0
      %1120 = vmatpush1.xpose.msra.mxu0 0.0
      %1121 = vmatprep.subr.mxu0 0.0
      %1122 = vmatpush1.xpose.msra.mxu0 0.0
      %1123 = vmatprep.subr.mxu0 0.0
      %1124 = vmatpush1.xpose.msra.mxu0 0.0
      %1125 = vmatprep.subr.mxu0 0.0
      %1126 = vmatpush1.xpose.msra.mxu0 0.0
      %1127 = vmatprep.subr.mxu0 0.0
      %1128 = vmatpush1.xpose.msra.mxu0 0.0
      %1129 = vmatprep.subr.mxu0 0.0
      %1130 = vmatpush1.xpose.msra.mxu0 0.0
      %1131 = vmatprep.subr.mxu0 0.0
      %1132 = vmatpush1.xpose.msra.mxu0 0.0
      %1133 = vmatprep.subr.mxu0 0.0
      %1134 = vmatpush1.xpose.msra.mxu0 0.0
      %1135 = vmatprep.subr.mxu0 0.0
      %1136 = vmatpush1.xpose.msra.mxu0 0.0
      %1137 = vmatprep.subr.mxu0 0.0
      %1138 = vmatpush1.xpose.msra.mxu0 0.0
      %1139 = vmatprep.subr.mxu0 0.0
      %1140 = vmatpush1.xpose.msra.mxu0 0.0
      %1141 = vmatprep.subr.mxu0 0.0
      %1142 = vmatpush1.xpose.msra.mxu0 0.0
      %1143 = vmatprep.subr.mxu0 0.0
      %1144 = vmatpush1.xpose.msra.mxu0 0.0
      %1145 = vmatprep.subr.mxu0 0.0
      %1146 = vmatpush1.xpose.msra.mxu0 0.0
      %1147 = vmatprep.subr.mxu0 0.0
      %1148 = vmatpush1.xpose.msra.mxu0 0.0
      %1149 = vmatprep.subr.mxu0 0.0
      %1150 = vmatpush1.xpose.msra.mxu0 0.0
      %1151 = vmatprep.mubr.f32.mxu0 0.0
      %1152 = vmatmul.mubr.f32.gmra.mrb[0].mxu0 %v1079
      %v1153 = vpop.f32.mrb[0].mxu0
      %v1154 = vadd.f32 0.0, %v1153
      %v1155 = vpop.f32.mrb[0].mxu0
      %1156 = vmatprep.mubr.f32.mxu0 0.0
      %1157 = vmatmul.mubr.f32.gmra.mrb[0].mxu0 %v1081
      %v1158 = vpop.f32.mrb[0].mxu0
      %v1159 = vadd.f32 0.0, %v1158
      %v1160 = vpop.f32.mrb[0].mxu0
      %1161 = vdwg.mxu0
      %1162 = vrot.lane.b32.xlu0 %v897, 96
      %v1163 = vpop.permute.xlu0 %1162
      %1164 = vrot.lane.b32.xlu0 %v899, 96
      %v1165 = vpop.permute.xlu0 %1164
      %v1166 = vsel %vm904, %v897, 0
      %v1168 = vsel %vm904, %v899, 0
      %v1170 = vsel %vm904, %v1163, 0
      %v1172 = vsel %vm904, %v1165, 0
      %1174 = vmatprep.subr.mxu0 0.0
      %1175 = vmatpush1.xpose.msra.mxu0 %v1170
      %1176 = vmatprep.subr.mxu0 0.0
      %1177 = vmatpush1.xpose.msra.mxu0 %v1172
      %1178 = vmatprep.subr.mxu0 0.0
      %1179 = vmatpush1.xpose.msra.mxu0 0.0
      %1180 = vmatprep.subr.mxu0 0.0
      %1181 = vmatpush1.xpose.msra.mxu0 0.0
      %1182 = vmatprep.subr.mxu0 0.0
      %1183 = vmatpush1.xpose.msra.mxu0 0.0
      %1184 = vmatprep.subr.mxu0 0.0
      %1185 = vmatpush1.xpose.msra.mxu0 0.0
      %1186 = vmatprep.subr.mxu0 0.0
      %1187 = vmatpush1.xpose.msra.mxu0 0.0
      %1188 = vmatprep.subr.mxu0 0.0
      %1189 = vmatpush1.xpose.msra.mxu0 0.0
      %1190 = vmatprep.subr.mxu0 0.0
      %1191 = vmatpush1.xpose.msra.mxu0 0.0
      %1192 = vmatprep.subr.mxu0 0.0
      %1193 = vmatpush1.xpose.msra.mxu0 0.0
      %1194 = vmatprep.subr.mxu0 0.0
      %1195 = vmatpush1.xpose.msra.mxu0 0.0
      %1196 = vmatprep.subr.mxu0 0.0
      %1197 = vmatpush1.xpose.msra.mxu0 0.0
      %1198 = vmatprep.subr.mxu0 0.0
      %1199 = vmatpush1.xpose.msra.mxu0 0.0
      %1200 = vmatprep.subr.mxu0 0.0
      %1201 = vmatpush1.xpose.msra.mxu0 0.0
      %1202 = vmatprep.subr.mxu0 0.0
      %1203 = vmatpush1.xpose.msra.mxu0 0.0
      %1204 = vmatprep.subr.mxu0 0.0
      %1205 = vmatpush1.xpose.msra.mxu0 0.0
      %1206 = vmatprep.subr.mxu0 0.0
      %1207 = vmatpush1.xpose.msra.mxu0 0.0
      %1208 = vmatprep.subr.mxu0 0.0
      %1209 = vmatpush1.xpose.msra.mxu0 0.0
      %1210 = vmatprep.subr.mxu0 0.0
      %1211 = vmatpush1.xpose.msra.mxu0 0.0
      %1212 = vmatprep.subr.mxu0 0.0
      %1213 = vmatpush1.xpose.msra.mxu0 0.0
      %1214 = vmatprep.subr.mxu0 0.0
      %1215 = vmatpush1.xpose.msra.mxu0 0.0
      %1216 = vmatprep.subr.mxu0 0.0
      %1217 = vmatpush1.xpose.msra.mxu0 0.0
      %1218 = vmatprep.subr.mxu0 0.0
      %1219 = vmatpush1.xpose.msra.mxu0 0.0
      %1220 = vmatprep.subr.mxu0 0.0
      %1221 = vmatpush1.xpose.msra.mxu0 0.0
      %1222 = vmatprep.subr.mxu0 0.0
      %1223 = vmatpush1.xpose.msra.mxu0 0.0
      %1224 = vmatprep.subr.mxu0 0.0
      %1225 = vmatpush1.xpose.msra.mxu0 0.0
      %1226 = vmatprep.subr.mxu0 0.0
      %1227 = vmatpush1.xpose.msra.mxu0 0.0
      %1228 = vmatprep.subr.mxu0 0.0
      %1229 = vmatpush1.xpose.msra.mxu0 0.0
      %1230 = vmatprep.subr.mxu0 0.0
      %1231 = vmatpush1.xpose.msra.mxu0 0.0
      %1232 = vmatprep.subr.mxu0 0.0
      %1233 = vmatpush1.xpose.msra.mxu0 0.0
      %1234 = vmatprep.subr.mxu0 0.0
      %1235 = vmatpush1.xpose.msra.mxu0 0.0
      %1236 = vmatprep.subr.mxu0 0.0
      %1237 = vmatpush1.xpose.msra.mxu0 0.0
      %1238 = vmatprep.mubr.f32.mxu0 0.0
      %1239 = vmatmul.mubr.f32.gmra.mrb[0].mxu0 %v1166
      %v1240 = vpop.f32.mrb[0].mxu0
      %v1241 = vadd.f32 0.0, %v1240
      %v1242 = vpop.f32.mrb[0].mxu0
      %1243 = vmatprep.mubr.f32.mxu0 0.0
      %1244 = vmatmul.mubr.f32.gmra.mrb[0].mxu0 %v1168
      %v1245 = vpop.f32.mrb[0].mxu0
      %v1246 = vadd.f32 0.0, %v1245
      %v1247 = vpop.f32.mrb[0].mxu0
      %1248 = vdwg.mxu0
      %v1249 = vmul.f32 %v980, 0.17677669
      %v1250 = vmul.f32 %v985, 0.17677669
      %v1251 = vmul.f32 %v1067, 0.17677669
      %v1252 = vmul.f32 %v1072, 0.17677669
      %v1253 = vmul.f32 %v1154, 0.17677669
      %v1254 = vmul.f32 %v1159, 0.17677669
      %v1255 = vmul.f32 %v1241, 0.17677669
      %v1256 = vmul.f32 %v1246, 0.17677669
      %v1257 = vadd.f32 %v1249, %v649
      %v1258 = vadd.f32 %v1250, %v650
      %v1259 = vadd.f32 %v1251, %v651
      %v1260 = vadd.f32 %v1252, %v652
      %v1261 = vadd.f32 %v1253, %v653
      %v1262 = vadd.f32 %v1254, %v654
      %v1263 = vadd.f32 %v1255, %v655
      %v1264 = vadd.f32 %v1256, %v656
      %vm1265 = vcmask 130048
      %v1266 = vsel %vm1265, %v1257, -inf
      %1267 = vmax.xlane.f32.xlu0 %v1266
      %v1268 = vpop.xlane.xlu0 %1267
      %v1269 = vsel %vm1265, %v1258, -inf
      %1270 = vmax.xlane.f32.xlu0 %v1269
      %v1271 = vpop.xlane.xlu0 %1270
      %v1272 = vsel %vm1265, %v1259, -inf
      %1273 = vmax.xlane.f32.xlu0 %v1272
      %v1274 = vpop.xlane.xlu0 %1273
      %v1275 = vsel %vm1265, %v1260, -inf
      %1276 = vmax.xlane.f32.xlu0 %v1275
      %v1277 = vpop.xlane.xlu0 %1276
      %v1278 = vsel %vm1265, %v1261, -inf
      %1279 = vmax.xlane.f32.xlu0 %v1278
      %v1280 = vpop.xlane.xlu0 %1279
      %v1281 = vsel %vm1265, %v1262, -inf
      %1282 = vmax.xlane.f32.xlu0 %v1281
      %v1283 = vpop.xlane.xlu0 %1282
      %v1284 = vsel %vm1265, %v1263, -inf
      %1285 = vmax.xlane.f32.xlu0 %v1284
      %v1286 = vpop.xlane.xlu0 %1285
      %v1287 = vsel %vm1265, %v1264, -inf
      %1288 = vmax.xlane.f32.xlu0 %v1287
      %v1289 = vpop.xlane.xlu0 %1288
      %v1290 = vsub.f32 %v1257, %v1268
      %v1291 = vsub.f32 %v1258, %v1271
      %v1292 = vsub.f32 %v1259, %v1274
      %v1293 = vsub.f32 %v1260, %v1277
      %v1294 = vsub.f32 %v1261, %v1280
      %v1295 = vsub.f32 %v1262, %v1283
      %v1296 = vsub.f32 %v1263, %v1286
      %v1297 = vsub.f32 %v1264, %v1289
      %v1298 = vmul.f32 %v1290, 1.442695
      %v1299 = vpow.pop %v1298
      %v1300 = vmul.f32 %v1291, 1.442695
      %v1301 = vpow.pop %v1300
      %v1302 = vmul.f32 %v1292, 1.442695
      %v1303 = vpow.pop %v1302
      %v1304 = vmul.f32 %v1293, 1.442695
      %v1305 = vpow.pop %v1304
      %v1306 = vmul.f32 %v1294, 1.442695
      %v1307 = vpow.pop %v1306
      %v1308 = vmul.f32 %v1295, 1.442695
      %v1309 = vpow.pop %v1308
      %v1310 = vmul.f32 %v1296, 1.442695
      %v1311 = vpow.pop %v1310
      %v1312 = vmul.f32 %v1297, 1.442695
      %v1313 = vpow.pop %v1312
      %v1314 = vsel %vm1265, %v1299, 0.0
      %1315 = vadd.xlane.f32.xlu0 %v1314
      %v1316 = vpop.xlane.xlu0 %1315
      %v1317 = vsel %vm1265, %v1301, 0.0
      %1318 = vadd.xlane.f32.xlu0 %v1317
      %v1319 = vpop.xlane.xlu0 %1318
      %v1320 = vsel %vm1265, %v1303, 0.0
      %1321 = vadd.xlane.f32.xlu0 %v1320
      %v1322 = vpop.xlane.xlu0 %1321
      %v1323 = vsel %vm1265, %v1305, 0.0
      %1324 = vadd.xlane.f32.xlu0 %v1323
      %v1325 = vpop.xlane.xlu0 %1324
      %v1326 = vsel %vm1265, %v1307, 0.0
      %1327 = vadd.xlane.f32.xlu0 %v1326
      %v1328 = vpop.xlane.xlu0 %1327
      %v1329 = vsel %vm1265, %v1309, 0.0
      %1330 = vadd.xlane.f32.xlu0 %v1329
      %v1331 = vpop.xlane.xlu0 %1330
      %v1332 = vsel %vm1265, %v1311, 0.0
      %1333 = vadd.xlane.f32.xlu0 %v1332
      %v1334 = vpop.xlane.xlu0 %1333
      %v1335 = vsel %vm1265, %v1313, 0.0
      %1336 = vadd.xlane.f32.xlu0 %v1335
      %v1337 = vpop.xlane.xlu0 %1336
      %v1338 = vrcp.pop %v1316
      %v1339 = vmul.f32 %v1299, %v1338
      %v1340 = vrcp.pop %v1319
      %v1341 = vmul.f32 %v1301, %v1340
      %v1342 = vrcp.pop %v1322
      %v1343 = vmul.f32 %v1303, %v1342
      %v1344 = vrcp.pop %v1325
      %v1345 = vmul.f32 %v1305, %v1344
      %v1346 = vrcp.pop %v1328
      %v1347 = vmul.f32 %v1307, %v1346
      %v1348 = vrcp.pop %v1331
      %v1349 = vmul.f32 %v1309, %v1348
      %v1350 = vrcp.pop %v1334
      %v1351 = vmul.f32 %v1311, %v1350
      %v1352 = vrcp.pop %v1337
      %v1353 = vmul.f32 %v1313, %v1352
      %1354 = vrot.lane.b32.xlu0 %v878, 64
      %v1355 = vpop.permute.xlu0 %1354
      %1356 = vrot.lane.b32.xlu0 %v883, 64
      %v1357 = vpop.permute.xlu0 %1356
      %v1361 = vsel %vm1265, %v1339, 0
      %v1364 = vsel %vm1265, %v1341, 0
      %1366 = vmatprep.subr.mxu0 0.0
      %1367 = vmatpush1.msra.mxu0 %v1355
      %1368 = vmatprep.subr.mxu0 0.0
      %1369 = vmatpush1.msra.mxu0 %v1357
      %1370 = vmatprep.subr.mxu0 0.0
      %1371 = vmatpush1.msra.mxu0 0.0
      %1372 = vmatprep.subr.mxu0 0.0
      %1373 = vmatpush1.msra.mxu0 0.0
      %1374 = vmatprep.subr.mxu0 0.0
      %1375 = vmatpush1.msra.mxu0 0.0
      %1376 = vmatprep.subr.mxu0 0.0
      %1377 = vmatpush1.msra.mxu0 0.0
      %1378 = vmatprep.subr.mxu0 0.0
      %1379 = vmatpush1.msra.mxu0 0.0
      %1380 = vmatprep.subr.mxu0 0.0
      %1381 = vmatpush1.msra.mxu0 0.0
      %1382 = vmatprep.subr.mxu0 0.0
      %1383 = vmatpush1.msra.mxu0 0.0
      %1384 = vmatprep.subr.mxu0 0.0
      %1385 = vmatpush1.msra.mxu0 0.0
      %1386 = vmatprep.subr.mxu0 0.0
      %1387 = vmatpush1.msra.mxu0 0.0
      %1388 = vmatprep.subr.mxu0 0.0
      %1389 = vmatpush1.msra.mxu0 0.0
      %1390 = vmatprep.subr.mxu0 0.0
      %1391 = vmatpush1.msra.mxu0 0.0
      %1392 = vmatprep.subr.mxu0 0.0
      %1393 = vmatpush1.msra.mxu0 0.0
      %1394 = vmatprep.subr.mxu0 0.0
      %1395 = vmatpush1.msra.mxu0 0.0
      %1396 = vmatprep.subr.mxu0 0.0
      %1397 = vmatpush1.msra.mxu0 0.0
      %1398 = vmatprep.subr.mxu0 0.0
      %1399 = vmatpush1.msra.mxu0 0.0
      %1400 = vmatprep.subr.mxu0 0.0
      %1401 = vmatpush1.msra.mxu0 0.0
      %1402 = vmatprep.subr.mxu0 0.0
      %1403 = vmatpush1.msra.mxu0 0.0
      %1404 = vmatprep.subr.mxu0 0.0
      %1405 = vmatpush1.msra.mxu0 0.0
      %1406 = vmatprep.subr.mxu0 0.0
      %1407 = vmatpush1.msra.mxu0 0.0
      %1408 = vmatprep.subr.mxu0 0.0
      %1409 = vmatpush1.msra.mxu0 0.0
      %1410 = vmatprep.subr.mxu0 0.0
      %1411 = vmatpush1.msra.mxu0 0.0
      %1412 = vmatprep.subr.mxu0 0.0
      %1413 = vmatpush1.msra.mxu0 0.0
      %1414 = vmatprep.subr.mxu0 0.0
      %1415 = vmatpush1.msra.mxu0 0.0
      %1416 = vmatprep.subr.mxu0 0.0
      %1417 = vmatpush1.msra.mxu0 0.0
      %1418 = vmatprep.subr.mxu0 0.0
      %1419 = vmatpush1.msra.mxu0 0.0
      %1420 = vmatprep.subr.mxu0 0.0
      %1421 = vmatpush1.msra.mxu0 0.0
      %1422 = vmatprep.subr.mxu0 0.0
      %1423 = vmatpush1.msra.mxu0 0.0
      %1424 = vmatprep.subr.mxu0 0.0
      %1425 = vmatpush1.msra.mxu0 0.0
      %1426 = vmatprep.subr.mxu0 0.0
      %1427 = vmatpush1.msra.mxu0 0.0
      %1428 = vmatprep.subr.mxu0 0.0
      %1429 = vmatpush1.msra.mxu0 0.0
      %1430 = vmatprep.mubr.f32.mxu0 0.0
      %1431 = vmatmul.mubr.f32.gmra.mrb[0].mxu0 %v1361
      %v1432 = vpop.f32.mrb[0].mxu0
      %v1433 = vadd.f32 0.0, %v1432
      %v1434 = vpop.f32.mrb[0].mxu0
      %1435 = vmatprep.mubr.f32.mxu0 0.0
      %1436 = vmatmul.mubr.f32.gmra.mrb[0].mxu0 %v1364
      %v1437 = vpop.f32.mrb[0].mxu0
      %v1438 = vadd.f32 0.0, %v1437
      %v1439 = vpop.f32.mrb[0].mxu0
      %1440 = vdwg.mxu0
      %1441 = vrot.lane.b32.xlu0 %v889, 64
      %v1442 = vpop.permute.xlu0 %1441
      %1443 = vrot.lane.b32.xlu0 %v891, 64
      %v1444 = vpop.permute.xlu0 %1443
      %v1448 = vsel %vm1265, %v1343, 0
      %v1451 = vsel %vm1265, %v1345, 0
      %1453 = vmatprep.subr.mxu0 0.0
      %1454 = vmatpush1.msra.mxu0 %v1442
      %1455 = vmatprep.subr.mxu0 0.0
      %1456 = vmatpush1.msra.mxu0 %v1444
      %1457 = vmatprep.subr.mxu0 0.0
      %1458 = vmatpush1.msra.mxu0 0.0
      %1459 = vmatprep.subr.mxu0 0.0
      %1460 = vmatpush1.msra.mxu0 0.0
      %1461 = vmatprep.subr.mxu0 0.0
      %1462 = vmatpush1.msra.mxu0 0.0
      %1463 = vmatprep.subr.mxu0 0.0
      %1464 = vmatpush1.msra.mxu0 0.0
      %1465 = vmatprep.subr.mxu0 0.0
      %1466 = vmatpush1.msra.mxu0 0.0
      %1467 = vmatprep.subr.mxu0 0.0
      %1468 = vmatpush1.msra.mxu0 0.0
      %1469 = vmatprep.subr.mxu0 0.0
      %1470 = vmatpush1.msra.mxu0 0.0
      %1471 = vmatprep.subr.mxu0 0.0
      %1472 = vmatpush1.msra.mxu0 0.0
      %1473 = vmatprep.subr.mxu0 0.0
      %1474 = vmatpush1.msra.mxu0 0.0
      %1475 = vmatprep.subr.mxu0 0.0
      %1476 = vmatpush1.msra.mxu0 0.0
      %1477 = vmatprep.subr.mxu0 0.0
      %1478 = vmatpush1.msra.mxu0 0.0
      %1479 = vmatprep.subr.mxu0 0.0
      %1480 = vmatpush1.msra.mxu0 0.0
      %1481 = vmatprep.subr.mxu0 0.0
      %1482 = vmatpush1.msra.mxu0 0.0
      %1483 = vmatprep.subr.mxu0 0.0
      %1484 = vmatpush1.msra.mxu0 0.0
      %1485 = vmatprep.subr.mxu0 0.0
      %1486 = vmatpush1.msra.mxu0 0.0
      %1487 = vmatprep.subr.mxu0 0.0
      %1488 = vmatpush1.msra.mxu0 0.0
      %1489 = vmatprep.subr.mxu0 0.0
      %1490 = vmatpush1.msra.mxu0 0.0
      %1491 = vmatprep.subr.mxu0 0.0
      %1492 = vmatpush1.msra.mxu0 0.0
      %1493 = vmatprep.subr.mxu0 0.0
      %1494 = vmatpush1.msra.mxu0 0.0
      %1495 = vmatprep.subr.mxu0 0.0
      %1496 = vmatpush1.msra.mxu0 0.0
      %1497 = vmatprep.subr.mxu0 0.0
      %1498 = vmatpush1.msra.mxu0 0.0
      %1499 = vmatprep.subr.mxu0 0.0
      %1500 = vmatpush1.msra.mxu0 0.0
      %1501 = vmatprep.subr.mxu0 0.0
      %1502 = vmatpush1.msra.mxu0 0.0
      %1503 = vmatprep.subr.mxu0 0.0
      %1504 = vmatpush1.msra.mxu0 0.0
      %1505 = vmatprep.subr.mxu0 0.0
      %1506 = vmatpush1.msra.mxu0 0.0
      %1507 = vmatprep.subr.mxu0 0.0
      %1508 = vmatpush1.msra.mxu0 0.0
      %1509 = vmatprep.subr.mxu0 0.0
      %1510 = vmatpush1.msra.mxu0 0.0
      %1511 = vmatprep.subr.mxu0 0.0
      %1512 = vmatpush1.msra.mxu0 0.0
      %1513 = vmatprep.subr.mxu0 0.0
      %1514 = vmatpush1.msra.mxu0 0.0
      %1515 = vmatprep.subr.mxu0 0.0
      %1516 = vmatpush1.msra.mxu0 0.0
      %1517 = vmatprep.mubr.f32.mxu0 0.0
      %1518 = vmatmul.mubr.f32.gmra.mrb[0].mxu0 %v1448
      %v1519 = vpop.f32.mrb[0].mxu0
      %v1520 = vadd.f32 0.0, %v1519
      %v1521 = vpop.f32.mrb[0].mxu0
      %1522 = vmatprep.mubr.f32.mxu0 0.0
      %1523 = vmatmul.mubr.f32.gmra.mrb[0].mxu0 %v1451
      %v1524 = vpop.f32.mrb[0].mxu0
      %v1525 = vadd.f32 0.0, %v1524
      %v1526 = vpop.f32.mrb[0].mxu0
      %1527 = vdwg.mxu0
      %1528 = vrot.lane.b32.xlu0 %v893, 64
      %v1529 = vpop.permute.xlu0 %1528
      %1530 = vrot.lane.b32.xlu0 %v895, 64
      %v1531 = vpop.permute.xlu0 %1530
      %v1535 = vsel %vm1265, %v1347, 0
      %v1538 = vsel %vm1265, %v1349, 0
      %1540 = vmatprep.subr.mxu0 0.0
      %1541 = vmatpush1.msra.mxu0 %v1529
      %1542 = vmatprep.subr.mxu0 0.0
      %1543 = vmatpush1.msra.mxu0 %v1531
      %1544 = vmatprep.subr.mxu0 0.0
      %1545 = vmatpush1.msra.mxu0 0.0
      %1546 = vmatprep.subr.mxu0 0.0
      %1547 = vmatpush1.msra.mxu0 0.0
      %1548 = vmatprep.subr.mxu0 0.0
      %1549 = vmatpush1.msra.mxu0 0.0
      %1550 = vmatprep.subr.mxu0 0.0
      %1551 = vmatpush1.msra.mxu0 0.0
      %1552 = vmatprep.subr.mxu0 0.0
      %1553 = vmatpush1.msra.mxu0 0.0
      %1554 = vmatprep.subr.mxu0 0.0
      %1555 = vmatpush1.msra.mxu0 0.0
      %1556 = vmatprep.subr.mxu0 0.0
      %1557 = vmatpush1.msra.mxu0 0.0
      %1558 = vmatprep.subr.mxu0 0.0
      %1559 = vmatpush1.msra.mxu0 0.0
      %1560 = vmatprep.subr.mxu0 0.0
      %1561 = vmatpush1.msra.mxu0 0.0
      %1562 = vmatprep.subr.mxu0 0.0
      %1563 = vmatpush1.msra.mxu0 0.0
      %1564 = vmatprep.subr.mxu0 0.0
      %1565 = vmatpush1.msra.mxu0 0.0
      %1566 = vmatprep.subr.mxu0 0.0
      %1567 = vmatpush1.msra.mxu0 0.0
      %1568 = vmatprep.subr.mxu0 0.0
      %1569 = vmatpush1.msra.mxu0 0.0
      %1570 = vmatprep.subr.mxu0 0.0
      %1571 = vmatpush1.msra.mxu0 0.0
      %1572 = vmatprep.subr.mxu0 0.0
      %1573 = vmatpush1.msra.mxu0 0.0
      %1574 = vmatprep.subr.mxu0 0.0
      %1575 = vmatpush1.msra.mxu0 0.0
      %1576 = vmatprep.subr.mxu0 0.0
      %1577 = vmatpush1.msra.mxu0 0.0
      %1578 = vmatprep.subr.mxu0 0.0
      %1579 = vmatpush1.msra.mxu0 0.0
      %1580 = vmatprep.subr.mxu0 0.0
      %1581 = vmatpush1.msra.mxu0 0.0
      %1582 = vmatprep.subr.mxu0 0.0
      %1583 = vmatpush1.msra.mxu0 0.0
      %1584 = vmatprep.subr.mxu0 0.0
      %1585 = vmatpush1.msra.mxu0 0.0
      %1586 = vmatprep.subr.mxu0 0.0
      %1587 = vmatpush1.msra.mxu0 0.0
      %1588 = vmatprep.subr.mxu0 0.0
      %1589 = vmatpush1.msra.mxu0 0.0
      %1590 = vmatprep.subr.mxu0 0.0
      %1591 = vmatpush1.msra.mxu0 0.0
      %1592 = vmatprep.subr.mxu0 0.0
      %1593 = vmatpush1.msra.mxu0 0.0
      %1594 = vmatprep.subr.mxu0 0.0
      %1595 = vmatpush1.msra.mxu0 0.0
      %1596 = vmatprep.subr.mxu0 0.0
      %1597 = vmatpush1.msra.mxu0 0.0
      %1598 = vmatprep.subr.mxu0 0.0
      %1599 = vmatpush1.msra.mxu0 0.0
      %1600 = vmatprep.subr.mxu0 0.0
      %1601 = vmatpush1.msra.mxu0 0.0
      %1602 = vmatprep.subr.mxu0 0.0
      %1603 = vmatpush1.msra.mxu0 0.0
      %1604 = vmatprep.mubr.f32.mxu0 0.0
      %1605 = vmatmul.mubr.f32.gmra.mrb[0].mxu0 %v1535
      %v1606 = vpop.f32.mrb[0].mxu0
      %v1607 = vadd.f32 0.0, %v1606
      %v1608 = vpop.f32.mrb[0].mxu0
      %1609 = vmatprep.mubr.f32.mxu0 0.0
      %1610 = vmatmul.mubr.f32.gmra.mrb[0].mxu0 %v1538
      %v1611 = vpop.f32.mrb[0].mxu0
      %v1612 = vadd.f32 0.0, %v1611
      %v1613 = vpop.f32.mrb[0].mxu0
      %1614 = vdwg.mxu0
      %1615 = vrot.lane.b32.xlu0 %v897, 64
      %v1616 = vpop.permute.xlu0 %1615
      %1617 = vrot.lane.b32.xlu0 %v899, 64
      %v1618 = vpop.permute.xlu0 %1617
      %v1622 = vsel %vm1265, %v1351, 0
      %v1625 = vsel %vm1265, %v1353, 0
      %1627 = vmatprep.subr.mxu0 0.0
      %1628 = vmatpush1.msra.mxu0 %v1616
      %1629 = vmatprep.subr.mxu0 0.0
      %1630 = vmatpush1.msra.mxu0 %v1618
      %1631 = vmatprep.subr.mxu0 0.0
      %1632 = vmatpush1.msra.mxu0 0.0
      %1633 = vmatprep.subr.mxu0 0.0
      %1634 = vmatpush1.msra.mxu0 0.0
      %1635 = vmatprep.subr.mxu0 0.0
      %1636 = vmatpush1.msra.mxu0 0.0
      %1637 = vmatprep.subr.mxu0 0.0
      %1638 = vmatpush1.msra.mxu0 0.0
      %1639 = vmatprep.subr.mxu0 0.0
      %1640 = vmatpush1.msra.mxu0 0.0
      %1641 = vmatprep.subr.mxu0 0.0
      %1642 = vmatpush1.msra.mxu0 0.0
      %1643 = vmatprep.subr.mxu0 0.0
      %1644 = vmatpush1.msra.mxu0 0.0
      %1645 = vmatprep.subr.mxu0 0.0
      %1646 = vmatpush1.msra.mxu0 0.0
      %1647 = vmatprep.subr.mxu0 0.0
      %1648 = vmatpush1.msra.mxu0 0.0
      %1649 = vmatprep.subr.mxu0 0.0
      %1650 = vmatpush1.msra.mxu0 0.0
      %1651 = vmatprep.subr.mxu0 0.0
      %1652 = vmatpush1.msra.mxu0 0.0
      %1653 = vmatprep.subr.mxu0 0.0
      %1654 = vmatpush1.msra.mxu0 0.0
      %1655 = vmatprep.subr.mxu0 0.0
      %1656 = vmatpush1.msra.mxu0 0.0
      %1657 = vmatprep.subr.mxu0 0.0
      %1658 = vmatpush1.msra.mxu0 0.0
      %1659 = vmatprep.subr.mxu0 0.0
      %1660 = vmatpush1.msra.mxu0 0.0
      %1661 = vmatprep.subr.mxu0 0.0
      %1662 = vmatpush1.msra.mxu0 0.0
      %1663 = vmatprep.subr.mxu0 0.0
      %1664 = vmatpush1.msra.mxu0 0.0
      %1665 = vmatprep.subr.mxu0 0.0
      %1666 = vmatpush1.msra.mxu0 0.0
      %1667 = vmatprep.subr.mxu0 0.0
      %1668 = vmatpush1.msra.mxu0 0.0
      %1669 = vmatprep.subr.mxu0 0.0
      %1670 = vmatpush1.msra.mxu0 0.0
      %1671 = vmatprep.subr.mxu0 0.0
      %1672 = vmatpush1.msra.mxu0 0.0
      %1673 = vmatprep.subr.mxu0 0.0
      %1674 = vmatpush1.msra.mxu0 0.0
      %1675 = vmatprep.subr.mxu0 0.0
      %1676 = vmatpush1.msra.mxu0 0.0
      %1677 = vmatprep.subr.mxu0 0.0
      %1678 = vmatpush1.msra.mxu0 0.0
      %1679 = vmatprep.subr.mxu0 0.0
      %1680 = vmatpush1.msra.mxu0 0.0
      %1681 = vmatprep.subr.mxu0 0.0
      %1682 = vmatpush1.msra.mxu0 0.0
      %1683 = vmatprep.subr.mxu0 0.0
      %1684 = vmatpush1.msra.mxu0 0.0
      %1685 = vmatprep.subr.mxu0 0.0
      %1686 = vmatpush1.msra.mxu0 0.0
      %1687 = vmatprep.subr.mxu0 0.0
      %1688 = vmatpush1.msra.mxu0 0.0
      %1689 = vmatprep.subr.mxu0 0.0
      %1690 = vmatpush1.msra.mxu0 0.0
      %1691 = vmatprep.mubr.f32.mxu0 0.0
      %1692 = vmatmul.mubr.f32.gmra.mrb[0].mxu0 %v1622
      %v1693 = vpop.f32.mrb[0].mxu0
      %v1694 = vadd.f32 0.0, %v1693
      %v1695 = vpop.f32.mrb[0].mxu0
      %1696 = vmatprep.mubr.f32.mxu0 0.0
      %1697 = vmatmul.mubr.f32.gmra.mrb[0].mxu0 %v1625
      %v1698 = vpop.f32.mrb[0].mxu0
      %v1699 = vadd.f32 0.0, %v1698
      %v1700 = vpop.f32.mrb[0].mxu0
      %1701 = vdwg.mxu0
      %1704 = vrot.lane.b32.xlu0 %v1520, 8
      %v1705 = vpop.permute.xlu0 %1704
      %1706 = vrot.lane.b32.xlu0 %v1525, 8
      %v1707 = vpop.permute.xlu0 %1706
      %1712 = vrot.lane.b32.xlu0 %v1607, 16
      %v1713 = vpop.permute.xlu0 %1712
      %1714 = vrot.lane.b32.xlu0 %v1612, 16
      %v1715 = vpop.permute.xlu0 %1714
      %1720 = vrot.lane.b32.xlu0 %v1694, 24
      %v1721 = vpop.permute.xlu0 %1720
      %1722 = vrot.lane.b32.xlu0 %v1699, 24
      %v1723 = vpop.permute.xlu0 %1722
      %v1726 = vsel %vm904, %v1433, %v1705
      %v1727 = vsel %vm904, %v1438, %v1707
      %v1728 = vsel %vm1265, %v1726, %v1713
      %v1729 = vsel %vm1265, %v1727, %v1715
      %vm1730 = vcmask 195584
      %v1731 = vsel %vm1730, %v1728, %v1721
      %v1732 = vsel %vm1730, %v1729, %v1723
      %v1733 = vld [vmem:[%s7] sm:$0xff]
      %v1734 = vld [vmem:[%s7 + $0x8] sm:$0xff]
      %v1735 = vld [vmem:[%s7 + $0x10] sm:$0xff]
      %v1736 = vld [vmem:[%s7 + $0x18] sm:$0xff]
      %v1737 = vld [vmem:[%s8] sm:$0x1]
      %v1739 = vlaneseq
      %v1740 = vshrl.u32 %v1739, 7
      %v1741 = vsub.s32 0, %v1740
      %v1742 = vrot.slane %v1737, %v1741
      %v1745 = vsel %vm757, %v1731, 0
      %v1748 = vsel %vm757, %v1732, 0
      %1750 = vmatprep.subr.mxu0 0.0
      %1751 = vmatpush1.msra.mxu0 %v1733
      %1752 = vmatprep.subr.mxu0 0.0
      %1753 = vmatpush1.msra.mxu0 %v1734
      %1754 = vmatprep.subr.mxu0 0.0
      %1755 = vmatpush1.msra.mxu0 %v1735
      %1756 = vmatprep.subr.mxu0 0.0
      %1757 = vmatpush1.msra.mxu0 %v1736
      %1758 = vmatprep.subr.mxu0 0.0
      %1759 = vmatpush1.msra.mxu0 0.0
      %1760 = vmatprep.subr.mxu0 0.0
      %1761 = vmatpush1.msra.mxu0 0.0
      %1762 = vmatprep.subr.mxu0 0.0
      %1763 = vmatpush1.msra.mxu0 0.0
      %1764 = vmatprep.subr.mxu0 0.0
      %1765 = vmatpush1.msra.mxu0 0.0
      %1766 = vmatprep.subr.mxu0 0.0
      %1767 = vmatpush1.msra.mxu0 0.0
      %1768 = vmatprep.subr.mxu0 0.0
      %1769 = vmatpush1.msra.mxu0 0.0
      %1770 = vmatprep.subr.mxu0 0.0
      %1771 = vmatpush1.msra.mxu0 0.0
      %1772 = vmatprep.subr.mxu0 0.0
      %1773 = vmatpush1.msra.mxu0 0.0
      %1774 = vmatprep.subr.mxu0 0.0
      %1775 = vmatpush1.msra.mxu0 0.0
      %1776 = vmatprep.subr.mxu0 0.0
      %1777 = vmatpush1.msra.mxu0 0.0
      %1778 = vmatprep.subr.mxu0 0.0
      %1779 = vmatpush1.msra.mxu0 0.0
      %1780 = vmatprep.subr.mxu0 0.0
      %1781 = vmatpush1.msra.mxu0 0.0
      %1782 = vmatprep.subr.mxu0 0.0
      %1783 = vmatpush1.msra.mxu0 0.0
      %1784 = vmatprep.subr.mxu0 0.0
      %1785 = vmatpush1.msra.mxu0 0.0
      %1786 = vmatprep.subr.mxu0 0.0
      %1787 = vmatpush1.msra.mxu0 0.0
      %1788 = vmatprep.subr.mxu0 0.0
      %1789 = vmatpush1.msra.mxu0 0.0
      %1790 = vmatprep.subr.mxu0 0.0
      %1791 = vmatpush1.msra.mxu0 0.0
      %1792 = vmatprep.subr.mxu0 0.0
      %1793 = vmatpush1.msra.mxu0 0.0
      %1794 = vmatprep.subr.mxu0 0.0
      %1795 = vmatpush1.msra.mxu0 0.0
      %1796 = vmatprep.subr.mxu0 0.0
      %1797 = vmatpush1.msra.mxu0 0.0
      %1798 = vmatprep.subr.mxu0 0.0
      %1799 = vmatpush1.msra.mxu0 0.0
      %1800 = vmatprep.subr.mxu0 0.0
      %1801 = vmatpush1.msra.mxu0 0.0
      %1802 = vmatprep.subr.mxu0 0.0
      %1803 = vmatpush1.msra.mxu0 0.0
      %1804 = vmatprep.subr.mxu0 0.0
      %1805 = vmatpush1.msra.mxu0 0.0
      %1806 = vmatprep.subr.mxu0 0.0
      %1807 = vmatpush1.msra.mxu0 0.0
      %1808 = vmatprep.subr.mxu0 0.0
      %1809 = vmatpush1.msra.mxu0 0.0
      %1810 = vmatprep.subr.mxu0 0.0
      %1811 = vmatpush1.msra.mxu0 0.0
      %1812 = vmatprep.subr.mxu0 0.0
      %1813 = vmatpush1.msra.mxu0 0.0
      %1814 = vmatprep.mubr.f32.mxu0 0.0
      %1815 = vmatmul.mubr.f32.gmra.mrb[0].mxu0 %v1745
      %v1816 = vpop.f32.mrb[0].mxu0
      %v1817 = vadd.f32 %v1742, %v1816
      %v1818 = vpop.f32.mrb[0].mxu0
      %1819 = vmatprep.mubr.f32.mxu0 0.0
      %1820 = vmatmul.mubr.f32.gmra.mrb[0].mxu0 %v1748
      %v1821 = vpop.f32.mrb[0].mxu0
      %v1822 = vadd.f32 %v1742, %v1821
      %v1823 = vpop.f32.mrb[0].mxu0
      %1824 = vdwg.mxu0
      %1826 = vset.pattern.permute.xlu0 0
      %1827 = vperm.xlu0 %1826, %v647
      %v1828 = vpop.permute.xlu0 %1827
      %1831 = vset.pattern.permute.xlu0 0
      %1832 = vperm.xlu0 %1831, %v648
      %v1833 = vpop.permute.xlu0 %1832
      %v1835 = vmul.f32 %v1817, %v1828
      %v1836 = vmul.f32 %v1822, %v1833
      %v1837 = vadd.f32 %v747, %v1835
      %v1838 = vadd.f32 %v752, %v1836
      %v1839 = vld [vmem:[%s9] sm:$0x1]
      %v1840 = vld [vmem:[%s10] sm:$0x1]
      %v1841 = vsel %vm757, %v1837, 0.0
      %1842 = vadd.xlane.f32.xlu0 %v1841
      %v1843 = vpop.xlane.xlu0 %1842
      %v1844 = vsel %vm757, %v1838, 0.0
      %1845 = vadd.xlane.f32.xlu0 %v1844
      %v1846 = vpop.xlane.xlu0 %1845
      %v1847 = vmul.f32 %v1843, %v764
      %v1848 = vmul.f32 %v1846, %v764
      %v1849 = vsub.f32 %v1837, %v1847
      %v1850 = vsub.f32 %v1838, %v1848
      %v1851 = vmul.f32 %v1849, %v1849
      %v1852 = vmul.f32 %v1850, %v1850
      %v1853 = vsel %vm757, %v1851, 0.0
      %1854 = vadd.xlane.f32.xlu0 %v1853
      %v1855 = vpop.xlane.xlu0 %1854
      %v1856 = vsel %vm757, %v1852, 0.0
      %1857 = vadd.xlane.f32.xlu0 %v1856
      %v1858 = vpop.xlane.xlu0 %1857
      %v1859 = vmul.f32 %v1855, %v764
      %v1860 = vmul.f32 %v1858, %v764
      %v1861 = vadd.f32 %v1859, 1e-05
      %v1862 = vadd.f32 %v1860, 1e-05
      %v1863 = vrsqrt.pop %v1861
      %v1864 = vrsqrt.pop %v1862
      %v1865 = vmul.f32 %v1849, %v1863
      %v1866 = vmul.f32 %v1850, %v1864
      %v1868 = vlaneseq
      %v1869 = vshrl.u32 %v1868, 7
      %v1870 = vsub.s32 0, %v1869
      %v1871 = vrot.slane %v1839, %v1870
      %v1873 = vmul.f32 %v1865, %v1871
      %v1874 = vmul.f32 %v1866, %v1871
      %v1876 = vlaneseq
      %v1877 = vshrl.u32 %v1876, 7
      %v1878 = vsub.s32 0, %v1877
      %v1879 = vrot.slane %v1840, %v1878
      %v1881 = vadd.f32 %v1873, %v1879
      %v1882 = vadd.f32 %v1874, %v1879
      %v1883 = vld [vmem:[%s11] sm:$0xff]
      %v1884 = vld [vmem:[%s11 + $0x8] sm:$0xff]
      %v1885 = vld [vmem:[%s11 + $0x10] sm:$0xff]
      %v1886 = vld [vmem:[%s11 + $0x18] sm:$0xff]
      %v1887 = vld [vmem:[%s12] sm:$0x1]
      %v1889 = vlaneseq
      %v1890 = vshrl.u32 %v1889, 7
      %v1891 = vsub.s32 0, %v1890
      %v1892 = vrot.slane %v1887, %v1891
      %v1895 = vsel %vm757, %v1881, 0
      %v1898 = vsel %vm757, %v1882, 0
      %1900 = vmatprep.subr.mxu0 0.0
      %1901 = vmatpush1.msra.mxu0 %v1883
      %1902 = vmatprep.subr.mxu0 0.0
      %1903 = vmatpush1.msra.mxu0 %v1884
      %1904 = vmatprep.subr.mxu0 0.0
      %1905 = vmatpush1.msra.mxu0 %v1885
      %1906 = vmatprep.subr.mxu0 0.0
      %1907 = vmatpush1.msra.mxu0 %v1886
      %1908 = vmatprep.subr.mxu0 0.0
      %1909 = vmatpush1.msra.mxu0 0.0
      %1910 = vmatprep.subr.mxu0 0.0
      %1911 = vmatpush1.msra.mxu0 0.0
      %1912 = vmatprep.subr.mxu0 0.0
      %1913 = vmatpush1.msra.mxu0 0.0
      %1914 = vmatprep.subr.mxu0 0.0
      %1915 = vmatpush1.msra.mxu0 0.0
      %1916 = vmatprep.subr.mxu0 0.0
      %1917 = vmatpush1.msra.mxu0 0.0
      %1918 = vmatprep.subr.mxu0 0.0
      %1919 = vmatpush1.msra.mxu0 0.0
      %1920 = vmatprep.subr.mxu0 0.0
      %1921 = vmatpush1.msra.mxu0 0.0
      %1922 = vmatprep.subr.mxu0 0.0
      %1923 = vmatpush1.msra.mxu0 0.0
      %1924 = vmatprep.subr.mxu0 0.0
      %1925 = vmatpush1.msra.mxu0 0.0
      %1926 = vmatprep.subr.mxu0 0.0
      %1927 = vmatpush1.msra.mxu0 0.0
      %1928 = vmatprep.subr.mxu0 0.0
      %1929 = vmatpush1.msra.mxu0 0.0
      %1930 = vmatprep.subr.mxu0 0.0
      %1931 = vmatpush1.msra.mxu0 0.0
      %1932 = vmatprep.subr.mxu0 0.0
      %1933 = vmatpush1.msra.mxu0 0.0
      %1934 = vmatprep.subr.mxu0 0.0
      %1935 = vmatpush1.msra.mxu0 0.0
      %1936 = vmatprep.subr.mxu0 0.0
      %1937 = vmatpush1.msra.mxu0 0.0
      %1938 = vmatprep.subr.mxu0 0.0
      %1939 = vmatpush1.msra.mxu0 0.0
      %1940 = vmatprep.subr.mxu0 0.0
      %1941 = vmatpush1.msra.mxu0 0.0
      %1942 = vmatprep.subr.mxu0 0.0
      %1943 = vmatpush1.msra.mxu0 0.0
      %1944 = vmatprep.subr.mxu0 0.0
      %1945 = vmatpush1.msra.mxu0 0.0
      %1946 = vmatprep.subr.mxu0 0.0
      %1947 = vmatpush1.msra.mxu0 0.0
      %1948 = vmatprep.subr.mxu0 0.0
      %1949 = vmatpush1.msra.mxu0 0.0
      %1950 = vmatprep.subr.mxu0 0.0
      %1951 = vmatpush1.msra.mxu0 0.0
      %1952 = vmatprep.subr.mxu0 0.0
      %1953 = vmatpush1.msra.mxu0 0.0
      %1954 = vmatprep.subr.mxu0 0.0
      %1955 = vmatpush1.msra.mxu0 0.0
      %1956 = vmatprep.subr.mxu0 0.0
      %1957 = vmatpush1.msra.mxu0 0.0
      %1958 = vmatprep.subr.mxu0 0.0
      %1959 = vmatpush1.msra.mxu0 0.0
      %1960 = vmatprep.subr.mxu0 0.0
      %1961 = vmatpush1.msra.mxu0 0.0
      %1962 = vmatprep.subr.mxu0 0.0
      %1963 = vmatpush1.msra.mxu0 0.0
      %1964 = vmatprep.mubr.f32.mxu0 0.0
      %1965 = vmatmul.mubr.f32.gmra.mrb[0].mxu0 %v1895
      %v1966 = vpop.f32.mrb[0].mxu0
      %v1967 = vadd.f32 %v1892, %v1966
      %v1968 = vpop.f32.mrb[0].mxu0
      %1969 = vmatprep.mubr.f32.mxu0 0.0
      %1970 = vmatmul.mubr.f32.gmra.mrb[0].mxu0 %v1898
      %v1971 = vpop.f32.mrb[0].mxu0
      %v1972 = vadd.f32 %v1892, %v1971
      %v1973 = vpop.f32.mrb[0].mxu0
      %1974 = vdwg.mxu0
      %v1975 = vsub.f32 0.0, %v1967
      %v1976 = vsub.f32 0.0, %v1972
      %v1977 = vmul.f32 %v1975, 1.442695
      %v1978 = vpow.pop %v1977
      %v1979 = vmul.f32 %v1976, 1.442695
      %v1980 = vpow.pop %v1979
      %v1981 = vadd.f32 %v1978, 1.0
      %v1982 = vadd.f32 %v1980, 1.0
      %v1983 = vrcp.pop %v1981
      %v1984 = vmul.f32 1.0, %v1983
      %v1985 = vrcp.pop %v1982
      %v1986 = vmul.f32 1.0, %v1985
      %v1987 = vmul.f32 %v1967, %v1984
      %v1988 = vmul.f32 %v1972, %v1986
      %v1989 = vld [vmem:[%s13] sm:$0xff]
      %v1990 = vld [vmem:[%s13 + $0x8] sm:$0xff]
      %v1991 = vld [vmem:[%s13 + $0x10] sm:$0xff]
      %v1992 = vld [vmem:[%s13 + $0x18] sm:$0xff]
      %v1993 = vld [vmem:[%s13 + $0x20] sm:$0xff]
      %v1994 = vld [vmem:[%s13 + $0x28] sm:$0xff]
      %v1995 = vld [vmem:[%s13 + $0x30] sm:$0xff]
      %v1996 = vld [vmem:[%s13 + $0x38] sm:$0xff]
      %v1997 = vld [vmem:[%s14] sm:$0x1]
      %v1999 = vlaneseq
      %v2000 = vshrl.u32 %v1999, 7
      %v2001 = vsub.s32 0, %v2000
      %v2002 = vrot.slane %v1997, %v2001
      %v2005 = vsel %vm673, %v1987, 0
      %v2008 = vsel %vm673, %v1988, 0
      %2010 = vmatprep.subr.mxu0 0.0
      %2011 = vmatpush1.msra.mxu0 %v1989
      %2012 = vmatprep.subr.mxu0 0.0
      %2013 = vmatpush1.msra.mxu0 %v1990
      %2014 = vmatprep.subr.mxu0 0.0
      %2015 = vmatpush1.msra.mxu0 %v1991
      %2016 = vmatprep.subr.mxu0 0.0
      %2017 = vmatpush1.msra.mxu0 %v1992
      %2018 = vmatprep.subr.mxu0 0.0
      %2019 = vmatpush1.msra.mxu0 %v1993
      %2020 = vmatprep.subr.mxu0 0.0
      %2021 = vmatpush1.msra.mxu0 %v1994
      %2022 = vmatprep.subr.mxu0 0.0
      %2023 = vmatpush1.msra.mxu0 %v1995
      %2024 = vmatprep.subr.mxu0 0.0
      %2025 = vmatpush1.msra.mxu0 %v1996
      %2026 = vmatprep.subr.mxu0 0.0
      %2027 = vmatpush1.msra.mxu0 0.0
      %2028 = vmatprep.subr.mxu0 0.0
      %2029 = vmatpush1.msra.mxu0 0.0
      %2030 = vmatprep.subr.mxu0 0.0
      %2031 = vmatpush1.msra.mxu0 0.0
      %2032 = vmatprep.subr.mxu0 0.0
      %2033 = vmatpush1.msra.mxu0 0.0
      %2034 = vmatprep.subr.mxu0 0.0
      %2035 = vmatpush1.msra.mxu0 0.0
      %2036 = vmatprep.subr.mxu0 0.0
      %2037 = vmatpush1.msra.mxu0 0.0
      %2038 = vmatprep.subr.mxu0 0.0
      %2039 = vmatpush1.msra.mxu0 0.0
      %2040 = vmatprep.subr.mxu0 0.0
      %2041 = vmatpush1.msra.mxu0 0.0
      %2042 = vmatprep.subr.mxu0 0.0
      %2043 = vmatpush1.msra.mxu0 0.0
      %2044 = vmatprep.subr.mxu0 0.0
      %2045 = vmatpush1.msra.mxu0 0.0
      %2046 = vmatprep.subr.mxu0 0.0
      %2047 = vmatpush1.msra.mxu0 0.0
      %2048 = vmatprep.subr.mxu0 0.0
      %2049 = vmatpush1.msra.mxu0 0.0
      %2050 = vmatprep.subr.mxu0 0.0
      %2051 = vmatpush1.msra.mxu0 0.0
      %2052 = vmatprep.subr.mxu0 0.0
      %2053 = vmatpush1.msra.mxu0 0.0
      %2054 = vmatprep.subr.mxu0 0.0
      %2055 = vmatpush1.msra.mxu0 0.0
      %2056 = vmatprep.subr.mxu0 0.0
      %2057 = vmatpush1.msra.mxu0 0.0
      %2058 = vmatprep.subr.mxu0 0.0
      %2059 = vmatpush1.msra.mxu0 0.0
      %2060 = vmatprep.subr.mxu0 0.0
      %2061 = vmatpush1.msra.mxu0 0.0
      %2062 = vmatprep.subr.mxu0 0.0
      %2063 = vmatpush1.msra.mxu0 0.0
      %2064 = vmatprep.subr.mxu0 0.0
      %2065 = vmatpush1.msra.mxu0 0.0
      %2066 = vmatprep.subr.mxu0 0.0
      %2067 = vmatpush1.msra.mxu0 0.0
      %2068 = vmatprep.subr.mxu0 0.0
      %2069 = vmatpush1.msra.mxu0 0.0
      %2070 = vmatprep.subr.mxu0 0.0
      %2071 = vmatpush1.msra.mxu0 0.0
      %2072 = vmatprep.subr.mxu0 0.0
      %2073 = vmatpush1.msra.mxu0 0.0
      %2074 = vmatprep.mubr.f32.mxu0 0.0
      %2075 = vmatmul.mubr.f32.gmra.mrb[0].mxu0 %v2005
      %v2076 = vpop.f32.mrb[0].mxu0
      %v2077 = vadd.f32 %v2002, %v2076
      %v2078 = vpop.f32.mrb[0].mxu0
      %2079 = vmatprep.mubr.f32.mxu0 0.0
      %2080 = vmatmul.mubr.f32.gmra.mrb[0].mxu0 %v2008
      %v2081 = vpop.f32.mrb[0].mxu0
      %v2082 = vadd.f32 %v2002, %v2081
      %v2083 = vpop.f32.mrb[0].mxu0
      %2084 = vdwg.mxu0
      %v2085 = vmul.f32 %v2077, %v1828
      %v2086 = vmul.f32 %v2082, %v1833
      %v2087 = vadd.f32 %v1837, %v2085
      %v2088 = vadd.f32 %v1838, %v2086
      %s2089 = scalar_lea.vmem %s4, 1
      %v2090 = vld [vmem:[%s2089] sm:$0x1]
      %s2091 = scalar_lea.vmem %s5, 1
      %v2092 = vld [vmem:[%s2091] sm:$0x1]
      %v2093 = vsel %vm757, %v2087, 0.0
      %2094 = vadd.xlane.f32.xlu0 %v2093
      %v2095 = vpop.xlane.xlu0 %2094
      %v2096 = vsel %vm757, %v2088, 0.0
      %2097 = vadd.xlane.f32.xlu0 %v2096
      %v2098 = vpop.xlane.xlu0 %2097
      %v2099 = vmul.f32 %v2095, %v764
      %v2100 = vmul.f32 %v2098, %v764
      %v2101 = vsub.f32 %v2087, %v2099
      %v2102 = vsub.f32 %v2088, %v2100
      %v2103 = vmul.f32 %v2101, %v2101
      %v2104 = vmul.f32 %v2102, %v2102
      %v2105 = vsel %vm757, %v2103, 0.0
      %2106 = vadd.xlane.f32.xlu0 %v2105
      %v2107 = vpop.xlane.xlu0 %2106
      %v2108 = vsel %vm757, %v2104, 0.0
      %2109 = vadd.xlane.f32.xlu0 %v2108
      %v2110 = vpop.xlane.xlu0 %2109
      %v2111 = vmul.f32 %v2107, %v764
      %v2112 = vmul.f32 %v2110, %v764
      %v2113 = vadd.f32 %v2111, 1e-05
      %v2114 = vadd.f32 %v2112, 1e-05
      %v2115 = vrsqrt.pop %v2113
      %v2116 = vrsqrt.pop %v2114
      %v2117 = vmul.f32 %v2101, %v2115
      %v2118 = vmul.f32 %v2102, %v2116
      %v2120 = vlaneseq
      %v2121 = vshrl.u32 %v2120, 7
      %v2122 = vsub.s32 0, %v2121
      %v2123 = vrot.slane %v2090, %v2122
      %v2125 = vmul.f32 %v2117, %v2123
      %v2126 = vmul.f32 %v2118, %v2123
      %v2128 = vlaneseq
      %v2129 = vshrl.u32 %v2128, 7
      %v2130 = vsub.s32 0, %v2129
      %v2131 = vrot.slane %v2092, %v2130
      %v2133 = vadd.f32 %v2125, %v2131
      %v2134 = vadd.f32 %v2126, %v2131
      %s2135 = scalar_lea.vmem %s6, 32
      %v2136 = vld [vmem:[%s2135] sm:$0xff]
      %v2137 = vld [vmem:[%s2135 + $0x8] sm:$0xff]
      %v2138 = vld [vmem:[%s2135 + $0x10] sm:$0xff]
      %v2139 = vld [vmem:[%s2135 + $0x18] sm:$0xff]
      %v2141 = vsel %vm757, %v2133, 0
      %v2144 = vsel %vm757, %v2134, 0
      %2146 = vmatprep.subr.mxu0 0.0
      %2147 = vmatpush1.msra.mxu0 %v2136
      %2148 = vmatprep.subr.mxu0 0.0
      %2149 = vmatpush1.msra.mxu0 %v2137
      %2150 = vmatprep.subr.mxu0 0.0
      %2151 = vmatpush1.msra.mxu0 %v2138
      %2152 = vmatprep.subr.mxu0 0.0
      %2153 = vmatpush1.msra.mxu0 %v2139
      %2154 = vmatprep.subr.mxu0 0.0
      %2155 = vmatpush1.msra.mxu0 0.0
      %2156 = vmatprep.subr.mxu0 0.0
      %2157 = vmatpush1.msra.mxu0 0.0
      %2158 = vmatprep.subr.mxu0 0.0
      %2159 = vmatpush1.msra.mxu0 0.0
      %2160 = vmatprep.subr.mxu0 0.0
      %2161 = vmatpush1.msra.mxu0 0.0
      %2162 = vmatprep.subr.mxu0 0.0
      %2163 = vmatpush1.msra.mxu0 0.0
      %2164 = vmatprep.subr.mxu0 0.0
      %2165 = vmatpush1.msra.mxu0 0.0
      %2166 = vmatprep.subr.mxu0 0.0
      %2167 = vmatpush1.msra.mxu0 0.0
      %2168 = vmatprep.subr.mxu0 0.0
      %2169 = vmatpush1.msra.mxu0 0.0
      %2170 = vmatprep.subr.mxu0 0.0
      %2171 = vmatpush1.msra.mxu0 0.0
      %2172 = vmatprep.subr.mxu0 0.0
      %2173 = vmatpush1.msra.mxu0 0.0
      %2174 = vmatprep.subr.mxu0 0.0
      %2175 = vmatpush1.msra.mxu0 0.0
      %2176 = vmatprep.subr.mxu0 0.0
      %2177 = vmatpush1.msra.mxu0 0.0
      %2178 = vmatprep.subr.mxu0 0.0
      %2179 = vmatpush1.msra.mxu0 0.0
      %2180 = vmatprep.subr.mxu0 0.0
      %2181 = vmatpush1.msra.mxu0 0.0
      %2182 = vmatprep.subr.mxu0 0.0
      %2183 = vmatpush1.msra.mxu0 0.0
      %2184 = vmatprep.subr.mxu0 0.0
      %2185 = vmatpush1.msra.mxu0 0.0
      %2186 = vmatprep.subr.mxu0 0.0
      %2187 = vmatpush1.msra.mxu0 0.0
      %2188 = vmatprep.subr.mxu0 0.0
      %2189 = vmatpush1.msra.mxu0 0.0
      %2190 = vmatprep.subr.mxu0 0.0
      %2191 = vmatpush1.msra.mxu0 0.0
      %2192 = vmatprep.subr.mxu0 0.0
      %2193 = vmatpush1.msra.mxu0 0.0
      %2194 = vmatprep.subr.mxu0 0.0
      %2195 = vmatpush1.msra.mxu0 0.0
      %2196 = vmatprep.subr.mxu0 0.0
      %2197 = vmatpush1.msra.mxu0 0.0
      %2198 = vmatprep.subr.mxu0 0.0
      %2199 = vmatpush1.msra.mxu0 0.0
      %2200 = vmatprep.subr.mxu0 0.0
      %2201 = vmatpush1.msra.mxu0 0.0
      %2202 = vmatprep.subr.mxu0 0.0
      %2203 = vmatpush1.msra.mxu0 0.0
      %2204 = vmatprep.subr.mxu0 0.0
      %2205 = vmatpush1.msra.mxu0 0.0
      %2206 = vmatprep.subr.mxu0 0.0
      %2207 = vmatpush1.msra.mxu0 0.0
      %2208 = vmatprep.subr.mxu0 0.0
      %2209 = vmatpush1.msra.mxu0 0.0
      %2210 = vmatprep.mubr.f32.mxu0 0.0
      %2211 = vmatmul.mubr.f32.gmra.mrb[0].mxu0 %v2141
      %v2212 = vpop.f32.mrb[0].mxu0
      %v2213 = vadd.f32 0.0, %v2212
      %v2214 = vpop.f32.mrb[0].mxu0
      %2215 = vmatprep.mubr.f32.mxu0 0.0
      %2216 = vmatmul.mubr.f32.gmra.mrb[0].mxu0 %v2144
      %v2217 = vpop.f32.mrb[0].mxu0
      %v2218 = vadd.f32 0.0, %v2217
      %v2219 = vpop.f32.mrb[0].mxu0
      %2220 = vdwg.mxu0
      %2223 = vrot.lane.b32.xlu0 %v2213, 120
      %v2224 = vpop.permute.xlu0 %2223
      %2225 = vrot.lane.b32.xlu0 %v2218, 120
      %v2226 = vpop.permute.xlu0 %2225
      %2227 = vrot.lane.b32.xlu0 %v2213, 112
      %v2228 = vpop.permute.xlu0 %2227
      %2229 = vrot.lane.b32.xlu0 %v2218, 112
      %v2230 = vpop.permute.xlu0 %2229
      %2231 = vrot.lane.b32.xlu0 %v2213, 104
      %v2232 = vpop.permute.xlu0 %2231
      %2233 = vrot.lane.b32.xlu0 %v2218, 104
      %v2234 = vpop.permute.xlu0 %2233
      %2235 = vrot.lane.b32.xlu0 %v2213, 96
      %v2236 = vpop.permute.xlu0 %2235
      %2237 = vrot.lane.b32.xlu0 %v2218, 96
      %v2238 = vpop.permute.xlu0 %2237
      %v2239 = vsel %vm904, %v2213, 0
      %v2241 = vsel %vm904, %v2218, 0
      %v2243 = vsel %vm904, %v2236, 0
      %v2245 = vsel %vm904, %v2238, 0
      %2247 = vmatprep.subr.mxu0 0.0
      %2248 = vmatpush1.xpose.msra.mxu0 %v2243
      %2249 = vmatprep.subr.mxu0 0.0
      %2250 = vmatpush1.xpose.msra.mxu0 %v2245
      %2251 = vmatprep.subr.mxu0 0.0
      %2252 = vmatpush1.xpose.msra.mxu0 0.0
      %2253 = vmatprep.subr.mxu0 0.0
      %2254 = vmatpush1.xpose.msra.mxu0 0.0
      %2255 = vmatprep.subr.mxu0 0.0
      %2256 = vmatpush1.xpose.msra.mxu0 0.0
      %2257 = vmatprep.subr.mxu0 0.0
      %2258 = vmatpush1.xpose.msra.mxu0 0.0
      %2259 = vmatprep.subr.mxu0 0.0
      %2260 = vmatpush1.xpose.msra.mxu0 0.0
      %2261 = vmatprep.subr.mxu0 0.0
      %2262 = vmatpush1.xpose.msra.mxu0 0.0
      %2263 = vmatprep.subr.mxu0 0.0
      %2264 = vmatpush1.xpose.msra.mxu0 0.0
      %2265 = vmatprep.subr.mxu0 0.0
      %2266 = vmatpush1.xpose.msra.mxu0 0.0
      %2267 = vmatprep.subr.mxu0 0.0
      %2268 = vmatpush1.xpose.msra.mxu0 0.0
      %2269 = vmatprep.subr.mxu0 0.0
      %2270 = vmatpush1.xpose.msra.mxu0 0.0
      %2271 = vmatprep.subr.mxu0 0.0
      %2272 = vmatpush1.xpose.msra.mxu0 0.0
      %2273 = vmatprep.subr.mxu0 0.0
      %2274 = vmatpush1.xpose.msra.mxu0 0.0
      %2275 = vmatprep.subr.mxu0 0.0
      %2276 = vmatpush1.xpose.msra.mxu0 0.0
      %2277 = vmatprep.subr.mxu0 0.0
      %2278 = vmatpush1.xpose.msra.mxu0 0.0
      %2279 = vmatprep.subr.mxu0 0.0
      %2280 = vmatpush1.xpose.msra.mxu0 0.0
      %2281 = vmatprep.subr.mxu0 0.0
      %2282 = vmatpush1.xpose.msra.mxu0 0.0
      %2283 = vmatprep.subr.mxu0 0.0
      %2284 = vmatpush1.xpose.msra.mxu0 0.0
      %2285 = vmatprep.subr.mxu0 0.0
      %2286 = vmatpush1.xpose.msra.mxu0 0.0
      %2287 = vmatprep.subr.mxu0 0.0
      %2288 = vmatpush1.xpose.msra.mxu0 0.0
      %2289 = vmatprep.subr.mxu0 0.0
      %2290 = vmatpush1.xpose.msra.mxu0 0.0
      %2291 = vmatprep.subr.mxu0 0.0
      %2292 = vmatpush1.xpose.msra.mxu0 0.0
      %2293 = vmatprep.subr.mxu0 0.0
      %2294 = vmatpush1.xpose.msra.mxu0 0.0
      %2295 = vmatprep.subr.mxu0 0.0
      %2296 = vmatpush1.xpose.msra.mxu0 0.0
      %2297 = vmatprep.subr.mxu0 0.0
      %2298 = vmatpush1.xpose.msra.mxu0 0.0
      %2299 = vmatprep.subr.mxu0 0.0
      %2300 = vmatpush1.xpose.msra.mxu0 0.0
      %2301 = vmatprep.subr.mxu0 0.0
      %2302 = vmatpush1.xpose.msra.mxu0 0.0
      %2303 = vmatprep.subr.mxu0 0.0
      %2304 = vmatpush1.xpose.msra.mxu0 0.0
      %2305 = vmatprep.subr.mxu0 0.0
      %2306 = vmatpush1.xpose.msra.mxu0 0.0
      %2307 = vmatprep.subr.mxu0 0.0
      %2308 = vmatpush1.xpose.msra.mxu0 0.0
      %2309 = vmatprep.subr.mxu0 0.0
      %2310 = vmatpush1.xpose.msra.mxu0 0.0
      %2311 = vmatprep.mubr.f32.mxu0 0.0
      %2312 = vmatmul.mubr.f32.gmra.mrb[0].mxu0 %v2239
      %v2313 = vpop.f32.mrb[0].mxu0
      %v2314 = vadd.f32 0.0, %v2313
      %v2315 = vpop.f32.mrb[0].mxu0
      %2316 = vmatprep.mubr.f32.mxu0 0.0
      %2317 = vmatmul.mubr.f32.gmra.mrb[0].mxu0 %v2241
      %v2318 = vpop.f32.mrb[0].mxu0
      %v2319 = vadd.f32 0.0, %v2318
      %v2320 = vpop.f32.mrb[0].mxu0
      %2321 = vdwg.mxu0
      %2322 = vrot.lane.b32.xlu0 %v2224, 96
      %v2323 = vpop.permute.xlu0 %2322
      %2324 = vrot.lane.b32.xlu0 %v2226, 96
      %v2325 = vpop.permute.xlu0 %2324
      %v2326 = vsel %vm904, %v2224, 0
      %v2328 = vsel %vm904, %v2226, 0
      %v2330 = vsel %vm904, %v2323, 0
      %v2332 = vsel %vm904, %v2325, 0
      %2334 = vmatprep.subr.mxu0 0.0
      %2335 = vmatpush1.xpose.msra.mxu0 %v2330
      %2336 = vmatprep.subr.mxu0 0.0
      %2337 = vmatpush1.xpose.msra.mxu0 %v2332
      %2338 = vmatprep.subr.mxu0 0.0
      %2339 = vmatpush1.xpose.msra.mxu0 0.0
      %2340 = vmatprep.subr.mxu0 0.0
      %2341 = vmatpush1.xpose.msra.mxu0 0.0
      %2342 = vmatprep.subr.mxu0 0.0
      %2343 = vmatpush1.xpose.msra.mxu0 0.0
      %2344 = vmatprep.subr.mxu0 0.0
      %2345 = vmatpush1.xpose.msra.mxu0 0.0
      %2346 = vmatprep.subr.mxu0 0.0
      %2347 = vmatpush1.xpose.msra.mxu0 0.0
      %2348 = vmatprep.subr.mxu0 0.0
      %2349 = vmatpush1.xpose.msra.mxu0 0.0
      %2350 = vmatprep.subr.mxu0 0.0
      %2351 = vmatpush1.xpose.msra.mxu0 0.0
      %2352 = vmatprep.subr.mxu0 0.0
      %2353 = vmatpush1.xpose.msra.mxu0 0.0
      %2354 = vmatprep.subr.mxu0 0.0
      %2355 = vmatpush1.xpose.msra.mxu0 0.0
      %2356 = vmatprep.subr.mxu0 0.0
      %2357 = vmatpush1.xpose.msra.mxu0 0.0
      %2358 = vmatprep.subr.mxu0 0.0
      %2359 = vmatpush1.xpose.msra.mxu0 0.0
      %2360 = vmatprep.subr.mxu0 0.0
      %2361 = vmatpush1.xpose.msra.mxu0 0.0
      %2362 = vmatprep.subr.mxu0 0.0
      %2363 = vmatpush1.xpose.msra.mxu0 0.0
      %2364 = vmatprep.subr.mxu0 0.0
      %2365 = vmatpush1.xpose.msra.mxu0 0.0
      %2366 = vmatprep.subr.mxu0 0.0
      %2367 = vmatpush1.xpose.msra.mxu0 0.0
      %2368 = vmatprep.subr.mxu0 0.0
      %2369 = vmatpush1.xpose.msra.mxu0 0.0
      %2370 = vmatprep.subr.mxu0 0.0
      %2371 = vmatpush1.xpose.msra.mxu0 0.0
      %2372 = vmatprep.subr.mxu0 0.0
      %2373 = vmatpush1.xpose.msra.mxu0 0.0
      %2374 = vmatprep.subr.mxu0 0.0
      %2375 = vmatpush1.xpose.msra.mxu0 0.0
      %2376 = vmatprep.subr.mxu0 0.0
      %2377 = vmatpush1.xpose.msra.mxu0 0.0
      %2378 = vmatprep.subr.mxu0 0.0
      %2379 = vmatpush1.xpose.msra.mxu0 0.0
      %2380 = vmatprep.subr.mxu0 0.0
      %2381 = vmatpush1.xpose.msra.mxu0 0.0
      %2382 = vmatprep.subr.mxu0 0.0
      %2383 = vmatpush1.xpose.msra.mxu0 0.0
      %2384 = vmatprep.subr.mxu0 0.0
      %2385 = vmatpush1.xpose.msra.mxu0 0.0
      %2386 = vmatprep.subr.mxu0 0.0
      %2387 = vmatpush1.xpose.msra.mxu0 0.0
      %2388 = vmatprep.subr.mxu0 0.0
      %2389 = vmatpush1.xpose.msra.mxu0 0.0
      %2390 = vmatprep.subr.mxu0 0.0
      %2391 = vmatpush1.xpose.msra.mxu0 0.0
      %2392 = vmatprep.subr.mxu0 0.0
      %2393 = vmatpush1.xpose.msra.mxu0 0.0
      %2394 = vmatprep.subr.mxu0 0.0
      %2395 = vmatpush1.xpose.msra.mxu0 0.0
      %2396 = vmatprep.subr.mxu0 0.0
      %2397 = vmatpush1.xpose.msra.mxu0 0.0
      %2398 = vmatprep.mubr.f32.mxu0 0.0
      %2399 = vmatmul.mubr.f32.gmra.mrb[0].mxu0 %v2326
      %v2400 = vpop.f32.mrb[0].mxu0
      %v2401 = vadd.f32 0.0, %v2400
      %v2402 = vpop.f32.mrb[0].mxu0
      %2403 = vmatprep.mubr.f32.mxu0 0.0
      %2404 = vmatmul.mubr.f32.gmra.mrb[0].mxu0 %v2328
      %v2405 = vpop.f32.mrb[0].mxu0
      %v2406 = vadd.f32 0.0, %v2405
      %v2407 = vpop.f32.mrb[0].mxu0
      %2408 = vdwg.mxu0
      %2409 = vrot.lane.b32.xlu0 %v2228, 96
      %v2410 = vpop.permute.xlu0 %2409
      %2411 = vrot.lane.b32.xlu0 %v2230, 96
      %v2412 = vpop.permute.xlu0 %2411
      %v2413 = vsel %vm904, %v2228, 0
      %v2415 = vsel %vm904, %v2230, 0
      %v2417 = vsel %vm904, %v2410, 0
      %v2419 = vsel %vm904, %v2412, 0
      %2421 = vmatprep.subr.mxu0 0.0
      %2422 = vmatpush1.xpose.msra.mxu0 %v2417
      %2423 = vmatprep.subr.mxu0 0.0
      %2424 = vmatpush1.xpose.msra.mxu0 %v2419
      %2425 = vmatprep.subr.mxu0 0.0
      %2426 = vmatpush1.xpose.msra.mxu0 0.0
      %2427 = vmatprep.subr.mxu0 0.0
      %2428 = vmatpush1.xpose.msra.mxu0 0.0
      %2429 = vmatprep.subr.mxu0 0.0
      %2430 = vmatpush1.xpose.msra.mxu0 0.0
      %2431 = vmatprep.subr.mxu0 0.0
      %2432 = vmatpush1.xpose.msra.mxu0 0.0
      %2433 = vmatprep.subr.mxu0 0.0
      %2434 = vmatpush1.xpose.msra.mxu0 0.0
      %2435 = vmatprep.subr.mxu0 0.0
      %2436 = vmatpush1.xpose.msra.mxu0 0.0
      %2437 = vmatprep.subr.mxu0 0.0
      %2438 = vmatpush1.xpose.msra.mxu0 0.0
      %2439 = vmatprep.subr.mxu0 0.0
      %2440 = vmatpush1.xpose.msra.mxu0 0.0
      %2441 = vmatprep.subr.mxu0 0.0
      %2442 = vmatpush1.xpose.msra.mxu0 0.0
      %2443 = vmatprep.subr.mxu0 0.0
      %2444 = vmatpush1.xpose.msra.mxu0 0.0
      %2445 = vmatprep.subr.mxu0 0.0
      %2446 = vmatpush1.xpose.msra.mxu0 0.0
      %2447 = vmatprep.subr.mxu0 0.0
      %2448 = vmatpush1.xpose.msra.mxu0 0.0
      %2449 = vmatprep.subr.mxu0 0.0
      %2450 = vmatpush1.xpose.msra.mxu0 0.0
      %2451 = vmatprep.subr.mxu0 0.0
      %2452 = vmatpush1.xpose.msra.mxu0 0.0
      %2453 = vmatprep.subr.mxu0 0.0
      %2454 = vmatpush1.xpose.msra.mxu0 0.0
      %2455 = vmatprep.subr.mxu0 0.0
      %2456 = vmatpush1.xpose.msra.mxu0 0.0
      %2457 = vmatprep.subr.mxu0 0.0
      %2458 = vmatpush1.xpose.msra.mxu0 0.0
      %2459 = vmatprep.subr.mxu0 0.0
      %2460 = vmatpush1.xpose.msra.mxu0 0.0
      %2461 = vmatprep.subr.mxu0 0.0
      %2462 = vmatpush1.xpose.msra.mxu0 0.0
      %2463 = vmatprep.subr.mxu0 0.0
      %2464 = vmatpush1.xpose.msra.mxu0 0.0
      %2465 = vmatprep.subr.mxu0 0.0
      %2466 = vmatpush1.xpose.msra.mxu0 0.0
      %2467 = vmatprep.subr.mxu0 0.0
      %2468 = vmatpush1.xpose.msra.mxu0 0.0
      %2469 = vmatprep.subr.mxu0 0.0
      %2470 = vmatpush1.xpose.msra.mxu0 0.0
      %2471 = vmatprep.subr.mxu0 0.0
      %2472 = vmatpush1.xpose.msra.mxu0 0.0
      %2473 = vmatprep.subr.mxu0 0.0
      %2474 = vmatpush1.xpose.msra.mxu0 0.0
      %2475 = vmatprep.subr.mxu0 0.0
      %2476 = vmatpush1.xpose.msra.mxu0 0.0
      %2477 = vmatprep.subr.mxu0 0.0
      %2478 = vmatpush1.xpose.msra.mxu0 0.0
      %2479 = vmatprep.subr.mxu0 0.0
      %2480 = vmatpush1.xpose.msra.mxu0 0.0
      %2481 = vmatprep.subr.mxu0 0.0
      %2482 = vmatpush1.xpose.msra.mxu0 0.0
      %2483 = vmatprep.subr.mxu0 0.0
      %2484 = vmatpush1.xpose.msra.mxu0 0.0
      %2485 = vmatprep.mubr.f32.mxu0 0.0
      %2486 = vmatmul.mubr.f32.gmra.mrb[0].mxu0 %v2413
      %v2487 = vpop.f32.mrb[0].mxu0
      %v2488 = vadd.f32 0.0, %v2487
      %v2489 = vpop.f32.mrb[0].mxu0
      %2490 = vmatprep.mubr.f32.mxu0 0.0
      %2491 = vmatmul.mubr.f32.gmra.mrb[0].mxu0 %v2415
      %v2492 = vpop.f32.mrb[0].mxu0
      %v2493 = vadd.f32 0.0, %v2492
      %v2494 = vpop.f32.mrb[0].mxu0
      %2495 = vdwg.mxu0
      %2496 = vrot.lane.b32.xlu0 %v2232, 96
      %v2497 = vpop.permute.xlu0 %2496
      %2498 = vrot.lane.b32.xlu0 %v2234, 96
      %v2499 = vpop.permute.xlu0 %2498
      %v2500 = vsel %vm904, %v2232, 0
      %v2502 = vsel %vm904, %v2234, 0
      %v2504 = vsel %vm904, %v2497, 0
      %v2506 = vsel %vm904, %v2499, 0
      %2508 = vmatprep.subr.mxu0 0.0
      %2509 = vmatpush1.xpose.msra.mxu0 %v2504
      %2510 = vmatprep.subr.mxu0 0.0
      %2511 = vmatpush1.xpose.msra.mxu0 %v2506
      %2512 = vmatprep.subr.mxu0 0.0
      %2513 = vmatpush1.xpose.msra.mxu0 0.0
      %2514 = vmatprep.subr.mxu0 0.0
      %2515 = vmatpush1.xpose.msra.mxu0 0.0
      %2516 = vmatprep.subr.mxu0 0.0
      %2517 = vmatpush1.xpose.msra.mxu0 0.0
      %2518 = vmatprep.subr.mxu0 0.0
      %2519 = vmatpush1.xpose.msra.mxu0 0.0
      %2520 = vmatprep.subr.mxu0 0.0
      %2521 = vmatpush1.xpose.msra.mxu0 0.0
      %2522 = vmatprep.subr.mxu0 0.0
      %2523 = vmatpush1.xpose.msra.mxu0 0.0
      %2524 = vmatprep.subr.mxu0 0.0
      %2525 = vmatpush1.xpose.msra.mxu0 0.0
      %2526 = vmatprep.subr.mxu0 0.0
      %2527 = vmatpush1.xpose.msra.mxu0 0.0
      %2528 = vmatprep.subr.mxu0 0.0
      %2529 = vmatpush1.xpose.msra.mxu0 0.0
      %2530 = vmatprep.subr.mxu0 0.0
      %2531 = vmatpush1.xpose.msra.mxu0 0.0
      %2532 = vmatprep.subr.mxu0 0.0
      %2533 = vmatpush1.xpose.msra.mxu0 0.0
      %2534 = vmatprep.subr.mxu0 0.0
      %2535 = vmatpush1.xpose.msra.mxu0 0.0
      %2536 = vmatprep.subr.mxu0 0.0
      %2537 = vmatpush1.xpose.msra.mxu0 0.0
      %2538 = vmatprep.subr.mxu0 0.0
      %2539 = vmatpush1.xpose.msra.mxu0 0.0
      %2540 = vmatprep.subr.mxu0 0.0
      %2541 = vmatpush1.xpose.msra.mxu0 0.0
      %2542 = vmatprep.subr.mxu0 0.0
      %2543 = vmatpush1.xpose.msra.mxu0 0.0
      %2544 = vmatprep.subr.mxu0 0.0
      %2545 = vmatpush1.xpose.msra.mxu0 0.0
      %2546 = vmatprep.subr.mxu0 0.0
      %2547 = vmatpush1.xpose.msra.mxu0 0.0
      %2548 = vmatprep.subr.mxu0 0.0
      %2549 = vmatpush1.xpose.msra.mxu0 0.0
      %2550 = vmatprep.subr.mxu0 0.0
      %2551 = vmatpush1.xpose.msra.mxu0 0.0
      %2552 = vmatprep.subr.mxu0 0.0
      %2553 = vmatpush1.xpose.msra.mxu0 0.0
      %2554 = vmatprep.subr.mxu0 0.0
      %2555 = vmatpush1.xpose.msra.mxu0 0.0
      %2556 = vmatprep.subr.mxu0 0.0
      %2557 = vmatpush1.xpose.msra.mxu0 0.0
      %2558 = vmatprep.subr.mxu0 0.0
      %2559 = vmatpush1.xpose.msra.mxu0 0.0
      %2560 = vmatprep.subr.mxu0 0.0
      %2561 = vmatpush1.xpose.msra.mxu0 0.0
      %2562 = vmatprep.subr.mxu0 0.0
      %2563 = vmatpush1.xpose.msra.mxu0 0.0
      %2564 = vmatprep.subr.mxu0 0.0
      %2565 = vmatpush1.xpose.msra.mxu0 0.0
      %2566 = vmatprep.subr.mxu0 0.0
      %2567 = vmatpush1.xpose.msra.mxu0 0.0
      %2568 = vmatprep.subr.mxu0 0.0
      %2569 = vmatpush1.xpose.msra.mxu0 0.0
      %2570 = vmatprep.subr.mxu0 0.0
      %2571 = vmatpush1.xpose.msra.mxu0 0.0
      %2572 = vmatprep.mubr.f32.mxu0 0.0
      %2573 = vmatmul.mubr.f32.gmra.mrb[0].mxu0 %v2500
      %v2574 = vpop.f32.mrb[0].mxu0
      %v2575 = vadd.f32 0.0, %v2574
      %v2576 = vpop.f32.mrb[0].mxu0
      %2577 = vmatprep.mubr.f32.mxu0 0.0
      %2578 = vmatmul.mubr.f32.gmra.mrb[0].mxu0 %v2502
      %v2579 = vpop.f32.mrb[0].mxu0
      %v2580 = vadd.f32 0.0, %v2579
      %v2581 = vpop.f32.mrb[0].mxu0
      %2582 = vdwg.mxu0
      %v2583 = vmul.f32 %v2314, 0.17677669
      %v2584 = vmul.f32 %v2319, 0.17677669
      %v2585 = vmul.f32 %v2401, 0.17677669
      %v2586 = vmul.f32 %v2406, 0.17677669
      %v2587 = vmul.f32 %v2488, 0.17677669
      %v2588 = vmul.f32 %v2493, 0.17677669
      %v2589 = vmul.f32 %v2575, 0.17677669
      %v2590 = vmul.f32 %v2580, 0.17677669
      %v2591 = vadd.f32 %v2583, %v657
      %v2592 = vadd.f32 %v2584, %v658
      %v2593 = vadd.f32 %v2585, %v659
      %v2594 = vadd.f32 %v2586, %v660
      %v2595 = vadd.f32 %v2587, %v661
      %v2596 = vadd.f32 %v2588, %v662
      %v2597 = vadd.f32 %v2589, %v663
      %v2598 = vadd.f32 %v2590, %v664
      %v2599 = vsel %vm1265, %v2591, -inf
      %2600 = vmax.xlane.f32.xlu0 %v2599
      %v2601 = vpop.xlane.xlu0 %2600
      %v2602 = vsel %vm1265, %v2592, -inf
      %2603 = vmax.xlane.f32.xlu0 %v2602
      %v2604 = vpop.xlane.xlu0 %2603
      %v2605 = vsel %vm1265, %v2593, -inf
      %2606 = vmax.xlane.f32.xlu0 %v2605
      %v2607 = vpop.xlane.xlu0 %2606
      %v2608 = vsel %vm1265, %v2594, -inf
      %2609 = vmax.xlane.f32.xlu0 %v2608
      %v2610 = vpop.xlane.xlu0 %2609
      %v2611 = vsel %vm1265, %v2595, -inf
      %2612 = vmax.xlane.f32.xlu0 %v2611
      %v2613 = vpop.xlane.xlu0 %2612
      %v2614 = vsel %vm1265, %v2596, -inf
      %2615 = vmax.xlane.f32.xlu0 %v2614
      %v2616 = vpop.xlane.xlu0 %2615
      %v2617 = vsel %vm1265, %v2597, -inf
      %2618 = vmax.xlane.f32.xlu0 %v2617
      %v2619 = vpop.xlane.xlu0 %2618
      %v2620 = vsel %vm1265, %v2598, -inf
      %2621 = vmax.xlane.f32.xlu0 %v2620
      %v2622 = vpop.xlane.xlu0 %2621
      %v2623 = vsub.f32 %v2591, %v2601
      %v2624 = vsub.f32 %v2592, %v2604
      %v2625 = vsub.f32 %v2593, %v2607
      %v2626 = vsub.f32 %v2594, %v2610
      %v2627 = vsub.f32 %v2595, %v2613
      %v2628 = vsub.f32 %v2596, %v2616
      %v2629 = vsub.f32 %v2597, %v2619
      %v2630 = vsub.f32 %v2598, %v2622
      %v2631 = vmul.f32 %v2623, 1.442695
      %v2632 = vpow.pop %v2631
      %v2633 = vmul.f32 %v2624, 1.442695
      %v2634 = vpow.pop %v2633
      %v2635 = vmul.f32 %v2625, 1.442695
      %v2636 = vpow.pop %v2635
      %v2637 = vmul.f32 %v2626, 1.442695
      %v2638 = vpow.pop %v2637
      %v2639 = vmul.f32 %v2627, 1.442695
      %v2640 = vpow.pop %v2639
      %v2641 = vmul.f32 %v2628, 1.442695
      %v2642 = vpow.pop %v2641
      %v2643 = vmul.f32 %v2629, 1.442695
      %v2644 = vpow.pop %v2643
      %v2645 = vmul.f32 %v2630, 1.442695
      %v2646 = vpow.pop %v2645
      %v2647 = vsel %vm1265, %v2632, 0.0
      %2648 = vadd.xlane.f32.xlu0 %v2647
      %v2649 = vpop.xlane.xlu0 %2648
      %v2650 = vsel %vm1265, %v2634, 0.0
      %2651 = vadd.xlane.f32.xlu0 %v2650
      %v2652 = vpop.xlane.xlu0 %2651
      %v2653 = vsel %vm1265, %v2636, 0.0
      %2654 = vadd.xlane.f32.xlu0 %v2653
      %v2655 = vpop.xlane.xlu0 %2654
      %v2656 = vsel %vm1265, %v2638, 0.0
      %2657 = vadd.xlane.f32.xlu0 %v2656
      %v2658 = vpop.xlane.xlu0 %2657
      %v2659 = vsel %vm1265, %v2640, 0.0
      %2660 = vadd.xlane.f32.xlu0 %v2659
      %v2661 = vpop.xlane.xlu0 %2660
      %v2662 = vsel %vm1265, %v2642, 0.0
      %2663 = vadd.xlane.f32.xlu0 %v2662
      %v2664 = vpop.xlane.xlu0 %2663
      %v2665 = vsel %vm1265, %v2644, 0.0
      %2666 = vadd.xlane.f32.xlu0 %v2665
      %v2667 = vpop.xlane.xlu0 %2666
      %v2668 = vsel %vm1265, %v2646, 0.0
      %2669 = vadd.xlane.f32.xlu0 %v2668
      %v2670 = vpop.xlane.xlu0 %2669
      %v2671 = vrcp.pop %v2649
      %v2672 = vmul.f32 %v2632, %v2671
      %v2673 = vrcp.pop %v2652
      %v2674 = vmul.f32 %v2634, %v2673
      %v2675 = vrcp.pop %v2655
      %v2676 = vmul.f32 %v2636, %v2675
      %v2677 = vrcp.pop %v2658
      %v2678 = vmul.f32 %v2638, %v2677
      %v2679 = vrcp.pop %v2661
      %v2680 = vmul.f32 %v2640, %v2679
      %v2681 = vrcp.pop %v2664
      %v2682 = vmul.f32 %v2642, %v2681
      %v2683 = vrcp.pop %v2667
      %v2684 = vmul.f32 %v2644, %v2683
      %v2685 = vrcp.pop %v2670
      %v2686 = vmul.f32 %v2646, %v2685
      %2687 = vrot.lane.b32.xlu0 %v2213, 64
      %v2688 = vpop.permute.xlu0 %2687
      %2689 = vrot.lane.b32.xlu0 %v2218, 64
      %v2690 = vpop.permute.xlu0 %2689
      %v2694 = vsel %vm1265, %v2672, 0
      %v2697 = vsel %vm1265, %v2674, 0
      %2699 = vmatprep.subr.mxu0 0.0
      %2700 = vmatpush1.msra.mxu0 %v2688
      %2701 = vmatprep.subr.mxu0 0.0
      %2702 = vmatpush1.msra.mxu0 %v2690
      %2703 = vmatprep.subr.mxu0 0.0
      %2704 = vmatpush1.msra.mxu0 0.0
      %2705 = vmatprep.subr.mxu0 0.0
      %2706 = vmatpush1.msra.mxu0 0.0
      %2707 = vmatprep.subr.mxu0 0.0
      %2708 = vmatpush1.msra.mxu0 0.0
      %2709 = vmatprep.subr.mxu0 0.0
      %2710 = vmatpush1.msra.mxu0 0.0
      %2711 = vmatprep.subr.mxu0 0.0
      %2712 = vmatpush1.msra.mxu0 0.0
      %2713 = vmatprep.subr.mxu0 0.0
      %2714 = vmatpush1.msra.mxu0 0.0
      %2715 = vmatprep.subr.mxu0 0.0
      %2716 = vmatpush1.msra.mxu0 0.0
      %2717 = vmatprep.subr.mxu0 0.0
      %2718 = vmatpush1.msra.mxu0 0.0
      %2719 = vmatprep.subr.mxu0 0.0
      %2720 = vmatpush1.msra.mxu0 0.0
      %2721 = vmatprep.subr.mxu0 0.0
      %2722 = vmatpush1.msra.mxu0 0.0
      %2723 = vmatprep.subr.mxu0 0.0
      %2724 = vmatpush1.msra.mxu0 0.0
      %2725 = vmatprep.subr.mxu0 0.0
      %2726 = vmatpush1.msra.mxu0 0.0
      %2727 = vmatprep.subr.mxu0 0.0
      %2728 = vmatpush1.msra.mxu0 0.0
      %2729 = vmatprep.subr.mxu0 0.0
      %2730 = vmatpush1.msra.mxu0 0.0
      %2731 = vmatprep.subr.mxu0 0.0
      %2732 = vmatpush1.msra.mxu0 0.0
      %2733 = vmatprep.subr.mxu0 0.0
      %2734 = vmatpush1.msra.mxu0 0.0
      %2735 = vmatprep.subr.mxu0 0.0
      %2736 = vmatpush1.msra.mxu0 0.0
      %2737 = vmatprep.subr.mxu0 0.0
      %2738 = vmatpush1.msra.mxu0 0.0
      %2739 = vmatprep.subr.mxu0 0.0
      %2740 = vmatpush1.msra.mxu0 0.0
      %2741 = vmatprep.subr.mxu0 0.0
      %2742 = vmatpush1.msra.mxu0 0.0
      %2743 = vmatprep.subr.mxu0 0.0
      %2744 = vmatpush1.msra.mxu0 0.0
      %2745 = vmatprep.subr.mxu0 0.0
      %2746 = vmatpush1.msra.mxu0 0.0
      %2747 = vmatprep.subr.mxu0 0.0
      %2748 = vmatpush1.msra.mxu0 0.0
      %2749 = vmatprep.subr.mxu0 0.0
      %2750 = vmatpush1.msra.mxu0 0.0
      %2751 = vmatprep.subr.mxu0 0.0
      %2752 = vmatpush1.msra.mxu0 0.0
      %2753 = vmatprep.subr.mxu0 0.0
      %2754 = vmatpush1.msra.mxu0 0.0
      %2755 = vmatprep.subr.mxu0 0.0
      %2756 = vmatpush1.msra.mxu0 0.0
      %2757 = vmatprep.subr.mxu0 0.0
      %2758 = vmatpush1.msra.mxu0 0.0
      %2759 = vmatprep.subr.mxu0 0.0
      %2760 = vmatpush1.msra.mxu0 0.0
      %2761 = vmatprep.subr.mxu0 0.0
      %2762 = vmatpush1.msra.mxu0 0.0
      %2763 = vmatprep.mubr.f32.mxu0 0.0
      %2764 = vmatmul.mubr.f32.gmra.mrb[0].mxu0 %v2694
      %v2765 = vpop.f32.mrb[0].mxu0
      %v2766 = vadd.f32 0.0, %v2765
      %v2767 = vpop.f32.mrb[0].mxu0
      %2768 = vmatprep.mubr.f32.mxu0 0.0
      %2769 = vmatmul.mubr.f32.gmra.mrb[0].mxu0 %v2697
      %v2770 = vpop.f32.mrb[0].mxu0
      %v2771 = vadd.f32 0.0, %v2770
      %v2772 = vpop.f32.mrb[0].mxu0
      %2773 = vdwg.mxu0
      %2774 = vrot.lane.b32.xlu0 %v2224, 64
      %v2775 = vpop.permute.xlu0 %2774
      %2776 = vrot.lane.b32.xlu0 %v2226, 64
      %v2777 = vpop.permute.xlu0 %2776
      %v2781 = vsel %vm1265, %v2676, 0
      %v2784 = vsel %vm1265, %v2678, 0
      %2786 = vmatprep.subr.mxu0 0.0
      %2787 = vmatpush1.msra.mxu0 %v2775
      %2788 = vmatprep.subr.mxu0 0.0
      %2789 = vmatpush1.msra.mxu0 %v2777
      %2790 = vmatprep.subr.mxu0 0.0
      %2791 = vmatpush1.msra.mxu0 0.0
      %2792 = vmatprep.subr.mxu0 0.0
      %2793 = vmatpush1.msra.mxu0 0.0
      %2794 = vmatprep.subr.mxu0 0.0
      %2795 = vmatpush1.msra.mxu0 0.0
      %2796 = vmatprep.subr.mxu0 0.0
      %2797 = vmatpush1.msra.mxu0 0.0
      %2798 = vmatprep.subr.mxu0 0.0
      %2799 = vmatpush1.msra.mxu0 0.0
      %2800 = vmatprep.subr.mxu0 0.0
      %2801 = vmatpush1.msra.mxu0 0.0
      %2802 = vmatprep.subr.mxu0 0.0
      %2803 = vmatpush1.msra.mxu0 0.0
      %2804 = vmatprep.subr.mxu0 0.0
      %2805 = vmatpush1.msra.mxu0 0.0
      %2806 = vmatprep.subr.mxu0 0.0
      %2807 = vmatpush1.msra.mxu0 0.0
      %2808 = vmatprep.subr.mxu0 0.0
      %2809 = vmatpush1.msra.mxu0 0.0
      %2810 = vmatprep.subr.mxu0 0.0
      %2811 = vmatpush1.msra.mxu0 0.0
      %2812 = vmatprep.subr.mxu0 0.0
      %2813 = vmatpush1.msra.mxu0 0.0
      %2814 = vmatprep.subr.mxu0 0.0
      %2815 = vmatpush1.msra.mxu0 0.0
      %2816 = vmatprep.subr.mxu0 0.0
      %2817 = vmatpush1.msra.mxu0 0.0
      %2818 = vmatprep.subr.mxu0 0.0
      %2819 = vmatpush1.msra.mxu0 0.0
      %2820 = vmatprep.subr.mxu0 0.0
      %2821 = vmatpush1.msra.mxu0 0.0
      %2822 = vmatprep.subr.mxu0 0.0
      %2823 = vmatpush1.msra.mxu0 0.0
      %2824 = vmatprep.subr.mxu0 0.0
      %2825 = vmatpush1.msra.mxu0 0.0
      %2826 = vmatprep.subr.mxu0 0.0
      %2827 = vmatpush1.msra.mxu0 0.0
      %2828 = vmatprep.subr.mxu0 0.0
      %2829 = vmatpush1.msra.mxu0 0.0
      %2830 = vmatprep.subr.mxu0 0.0
      %2831 = vmatpush1.msra.mxu0 0.0
      %2832 = vmatprep.subr.mxu0 0.0
      %2833 = vmatpush1.msra.mxu0 0.0
      %2834 = vmatprep.subr.mxu0 0.0
      %2835 = vmatpush1.msra.mxu0 0.0
      %2836 = vmatprep.subr.mxu0 0.0
      %2837 = vmatpush1.msra.mxu0 0.0
      %2838 = vmatprep.subr.mxu0 0.0
      %2839 = vmatpush1.msra.mxu0 0.0
      %2840 = vmatprep.subr.mxu0 0.0
      %2841 = vmatpush1.msra.mxu0 0.0
      %2842 = vmatprep.subr.mxu0 0.0
      %2843 = vmatpush1.msra.mxu0 0.0
      %2844 = vmatprep.subr.mxu0 0.0
      %2845 = vmatpush1.msra.mxu0 0.0
      %2846 = vmatprep.subr.mxu0 0.0
      %2847 = vmatpush1.msra.mxu0 0.0
      %2848 = vmatprep.subr.mxu0 0.0
      %2849 = vmatpush1.msra.mxu0 0.0
      %2850 = vmatprep.mubr.f32.mxu0 0.0
      %2851 = vmatmul.mubr.f32.gmra.mrb[0].mxu0 %v2781
      %v2852 = vpop.f32.mrb[0].mxu0
      %v2853 = vadd.f32 0.0, %v2852
      %v2854 = vpop.f32.mrb[0].mxu0
      %2855 = vmatprep.mubr.f32.mxu0 0.0
      %2856 = vmatmul.mubr.f32.gmra.mrb[0].mxu0 %v2784
      %v2857 = vpop.f32.mrb[0].mxu0
      %v2858 = vadd.f32 0.0, %v2857
      %v2859 = vpop.f32.mrb[0].mxu0
      %2860 = vdwg.mxu0
      %2861 = vrot.lane.b32.xlu0 %v2228, 64
      %v2862 = vpop.permute.xlu0 %2861
      %2863 = vrot.lane.b32.xlu0 %v2230, 64
      %v2864 = vpop.permute.xlu0 %2863
      %v2868 = vsel %vm1265, %v2680, 0
      %v2871 = vsel %vm1265, %v2682, 0
      %2873 = vmatprep.subr.mxu0 0.0
      %2874 = vmatpush1.msra.mxu0 %v2862
      %2875 = vmatprep.subr.mxu0 0.0
      %2876 = vmatpush1.msra.mxu0 %v2864
      %2877 = vmatprep.subr.mxu0 0.0
      %2878 = vmatpush1.msra.mxu0 0.0
      %2879 = vmatprep.subr.mxu0 0.0
      %2880 = vmatpush1.msra.mxu0 0.0
      %2881 = vmatprep.subr.mxu0 0.0
      %2882 = vmatpush1.msra.mxu0 0.0
      %2883 = vmatprep.subr.mxu0 0.0
      %2884 = vmatpush1.msra.mxu0 0.0
      %2885 = vmatprep.subr.mxu0 0.0
      %2886 = vmatpush1.msra.mxu0 0.0
      %2887 = vmatprep.subr.mxu0 0.0
      %2888 = vmatpush1.msra.mxu0 0.0
      %2889 = vmatprep.subr.mxu0 0.0
      %2890 = vmatpush1.msra.mxu0 0.0
      %2891 = vmatprep.subr.mxu0 0.0
      %2892 = vmatpush1.msra.mxu0 0.0
      %2893 = vmatprep.subr.mxu0 0.0
      %2894 = vmatpush1.msra.mxu0 0.0
      %2895 = vmatprep.subr.mxu0 0.0
      %2896 = vmatpush1.msra.mxu0 0.0
      %2897 = vmatprep.subr.mxu0 0.0
      %2898 = vmatpush1.msra.mxu0 0.0
      %2899 = vmatprep.subr.mxu0 0.0
      %2900 = vmatpush1.msra.mxu0 0.0
      %2901 = vmatprep.subr.mxu0 0.0
      %2902 = vmatpush1.msra.mxu0 0.0
      %2903 = vmatprep.subr.mxu0 0.0
      %2904 = vmatpush1.msra.mxu0 0.0
      %2905 = vmatprep.subr.mxu0 0.0
      %2906 = vmatpush1.msra.mxu0 0.0
      %2907 = vmatprep.subr.mxu0 0.0
      %2908 = vmatpush1.msra.mxu0 0.0
      %2909 = vmatprep.subr.mxu0 0.0
      %2910 = vmatpush1.msra.mxu0 0.0
      %2911 = vmatprep.subr.mxu0 0.0
      %2912 = vmatpush1.msra.mxu0 0.0
      %2913 = vmatprep.subr.mxu0 0.0
      %2914 = vmatpush1.msra.mxu0 0.0
      %2915 = vmatprep.subr.mxu0 0.0
      %2916 = vmatpush1.msra.mxu0 0.0
      %2917 = vmatprep.subr.mxu0 0.0
      %2918 = vmatpush1.msra.mxu0 0.0
      %2919 = vmatprep.subr.mxu0 0.0
      %2920 = vmatpush1.msra.mxu0 0.0
      %2921 = vmatprep.subr.mxu0 0.0
      %2922 = vmatpush1.msra.mxu0 0.0
      %2923 = vmatprep.subr.mxu0 0.0
      %2924 = vmatpush1.msra.mxu0 0.0
      %2925 = vmatprep.subr.mxu0 0.0
      %2926 = vmatpush1.msra.mxu0 0.0
      %2927 = vmatprep.subr.mxu0 0.0
      %2928 = vmatpush1.msra.mxu0 0.0
      %2929 = vmatprep.subr.mxu0 0.0
      %2930 = vmatpush1.msra.mxu0 0.0
      %2931 = vmatprep.subr.mxu0 0.0
      %2932 = vmatpush1.msra.mxu0 0.0
      %2933 = vmatprep.subr.mxu0 0.0
      %2934 = vmatpush1.msra.mxu0 0.0
      %2935 = vmatprep.subr.mxu0 0.0
      %2936 = vmatpush1.msra.mxu0 0.0
      %2937 = vmatprep.mubr.f32.mxu0 0.0
      %2938 = vmatmul.mubr.f32.gmra.mrb[0].mxu0 %v2868
      %v2939 = vpop.f32.mrb[0].mxu0
      %v2940 = vadd.f32 0.0, %v2939
      %v2941 = vpop.f32.mrb[0].mxu0
      %2942 = vmatprep.mubr.f32.mxu0 0.0
      %2943 = vmatmul.mubr.f32.gmra.mrb[0].mxu0 %v2871
      %v2944 = vpop.f32.mrb[0].mxu0
      %v2945 = vadd.f32 0.0, %v2944
      %v2946 = vpop.f32.mrb[0].mxu0
      %2947 = vdwg.mxu0
      %2948 = vrot.lane.b32.xlu0 %v2232, 64
      %v2949 = vpop.permute.xlu0 %2948
      %2950 = vrot.lane.b32.xlu0 %v2234, 64
      %v2951 = vpop.permute.xlu0 %2950
      %v2955 = vsel %vm1265, %v2684, 0
      %v2958 = vsel %vm1265, %v2686, 0
      %2960 = vmatprep.subr.mxu0 0.0
      %2961 = vmatpush1.msra.mxu0 %v2949
      %2962 = vmatprep.subr.mxu0 0.0
      %2963 = vmatpush1.msra.mxu0 %v2951
      %2964 = vmatprep.subr.mxu0 0.0
      %2965 = vmatpush1.msra.mxu0 0.0
      %2966 = vmatprep.subr.mxu0 0.0
      %2967 = vmatpush1.msra.mxu0 0.0
      %2968 = vmatprep.subr.mxu0 0.0
      %2969 = vmatpush1.msra.mxu0 0.0
      %2970 = vmatprep.subr.mxu0 0.0
      %2971 = vmatpush1.msra.mxu0 0.0
      %2972 = vmatprep.subr.mxu0 0.0
      %2973 = vmatpush1.msra.mxu0 0.0
      %2974 = vmatprep.subr.mxu0 0.0
      %2975 = vmatpush1.msra.mxu0 0.0
      %2976 = vmatprep.subr.mxu0 0.0
      %2977 = vmatpush1.msra.mxu0 0.0
      %2978 = vmatprep.subr.mxu0 0.0
      %2979 = vmatpush1.msra.mxu0 0.0
      %2980 = vmatprep.subr.mxu0 0.0
      %2981 = vmatpush1.msra.mxu0 0.0
      %2982 = vmatprep.subr.mxu0 0.0
      %2983 = vmatpush1.msra.mxu0 0.0
      %2984 = vmatprep.subr.mxu0 0.0
      %2985 = vmatpush1.msra.mxu0 0.0
      %2986 = vmatprep.subr.mxu0 0.0
      %2987 = vmatpush1.msra.mxu0 0.0
      %2988 = vmatprep.subr.mxu0 0.0
      %2989 = vmatpush1.msra.mxu0 0.0
      %2990 = vmatprep.subr.mxu0 0.0
      %2991 = vmatpush1.msra.mxu0 0.0
      %2992 = vmatprep.subr.mxu0 0.0
      %2993 = vmatpush1.msra.mxu0 0.0
      %2994 = vmatprep.subr.mxu0 0.0
      %2995 = vmatpush1.msra.mxu0 0.0
      %2996 = vmatprep.subr.mxu0 0.0
      %2997 = vmatpush1.msra.mxu0 0.0
      %2998 = vmatprep.subr.mxu0 0.0
      %2999 = vmatpush1.msra.mxu0 0.0
      %3000 = vmatprep.subr.mxu0 0.0
      %3001 = vmatpush1.msra.mxu0 0.0
      %3002 = vmatprep.subr.mxu0 0.0
      %3003 = vmatpush1.msra.mxu0 0.0
      %3004 = vmatprep.subr.mxu0 0.0
      %3005 = vmatpush1.msra.mxu0 0.0
      %3006 = vmatprep.subr.mxu0 0.0
      %3007 = vmatpush1.msra.mxu0 0.0
      %3008 = vmatprep.subr.mxu0 0.0
      %3009 = vmatpush1.msra.mxu0 0.0
      %3010 = vmatprep.subr.mxu0 0.0
      %3011 = vmatpush1.msra.mxu0 0.0
      %3012 = vmatprep.subr.mxu0 0.0
      %3013 = vmatpush1.msra.mxu0 0.0
      %3014 = vmatprep.subr.mxu0 0.0
      %3015 = vmatpush1.msra.mxu0 0.0
      %3016 = vmatprep.subr.mxu0 0.0
      %3017 = vmatpush1.msra.mxu0 0.0
      %3018 = vmatprep.subr.mxu0 0.0
      %3019 = vmatpush1.msra.mxu0 0.0
      %3020 = vmatprep.subr.mxu0 0.0
      %3021 = vmatpush1.msra.mxu0 0.0
      %3022 = vmatprep.subr.mxu0 0.0
      %3023 = vmatpush1.msra.mxu0 0.0
      %3024 = vmatprep.mubr.f32.mxu0 0.0
      %3025 = vmatmul.mubr.f32.gmra.mrb[0].mxu0 %v2955
      %v3026 = vpop.f32.mrb[0].mxu0
      %v3027 = vadd.f32 0.0, %v3026
      %v3028 = vpop.f32.mrb[0].mxu0
      %3029 = vmatprep.mubr.f32.mxu0 0.0
      %3030 = vmatmul.mubr.f32.gmra.mrb[0].mxu0 %v2958
      %v3031 = vpop.f32.mrb[0].mxu0
      %v3032 = vadd.f32 0.0, %v3031
      %v3033 = vpop.f32.mrb[0].mxu0
      %3034 = vdwg.mxu0
      %3037 = vrot.lane.b32.xlu0 %v2853, 8
      %v3038 = vpop.permute.xlu0 %3037
      %3039 = vrot.lane.b32.xlu0 %v2858, 8
      %v3040 = vpop.permute.xlu0 %3039
      %3045 = vrot.lane.b32.xlu0 %v2940, 16
      %v3046 = vpop.permute.xlu0 %3045
      %3047 = vrot.lane.b32.xlu0 %v2945, 16
      %v3048 = vpop.permute.xlu0 %3047
      %3053 = vrot.lane.b32.xlu0 %v3027, 24
      %v3054 = vpop.permute.xlu0 %3053
      %3055 = vrot.lane.b32.xlu0 %v3032, 24
      %v3056 = vpop.permute.xlu0 %3055
      %v3059 = vsel %vm904, %v2766, %v3038
      %v3060 = vsel %vm904, %v2771, %v3040
      %v3061 = vsel %vm1265, %v3059, %v3046
      %v3062 = vsel %vm1265, %v3060, %v3048
      %v3063 = vsel %vm1730, %v3061, %v3054
      %v3064 = vsel %vm1730, %v3062, %v3056
      %s3065 = scalar_lea.vmem %s7, 32
      %v3066 = vld [vmem:[%s3065] sm:$0xff]
      %v3067 = vld [vmem:[%s3065 + $0x8] sm:$0xff]
      %v3068 = vld [vmem:[%s3065 + $0x10] sm:$0xff]
      %v3069 = vld [vmem:[%s3065 + $0x18] sm:$0xff]
      %s3070 = scalar_lea.vmem %s8, 1
      %v3071 = vld [vmem:[%s3070] sm:$0x1]
      %v3073 = vlaneseq
      %v3074 = vshrl.u32 %v3073, 7
      %v3075 = vsub.s32 0, %v3074
      %v3076 = vrot.slane %v3071, %v3075
      %v3079 = vsel %vm757, %v3063, 0
      %v3082 = vsel %vm757, %v3064, 0
      %3084 = vmatprep.subr.mxu0 0.0
      %3085 = vmatpush1.msra.mxu0 %v3066
      %3086 = vmatprep.subr.mxu0 0.0
      %3087 = vmatpush1.msra.mxu0 %v3067
      %3088 = vmatprep.subr.mxu0 0.0
      %3089 = vmatpush1.msra.mxu0 %v3068
      %3090 = vmatprep.subr.mxu0 0.0
      %3091 = vmatpush1.msra.mxu0 %v3069
      %3092 = vmatprep.subr.mxu0 0.0
      %3093 = vmatpush1.msra.mxu0 0.0
      %3094 = vmatprep.subr.mxu0 0.0
      %3095 = vmatpush1.msra.mxu0 0.0
      %3096 = vmatprep.subr.mxu0 0.0
      %3097 = vmatpush1.msra.mxu0 0.0
      %3098 = vmatprep.subr.mxu0 0.0
      %3099 = vmatpush1.msra.mxu0 0.0
      %3100 = vmatprep.subr.mxu0 0.0
      %3101 = vmatpush1.msra.mxu0 0.0
      %3102 = vmatprep.subr.mxu0 0.0
      %3103 = vmatpush1.msra.mxu0 0.0
      %3104 = vmatprep.subr.mxu0 0.0
      %3105 = vmatpush1.msra.mxu0 0.0
      %3106 = vmatprep.subr.mxu0 0.0
      %3107 = vmatpush1.msra.mxu0 0.0
      %3108 = vmatprep.subr.mxu0 0.0
      %3109 = vmatpush1.msra.mxu0 0.0
      %3110 = vmatprep.subr.mxu0 0.0
      %3111 = vmatpush1.msra.mxu0 0.0
      %3112 = vmatprep.subr.mxu0 0.0
      %3113 = vmatpush1.msra.mxu0 0.0
      %3114 = vmatprep.subr.mxu0 0.0
      %3115 = vmatpush1.msra.mxu0 0.0
      %3116 = vmatprep.subr.mxu0 0.0
      %3117 = vmatpush1.msra.mxu0 0.0
      %3118 = vmatprep.subr.mxu0 0.0
      %3119 = vmatpush1.msra.mxu0 0.0
      %3120 = vmatprep.subr.mxu0 0.0
      %3121 = vmatpush1.msra.mxu0 0.0
      %3122 = vmatprep.subr.mxu0 0.0
      %3123 = vmatpush1.msra.mxu0 0.0
      %3124 = vmatprep.subr.mxu0 0.0
      %3125 = vmatpush1.msra.mxu0 0.0
      %3126 = vmatprep.subr.mxu0 0.0
      %3127 = vmatpush1.msra.mxu0 0.0
      %3128 = vmatprep.subr.mxu0 0.0
      %3129 = vmatpush1.msra.mxu0 0.0
      %3130 = vmatprep.subr.mxu0 0.0
      %3131 = vmatpush1.msra.mxu0 0.0
      %3132 = vmatprep.subr.mxu0 0.0
      %3133 = vmatpush1.msra.mxu0 0.0
      %3134 = vmatprep.subr.mxu0 0.0
      %3135 = vmatpush1.msra.mxu0 0.0
      %3136 = vmatprep.subr.mxu0 0.0
      %3137 = vmatpush1.msra.mxu0 0.0
      %3138 = vmatprep.subr.mxu0 0.0
      %3139 = vmatpush1.msra.mxu0 0.0
      %3140 = vmatprep.subr.mxu0 0.0
      %3141 = vmatpush1.msra.mxu0 0.0
      %3142 = vmatprep.subr.mxu0 0.0
      %3143 = vmatpush1.msra.mxu0 0.0
      %3144 = vmatprep.subr.mxu0 0.0
      %3145 = vmatpush1.msra.mxu0 0.0
      %3146 = vmatprep.subr.mxu0 0.0
      %3147 = vmatpush1.msra.mxu0 0.0
      %3148 = vmatprep.mubr.f32.mxu0 0.0
      %3149 = vmatmul.mubr.f32.gmra.mrb[0].mxu0 %v3079
      %v3150 = vpop.f32.mrb[0].mxu0
      %v3151 = vadd.f32 %v3076, %v3150
      %v3152 = vpop.f32.mrb[0].mxu0
      %3153 = vmatprep.mubr.f32.mxu0 0.0
      %3154 = vmatmul.mubr.f32.gmra.mrb[0].mxu0 %v3082
      %v3155 = vpop.f32.mrb[0].mxu0
      %v3156 = vadd.f32 %v3076, %v3155
      %v3157 = vpop.f32.mrb[0].mxu0
      %3158 = vdwg.mxu0
      %v3159 = vmul.f32 %v3151, %v1828
      %v3160 = vmul.f32 %v3156, %v1833
      %v3161 = vadd.f32 %v2087, %v3159
      %v3162 = vadd.f32 %v2088, %v3160
      %s3163 = scalar_lea.vmem %s9, 1
      %v3164 = vld [vmem:[%s3163] sm:$0x1]
      %s3165 = scalar_lea.vmem %s10, 1
      %v3166 = vld [vmem:[%s3165] sm:$0x1]
      %v3167 = vsel %vm757, %v3161, 0.0
      %3168 = vadd.xlane.f32.xlu0 %v3167
      %v3169 = vpop.xlane.xlu0 %3168
      %v3170 = vsel %vm757, %v3162, 0.0
      %3171 = vadd.xlane.f32.xlu0 %v3170
      %v3172 = vpop.xlane.xlu0 %3171
      %v3173 = vmul.f32 %v3169, %v764
      %v3174 = vmul.f32 %v3172, %v764
      %v3175 = vsub.f32 %v3161, %v3173
      %v3176 = vsub.f32 %v3162, %v3174
      %v3177 = vmul.f32 %v3175, %v3175
      %v3178 = vmul.f32 %v3176, %v3176
      %v3179 = vsel %vm757, %v3177, 0.0
      %3180 = vadd.xlane.f32.xlu0 %v3179
      %v3181 = vpop.xlane.xlu0 %3180
      %v3182 = vsel %vm757, %v3178, 0.0
      %3183 = vadd.xlane.f32.xlu0 %v3182
      %v3184 = vpop.xlane.xlu0 %3183
      %v3185 = vmul.f32 %v3181, %v764
      %v3186 = vmul.f32 %v3184, %v764
      %v3187 = vadd.f32 %v3185, 1e-05
      %v3188 = vadd.f32 %v3186, 1e-05
      %v3189 = vrsqrt.pop %v3187
      %v3190 = vrsqrt.pop %v3188
      %v3191 = vmul.f32 %v3175, %v3189
      %v3192 = vmul.f32 %v3176, %v3190
      %v3194 = vlaneseq
      %v3195 = vshrl.u32 %v3194, 7
      %v3196 = vsub.s32 0, %v3195
      %v3197 = vrot.slane %v3164, %v3196
      %v3199 = vmul.f32 %v3191, %v3197
      %v3200 = vmul.f32 %v3192, %v3197
      %v3202 = vlaneseq
      %v3203 = vshrl.u32 %v3202, 7
      %v3204 = vsub.s32 0, %v3203
      %v3205 = vrot.slane %v3166, %v3204
      %v3207 = vadd.f32 %v3199, %v3205
      %v3208 = vadd.f32 %v3200, %v3205
      %s3209 = scalar_lea.vmem %s11, 32
      %v3210 = vld [vmem:[%s3209] sm:$0xff]
      %v3211 = vld [vmem:[%s3209 + $0x8] sm:$0xff]
      %v3212 = vld [vmem:[%s3209 + $0x10] sm:$0xff]
      %v3213 = vld [vmem:[%s3209 + $0x18] sm:$0xff]
      %s3214 = scalar_lea.vmem %s12, 1
      %v3215 = vld [vmem:[%s3214] sm:$0x1]
      %v3217 = vlaneseq
      %v3218 = vshrl.u32 %v3217, 7
      %v3219 = vsub.s32 0, %v3218
      %v3220 = vrot.slane %v3215, %v3219
      %v3223 = vsel %vm757, %v3207, 0
      %v3226 = vsel %vm757, %v3208, 0
      %3228 = vmatprep.subr.mxu0 0.0
      %3229 = vmatpush1.msra.mxu0 %v3210
      %3230 = vmatprep.subr.mxu0 0.0
      %3231 = vmatpush1.msra.mxu0 %v3211
      %3232 = vmatprep.subr.mxu0 0.0
      %3233 = vmatpush1.msra.mxu0 %v3212
      %3234 = vmatprep.subr.mxu0 0.0
      %3235 = vmatpush1.msra.mxu0 %v3213
      %3236 = vmatprep.subr.mxu0 0.0
      %3237 = vmatpush1.msra.mxu0 0.0
      %3238 = vmatprep.subr.mxu0 0.0
      %3239 = vmatpush1.msra.mxu0 0.0
      %3240 = vmatprep.subr.mxu0 0.0
      %3241 = vmatpush1.msra.mxu0 0.0
      %3242 = vmatprep.subr.mxu0 0.0
      %3243 = vmatpush1.msra.mxu0 0.0
      %3244 = vmatprep.subr.mxu0 0.0
      %3245 = vmatpush1.msra.mxu0 0.0
      %3246 = vmatprep.subr.mxu0 0.0
      %3247 = vmatpush1.msra.mxu0 0.0
      %3248 = vmatprep.subr.mxu0 0.0
      %3249 = vmatpush1.msra.mxu0 0.0
      %3250 = vmatprep.subr.mxu0 0.0
      %3251 = vmatpush1.msra.mxu0 0.0
      %3252 = vmatprep.subr.mxu0 0.0
      %3253 = vmatpush1.msra.mxu0 0.0
      %3254 = vmatprep.subr.mxu0 0.0
      %3255 = vmatpush1.msra.mxu0 0.0
      %3256 = vmatprep.subr.mxu0 0.0
      %3257 = vmatpush1.msra.mxu0 0.0
      %3258 = vmatprep.subr.mxu0 0.0
      %3259 = vmatpush1.msra.mxu0 0.0
      %3260 = vmatprep.subr.mxu0 0.0
      %3261 = vmatpush1.msra.mxu0 0.0
      %3262 = vmatprep.subr.mxu0 0.0
      %3263 = vmatpush1.msra.mxu0 0.0
      %3264 = vmatprep.subr.mxu0 0.0
      %3265 = vmatpush1.msra.mxu0 0.0
      %3266 = vmatprep.subr.mxu0 0.0
      %3267 = vmatpush1.msra.mxu0 0.0
      %3268 = vmatprep.subr.mxu0 0.0
      %3269 = vmatpush1.msra.mxu0 0.0
      %3270 = vmatprep.subr.mxu0 0.0
      %3271 = vmatpush1.msra.mxu0 0.0
      %3272 = vmatprep.subr.mxu0 0.0
      %3273 = vmatpush1.msra.mxu0 0.0
      %3274 = vmatprep.subr.mxu0 0.0
      %3275 = vmatpush1.msra.mxu0 0.0
      %3276 = vmatprep.subr.mxu0 0.0
      %3277 = vmatpush1.msra.mxu0 0.0
      %3278 = vmatprep.subr.mxu0 0.0
      %3279 = vmatpush1.msra.mxu0 0.0
      %3280 = vmatprep.subr.mxu0 0.0
      %3281 = vmatpush1.msra.mxu0 0.0
      %3282 = vmatprep.subr.mxu0 0.0
      %3283 = vmatpush1.msra.mxu0 0.0
      %3284 = vmatprep.subr.mxu0 0.0
      %3285 = vmatpush1.msra.mxu0 0.0
      %3286 = vmatprep.subr.mxu0 0.0
      %3287 = vmatpush1.msra.mxu0 0.0
      %3288 = vmatprep.subr.mxu0 0.0
      %3289 = vmatpush1.msra.mxu0 0.0
      %3290 = vmatprep.subr.mxu0 0.0
      %3291 = vmatpush1.msra.mxu0 0.0
      %3292 = vmatprep.mubr.f32.mxu0 0.0
      %3293 = vmatmul.mubr.f32.gmra.mrb[0].mxu0 %v3223
      %v3294 = vpop.f32.mrb[0].mxu0
      %v3295 = vadd.f32 %v3220, %v3294
      %v3296 = vpop.f32.mrb[0].mxu0
      %3297 = vmatprep.mubr.f32.mxu0 0.0
      %3298 = vmatmul.mubr.f32.gmra.mrb[0].mxu0 %v3226
      %v3299 = vpop.f32.mrb[0].mxu0
      %v3300 = vadd.f32 %v3220, %v3299
      %v3301 = vpop.f32.mrb[0].mxu0
      %3302 = vdwg.mxu0
      %v3303 = vsub.f32 0.0, %v3295
      %v3304 = vsub.f32 0.0, %v3300
      %v3305 = vmul.f32 %v3303, 1.442695
      %v3306 = vpow.pop %v3305
      %v3307 = vmul.f32 %v3304, 1.442695
      %v3308 = vpow.pop %v3307
      %v3309 = vadd.f32 %v3306, 1.0
      %v3310 = vadd.f32 %v3308, 1.0
      %v3311 = vrcp.pop %v3309
      %v3312 = vmul.f32 1.0, %v3311
      %v3313 = vrcp.pop %v3310
      %v3314 = vmul.f32 1.0, %v3313
      %v3315 = vmul.f32 %v3295, %v3312
      %v3316 = vmul.f32 %v3300, %v3314
      %s3317 = scalar_lea.vmem %s13, 64
      %v3318 = vld [vmem:[%s3317] sm:$0xff]
      %v3319 = vld [vmem:[%s3317 + $0x8] sm:$0xff]
      %v3320 = vld [vmem:[%s3317 + $0x10] sm:$0xff]
      %v3321 = vld [vmem:[%s3317 + $0x18] sm:$0xff]
      %v3322 = vld [vmem:[%s3317 + $0x20] sm:$0xff]
      %v3323 = vld [vmem:[%s3317 + $0x28] sm:$0xff]
      %v3324 = vld [vmem:[%s3317 + $0x30] sm:$0xff]
      %v3325 = vld [vmem:[%s3317 + $0x38] sm:$0xff]
      %s3326 = scalar_lea.vmem %s14, 1
      %v3327 = vld [vmem:[%s3326] sm:$0x1]
      %v3329 = vlaneseq
      %v3330 = vshrl.u32 %v3329, 7
      %v3331 = vsub.s32 0, %v3330
      %v3332 = vrot.slane %v3327, %v3331
      %v3335 = vsel %vm673, %v3315, 0
      %v3338 = vsel %vm673, %v3316, 0
      %3340 = vmatprep.subr.mxu0 0.0
      %3341 = vmatpush1.msra.mxu0 %v3318
      %3342 = vmatprep.subr.mxu0 0.0
      %3343 = vmatpush1.msra.mxu0 %v3319
      %3344 = vmatprep.subr.mxu0 0.0
      %3345 = vmatpush1.msra.mxu0 %v3320
      %3346 = vmatprep.subr.mxu0 0.0
      %3347 = vmatpush1.msra.mxu0 %v3321
      %3348 = vmatprep.subr.mxu0 0.0
      %3349 = vmatpush1.msra.mxu0 %v3322
      %3350 = vmatprep.subr.mxu0 0.0
      %3351 = vmatpush1.msra.mxu0 %v3323
      %3352 = vmatprep.subr.mxu0 0.0
      %3353 = vmatpush1.msra.mxu0 %v3324
      %3354 = vmatprep.subr.mxu0 0.0
      %3355 = vmatpush1.msra.mxu0 %v3325
      %3356 = vmatprep.subr.mxu0 0.0
      %3357 = vmatpush1.msra.mxu0 0.0
      %3358 = vmatprep.subr.mxu0 0.0
      %3359 = vmatpush1.msra.mxu0 0.0
      %3360 = vmatprep.subr.mxu0 0.0
      %3361 = vmatpush1.msra.mxu0 0.0
      %3362 = vmatprep.subr.mxu0 0.0
      %3363 = vmatpush1.msra.mxu0 0.0
      %3364 = vmatprep.subr.mxu0 0.0
      %3365 = vmatpush1.msra.mxu0 0.0
      %3366 = vmatprep.subr.mxu0 0.0
      %3367 = vmatpush1.msra.mxu0 0.0
      %3368 = vmatprep.subr.mxu0 0.0
      %3369 = vmatpush1.msra.mxu0 0.0
      %3370 = vmatprep.subr.mxu0 0.0
      %3371 = vmatpush1.msra.mxu0 0.0
      %3372 = vmatprep.subr.mxu0 0.0
      %3373 = vmatpush1.msra.mxu0 0.0
      %3374 = vmatprep.subr.mxu0 0.0
      %3375 = vmatpush1.msra.mxu0 0.0
      %3376 = vmatprep.subr.mxu0 0.0
      %3377 = vmatpush1.msra.mxu0 0.0
      %3378 = vmatprep.subr.mxu0 0.0
      %3379 = vmatpush1.msra.mxu0 0.0
      %3380 = vmatprep.subr.mxu0 0.0
      %3381 = vmatpush1.msra.mxu0 0.0
      %3382 = vmatprep.subr.mxu0 0.0
      %3383 = vmatpush1.msra.mxu0 0.0
      %3384 = vmatprep.subr.mxu0 0.0
      %3385 = vmatpush1.msra.mxu0 0.0
      %3386 = vmatprep.subr.mxu0 0.0
      %3387 = vmatpush1.msra.mxu0 0.0
      %3388 = vmatprep.subr.mxu0 0.0
      %3389 = vmatpush1.msra.mxu0 0.0
      %3390 = vmatprep.subr.mxu0 0.0
      %3391 = vmatpush1.msra.mxu0 0.0
      %3392 = vmatprep.subr.mxu0 0.0
      %3393 = vmatpush1.msra.mxu0 0.0
      %3394 = vmatprep.subr.mxu0 0.0
      %3395 = vmatpush1.msra.mxu0 0.0
      %3396 = vmatprep.subr.mxu0 0.0
      %3397 = vmatpush1.msra.mxu0 0.0
      %3398 = vmatprep.subr.mxu0 0.0
      %3399 = vmatpush1.msra.mxu0 0.0
      %3400 = vmatprep.subr.mxu0 0.0
      %3401 = vmatpush1.msra.mxu0 0.0
      %3402 = vmatprep.subr.mxu0 0.0
      %3403 = vmatpush1.msra.mxu0 0.0
      %3404 = vmatprep.mubr.f32.mxu0 0.0
      %3405 = vmatmul.mubr.f32.gmra.mrb[0].mxu0 %v3335
      %v3406 = vpop.f32.mrb[0].mxu0
      %v3407 = vadd.f32 %v3332, %v3406
      %v3408 = vpop.f32.mrb[0].mxu0
      %3409 = vmatprep.mubr.f32.mxu0 0.0
      %3410 = vmatmul.mubr.f32.gmra.mrb[0].mxu0 %v3338
      %v3411 = vpop.f32.mrb[0].mxu0
      %v3412 = vadd.f32 %v3332, %v3411
      %v3413 = vpop.f32.mrb[0].mxu0
      %3414 = vdwg.mxu0
      %v3415 = vmul.f32 %v3407, %v1828
      %v3416 = vmul.f32 %v3412, %v1833
      %v3417 = vadd.f32 %v3161, %v3415
      %v3418 = vadd.f32 %v3162, %v3416
      %v3419 = vsel %vm757, %v3417, 0.0
      %v3420 = vsel %vm757, %v3418, 0.0
      %v3421 = vadd.f32 %v3419, %v3420
      %v3422 = vrot.slane %v3421, 4
      %v3423 = vadd.f32 %v3421, %v3422
      %v3424 = vrot.slane %v3423, 2
      %v3425 = vadd.f32 %v3423, %v3424
      %v3426 = vrot.slane %v3425, 1
      %v3427 = vadd.f32 %v3425, %v3426
      %v3428 = vld [vmem:[%s15] sm:$0xff]
      %v3429 = vld [vmem:[%s15 + $0x8] sm:$0xff]
      %v3430 = vld [vmem:[%s15 + $0x10] sm:$0xff]
      %v3431 = vld [vmem:[%s15 + $0x18] sm:$0xff]
      %v3432 = vld [vmem:[%s16] sm:$0x1]
      %v3434 = vsel %vm757, %v3427, 0
      %3436 = vmatprep.subr.mxu0 0.0
      %3437 = vmatpush1.msra.mxu0 %v3428
      %3438 = vmatprep.subr.mxu0 0.0
      %3439 = vmatpush1.msra.mxu0 %v3429
      %3440 = vmatprep.subr.mxu0 0.0
      %3441 = vmatpush1.msra.mxu0 %v3430
      %3442 = vmatprep.subr.mxu0 0.0
      %3443 = vmatpush1.msra.mxu0 %v3431
      %3444 = vmatprep.subr.mxu0 0.0
      %3445 = vmatpush1.msra.mxu0 0.0
      %3446 = vmatprep.subr.mxu0 0.0
      %3447 = vmatpush1.msra.mxu0 0.0
      %3448 = vmatprep.subr.mxu0 0.0
      %3449 = vmatpush1.msra.mxu0 0.0
      %3450 = vmatprep.subr.mxu0 0.0
      %3451 = vmatpush1.msra.mxu0 0.0
      %3452 = vmatprep.subr.mxu0 0.0
      %3453 = vmatpush1.msra.mxu0 0.0
      %3454 = vmatprep.subr.mxu0 0.0
      %3455 = vmatpush1.msra.mxu0 0.0
      %3456 = vmatprep.subr.mxu0 0.0
      %3457 = vmatpush1.msra.mxu0 0.0
      %3458 = vmatprep.subr.mxu0 0.0
      %3459 = vmatpush1.msra.mxu0 0.0
      %3460 = vmatprep.subr.mxu0 0.0
      %3461 = vmatpush1.msra.mxu0 0.0
      %3462 = vmatprep.subr.mxu0 0.0
      %3463 = vmatpush1.msra.mxu0 0.0
      %3464 = vmatprep.subr.mxu0 0.0
      %3465 = vmatpush1.msra.mxu0 0.0
      %3466 = vmatprep.subr.mxu0 0.0
      %3467 = vmatpush1.msra.mxu0 0.0
      %3468 = vmatprep.subr.mxu0 0.0
      %3469 = vmatpush1.msra.mxu0 0.0
      %3470 = vmatprep.subr.mxu0 0.0
      %3471 = vmatpush1.msra.mxu0 0.0
      %3472 = vmatprep.subr.mxu0 0.0
      %3473 = vmatpush1.msra.mxu0 0.0
      %3474 = vmatprep.subr.mxu0 0.0
      %3475 = vmatpush1.msra.mxu0 0.0
      %3476 = vmatprep.subr.mxu0 0.0
      %3477 = vmatpush1.msra.mxu0 0.0
      %3478 = vmatprep.subr.mxu0 0.0
      %3479 = vmatpush1.msra.mxu0 0.0
      %3480 = vmatprep.subr.mxu0 0.0
      %3481 = vmatpush1.msra.mxu0 0.0
      %3482 = vmatprep.subr.mxu0 0.0
      %3483 = vmatpush1.msra.mxu0 0.0
      %3484 = vmatprep.subr.mxu0 0.0
      %3485 = vmatpush1.msra.mxu0 0.0
      %3486 = vmatprep.subr.mxu0 0.0
      %3487 = vmatpush1.msra.mxu0 0.0
      %3488 = vmatprep.subr.mxu0 0.0
      %3489 = vmatpush1.msra.mxu0 0.0
      %3490 = vmatprep.subr.mxu0 0.0
      %3491 = vmatpush1.msra.mxu0 0.0
      %3492 = vmatprep.subr.mxu0 0.0
      %3493 = vmatpush1.msra.mxu0 0.0
      %3494 = vmatprep.subr.mxu0 0.0
      %3495 = vmatpush1.msra.mxu0 0.0
      %3496 = vmatprep.subr.mxu0 0.0
      %3497 = vmatpush1.msra.mxu0 0.0
      %3498 = vmatprep.subr.mxu0 0.0
      %3499 = vmatpush1.msra.mxu0 0.0
      %3500 = vmatprep.mubr.f32.mxu0 0.0
      %3501 = vmatmul.mubr.f32.gmra.mrb[0].mxu0 %v3434
      %v3502 = vpop.f32.mrb[0].mxu0
      %v3503 = vadd.f32 %v3432, %v3502
      %v3504 = vpop.f32.mrb[0].mxu0
      %3505 = vdwg.mxu0
      %v3506 = vsub.f32 0.0, %v3503
      %v3507 = vmul.f32 %v3506, 1.442695
      %v3508 = vpow.pop %v3507
      %v3509 = vadd.f32 %v3508, 1.0
      %v3510 = vrcp.pop %v3509
      %v3511 = vmul.f32 1.0, %v3510
      %v3512 = vmul.f32 %v3503, %v3511
      %s3513 = scalar_lea.vmem %s15, 32
      %v3514 = vld [vmem:[%s3513] sm:$0xff]
      %v3515 = vld [vmem:[%s3513 + $0x8] sm:$0xff]
      %v3516 = vld [vmem:[%s3513 + $0x10] sm:$0xff]
      %v3517 = vld [vmem:[%s3513 + $0x18] sm:$0xff]
      %s3518 = scalar_lea.vmem %s16, 1
      %v3519 = vld [vmem:[%s3518] sm:$0x1]
      %v3521 = vsel %vm757, %v3512, 0
      %3523 = vmatprep.subr.mxu0 0.0
      %3524 = vmatpush1.msra.mxu0 %v3514
      %3525 = vmatprep.subr.mxu0 0.0
      %3526 = vmatpush1.msra.mxu0 %v3515
      %3527 = vmatprep.subr.mxu0 0.0
      %3528 = vmatpush1.msra.mxu0 %v3516
      %3529 = vmatprep.subr.mxu0 0.0
      %3530 = vmatpush1.msra.mxu0 %v3517
      %3531 = vmatprep.subr.mxu0 0.0
      %3532 = vmatpush1.msra.mxu0 0.0
      %3533 = vmatprep.subr.mxu0 0.0
      %3534 = vmatpush1.msra.mxu0 0.0
      %3535 = vmatprep.subr.mxu0 0.0
      %3536 = vmatpush1.msra.mxu0 0.0
      %3537 = vmatprep.subr.mxu0 0.0
      %3538 = vmatpush1.msra.mxu0 0.0
      %3539 = vmatprep.subr.mxu0 0.0
      %3540 = vmatpush1.msra.mxu0 0.0
      %3541 = vmatprep.subr.mxu0 0.0
      %3542 = vmatpush1.msra.mxu0 0.0
      %3543 = vmatprep.subr.mxu0 0.0
      %3544 = vmatpush1.msra.mxu0 0.0
      %3545 = vmatprep.subr.mxu0 0.0
      %3546 = vmatpush1.msra.mxu0 0.0
      %3547 = vmatprep.subr.mxu0 0.0
      %3548 = vmatpush1.msra.mxu0 0.0
      %3549 = vmatprep.subr.mxu0 0.0
      %3550 = vmatpush1.msra.mxu0 0.0
      %3551 = vmatprep.subr.mxu0 0.0
      %3552 = vmatpush1.msra.mxu0 0.0
      %3553 = vmatprep.subr.mxu0 0.0
      %3554 = vmatpush1.msra.mxu0 0.0
      %3555 = vmatprep.subr.mxu0 0.0
      %3556 = vmatpush1.msra.mxu0 0.0
      %3557 = vmatprep.subr.mxu0 0.0
      %3558 = vmatpush1.msra.mxu0 0.0
      %3559 = vmatprep.subr.mxu0 0.0
      %3560 = vmatpush1.msra.mxu0 0.0
      %3561 = vmatprep.subr.mxu0 0.0
      %3562 = vmatpush1.msra.mxu0 0.0
      %3563 = vmatprep.subr.mxu0 0.0
      %3564 = vmatpush1.msra.mxu0 0.0
      %3565 = vmatprep.subr.mxu0 0.0
      %3566 = vmatpush1.msra.mxu0 0.0
      %3567 = vmatprep.subr.mxu0 0.0
      %3568 = vmatpush1.msra.mxu0 0.0
      %3569 = vmatprep.subr.mxu0 0.0
      %3570 = vmatpush1.msra.mxu0 0.0
      %3571 = vmatprep.subr.mxu0 0.0
      %3572 = vmatpush1.msra.mxu0 0.0
      %3573 = vmatprep.subr.mxu0 0.0
      %3574 = vmatpush1.msra.mxu0 0.0
      %3575 = vmatprep.subr.mxu0 0.0
      %3576 = vmatpush1.msra.mxu0 0.0
      %3577 = vmatprep.subr.mxu0 0.0
      %3578 = vmatpush1.msra.mxu0 0.0
      %3579 = vmatprep.subr.mxu0 0.0
      %3580 = vmatpush1.msra.mxu0 0.0
      %3581 = vmatprep.subr.mxu0 0.0
      %3582 = vmatpush1.msra.mxu0 0.0
      %3583 = vmatprep.subr.mxu0 0.0
      %3584 = vmatpush1.msra.mxu0 0.0
      %3585 = vmatprep.subr.mxu0 0.0
      %3586 = vmatpush1.msra.mxu0 0.0
      %3587 = vmatprep.mubr.f32.mxu0 0.0
      %3588 = vmatmul.mubr.f32.gmra.mrb[0].mxu0 %v3521
      %v3589 = vpop.f32.mrb[0].mxu0
      %v3590 = vadd.f32 %v3519, %v3589
      %v3591 = vpop.f32.mrb[0].mxu0
      %3592 = vdwg.mxu0
      %v3593 = vsub.f32 0.0, %v3590
      %v3594 = vmul.f32 %v3593, 1.442695
      %v3595 = vpow.pop %v3594
      %v3596 = vadd.f32 %v3595, 1.0
      %v3597 = vrcp.pop %v3596
      %v3598 = vmul.f32 1.0, %v3597
      %v3599 = vmul.f32 %v3590, %v3598
      %v3600 = vld [vmem:[%s17] sm:$0xff]
      %v3601 = vld [vmem:[%s17 + $0x8] sm:$0xff]
      %v3602 = vld [vmem:[%s17 + $0x10] sm:$0xff]
      %v3603 = vld [vmem:[%s17 + $0x18] sm:$0xff]
      %v3604 = vld [vmem:[#allocation2] sm:$0x1]
      %v3606 = vsel %vm757, %v3599, 0
      %3608 = vmatprep.subr.mxu0 0.0
      %3609 = vmatpush1.msra.mxu0 %v3600
      %3610 = vmatprep.subr.mxu0 0.0
      %3611 = vmatpush1.msra.mxu0 %v3601
      %3612 = vmatprep.subr.mxu0 0.0
      %3613 = vmatpush1.msra.mxu0 %v3602
      %3614 = vmatprep.subr.mxu0 0.0
      %3615 = vmatpush1.msra.mxu0 %v3603
      %3616 = vmatprep.subr.mxu0 0.0
      %3617 = vmatpush1.msra.mxu0 0.0
      %3618 = vmatprep.subr.mxu0 0.0
      %3619 = vmatpush1.msra.mxu0 0.0
      %3620 = vmatprep.subr.mxu0 0.0
      %3621 = vmatpush1.msra.mxu0 0.0
      %3622 = vmatprep.subr.mxu0 0.0
      %3623 = vmatpush1.msra.mxu0 0.0
      %3624 = vmatprep.subr.mxu0 0.0
      %3625 = vmatpush1.msra.mxu0 0.0
      %3626 = vmatprep.subr.mxu0 0.0
      %3627 = vmatpush1.msra.mxu0 0.0
      %3628 = vmatprep.subr.mxu0 0.0
      %3629 = vmatpush1.msra.mxu0 0.0
      %3630 = vmatprep.subr.mxu0 0.0
      %3631 = vmatpush1.msra.mxu0 0.0
      %3632 = vmatprep.subr.mxu0 0.0
      %3633 = vmatpush1.msra.mxu0 0.0
      %3634 = vmatprep.subr.mxu0 0.0
      %3635 = vmatpush1.msra.mxu0 0.0
      %3636 = vmatprep.subr.mxu0 0.0
      %3637 = vmatpush1.msra.mxu0 0.0
      %3638 = vmatprep.subr.mxu0 0.0
      %3639 = vmatpush1.msra.mxu0 0.0
      %3640 = vmatprep.subr.mxu0 0.0
      %3641 = vmatpush1.msra.mxu0 0.0
      %3642 = vmatprep.subr.mxu0 0.0
      %3643 = vmatpush1.msra.mxu0 0.0
      %3644 = vmatprep.subr.mxu0 0.0
      %3645 = vmatpush1.msra.mxu0 0.0
      %3646 = vmatprep.subr.mxu0 0.0
      %3647 = vmatpush1.msra.mxu0 0.0
      %3648 = vmatprep.subr.mxu0 0.0
      %3649 = vmatpush1.msra.mxu0 0.0
      %3650 = vmatprep.subr.mxu0 0.0
      %3651 = vmatpush1.msra.mxu0 0.0
      %3652 = vmatprep.subr.mxu0 0.0
      %3653 = vmatpush1.msra.mxu0 0.0
      %3654 = vmatprep.subr.mxu0 0.0
      %3655 = vmatpush1.msra.mxu0 0.0
      %3656 = vmatprep.subr.mxu0 0.0
      %3657 = vmatpush1.msra.mxu0 0.0
      %3658 = vmatprep.subr.mxu0 0.0
      %3659 = vmatpush1.msra.mxu0 0.0
      %3660 = vmatprep.subr.mxu0 0.0
      %3661 = vmatpush1.msra.mxu0 0.0
      %3662 = vmatprep.subr.mxu0 0.0
      %3663 = vmatpush1.msra.mxu0 0.0
      %3664 = vmatprep.subr.mxu0 0.0
      %3665 = vmatpush1.msra.mxu0 0.0
      %3666 = vmatprep.subr.mxu0 0.0
      %3667 = vmatpush1.msra.mxu0 0.0
      %3668 = vmatprep.subr.mxu0 0.0
      %3669 = vmatpush1.msra.mxu0 0.0
      %3670 = vmatprep.subr.mxu0 0.0
      %3671 = vmatpush1.msra.mxu0 0.0
      %3672 = vmatprep.mubr.f32.mxu0 0.0
      %3673 = vmatmul.mubr.f32.gmra.mrb[0].mxu0 %v3606
      %v3674 = vpop.f32.mrb[0].mxu0
      %v3675 = vadd.f32 %v3604, %v3674
      %v3676 = vpop.f32.mrb[0].mxu0
      %3677 = vdwg.mxu0
      %vm3678 = vcmask 0
      %3679 = vst.msk [vmem:[%s644] sm:$0x1] %vm3678, %v3675
      %p3680 = scmp.lt.s32.totalorder %s32, 1
      %s3681 = scalar_select %p3680, %s32, 1
      %s3682 = scalar_lea.vmem %s19, %s3681
      // Predicated region
      $region97: #{kamome_forward.1} parent=95 // pred_check
        %p3683 = pneg %p464
      $region98: #{kamome_forward.1} parent=95 // pred_check_branch
        %3685 = sbr.rel (%p3683) target = $region100
      $region99: #{kamome_forward.1} parent=95 // pred_region
        _
      $region100: #{kamome_forward.1} parent=95 // pred_fallthru
        _
    $region96: #{kamome_forward.1} parent=5 // pred_fallthru
      _
    %p3686 = scmp.le.s32.totalorder 2, %s27
    // Predicated region
    $region101: #{kamome_forward.1} parent=5 // pred_check
      %p3687 = pneg %p3686
    $region102: #{kamome_forward.1} parent=5 // pred_check_branch
      %3689 = sbr.rel (%p3687) target = $region104
    $region103: #{kamome_forward.1} parent=5 // pred_region
      %s3690 = ssub.s32 %s27, 2
      // Predicated region
      $region105: #{kamome_forward.1} parent=103 // pred_check
        %p3691 = pneg %p470
      $region106: #{kamome_forward.1} parent=103 // pred_check_branch
        %3693 = sbr.rel (%p3691) target = $region108
      $region107: #{kamome_forward.1} parent=103 // pred_region
        %p3694 = scmp.lt.s32.totalorder %s33, 1
        %s3695 = scalar_select %p3694, %s33, 1
        %s3696 = scalar_lea.vmem %s19, %s3695
      $region108: #{kamome_forward.1} parent=103 // pred_fallthru
        _
    $region104: #{kamome_forward.1} parent=5 // pred_fallthru
      _
  $region6: #{kamome_forward.1} parent=0 // loop_footer
    %s31 = sadd.s32 1, %s27
  $region7: #{kamome_forward.1} parent=0 // loop_footer_branch
    %26 = sbr.rel target = $region3
  $region8: #{kamome_forward.1} parent=0 // loop_exit
    _

</llo_original>
